<compile_context>
chip_gen: v7x
topology: tpu7x:2x2x1
jax: 0.10.0
libtpu: 0.0.40
codegen_flags: <defaults>
</compile_context>

<pallas_src>
import functools

import jax
import jax.numpy as jnp
from jax import lax
from jax.experimental import pallas as pl
from jax.experimental.pallas import tpu as pltpu

EPS = 1e-5
LANE = 128


def _round_up(x, m):
    return (x + m - 1) // m * m


def _vmem_budget():
    """Generation-aware vmem_limit_bytes (≈3/4 of physical, capped)."""
    cap = 64 * 1024 * 1024
    try:
        info = pltpu.get_tpu_info()
        cap = int(getattr(info, "vmem_capacity_bytes", cap))
    except Exception:
        pass
    return max(16 * 1024 * 1024, min(3 * cap // 4, 96 * 1024 * 1024))


def _pick_tile_rows(oh, ow, owp, cpi, cpo, budget):
    """Largest divisor of oh whose per-step working set fits the VMEM budget."""
    def step_bytes(tr):
        phases_blk = 4 * (tr + 1) * owp * cpi * 2          # bf16 phase strip
        y1_blk = tr * ow * cpo * 2
        out_blk = tr * ow * cpo * 4
        weights = (9 * cpi * cpo + 9 * cpo * cpo + cpi * cpo) * 2
        temps = (4 * (tr + 1) * owp * cpi * 2              # bf16 activations
                 + (tr + 2) * (ow + 2) * cpo * 2           # padded a2 scratch
                 + 3 * tr * ow * cpo * 4)                  # f32 accumulators
        return 2 * (phases_blk + y1_blk + out_blk + weights) + temps

    best = 1
    for tr in range(1, oh + 1):
        if oh % tr == 0 and step_bytes(tr) <= budget:
            best = tr
    return best


# ------------------------------- Pallas kernels ------------------------------

def bn_stats_kernel(x_ref, o_ref):
    """Per-channel [sum; sum_sq] of f32 x, accumulated over the batch grid."""
    @pl.when(pl.program_id(0) == 0)
    def _init():
        o_ref[...] = jnp.zeros_like(o_ref)

    x = x_ref[...]                                               # (H, W, C) f32
    c = x.shape[-1]
    s = jnp.sum(x, axis=(0, 1), keepdims=True).reshape(1, c)
    ss = jnp.sum(x * x, axis=(0, 1), keepdims=True).reshape(1, c)
    o_ref[...] = o_ref[...] + jnp.concatenate([s, ss], axis=0)


def conv1_kernel(ph_ref, aff1_ref, w1_ref, y1_ref, st2_ref, *, tr, ow, ohp):
    """3x3/s2 conv of relu(bn1(x)) for one output-row strip. bf16 MXU / f32 acc.

    ph_ref : (4, tr+1, owp, Cpi) bf16  stride-2 phases of the padded x (strip + 1-row halo)
    w1_ref : (9, Cpi, Cpo) bf16        conv weights, tap-major
    y1_ref : (tr, ow, Cpo) bf16        y1 strip (single unmasked full-block store)
    st2_ref: (2, Cpo) f32              per-strip sum / sum-of-squares of y1 (for BN2)
    """
    cpi = ph_ref.shape[-1]
    cpo = w1_ref.shape[-1]
    trp, owp = tr + 1, ow + 1
    t = pl.program_id(1)

    aff = aff1_ref[...]
    scale = aff[0:1, :].reshape(1, 1, cpi)
    shift = aff[1:2, :].reshape(1, 1, cpi)

    # Global phase-row / phase-col indices; channel-broadcast masks ((trp, owp, 1)).
    rr = lax.broadcasted_iota(jnp.int32, (trp, owp, 1), 0) + t * tr
    cc = lax.broadcasted_iota(jnp.int32, (trp, owp, 1), 1)

    # BN1 + ReLU in f32; zero the conv-padding entries of each phase; cast to bf16.
    acts = []
    for p in range(4):
        rpar, cpar = p >> 1, p & 1
        a = jnp.maximum(ph_ref[p] * scale + shift, 0.0)          # f32
        pad_r = 0 if rpar == 0 else ohp - 1
        pad_c = 0 if cpar == 0 else owp - 1
        valid = (rr != pad_r) & (cc != pad_c)                    # (trp, owp, 1)
        acts.append(jnp.where(valid, a, 0.0).astype(jnp.bfloat16))

    # 9 shifted MXU matmuls, f32 accumulator.
    acc = jnp.zeros((tr * ow, cpo), jnp.float32)
    for kh in range(3):
        for kw in range(3):
            src = acts[(kh & 1) * 2 + (kw & 1)]
            dr, dc = kh // 2, kw // 2
            tap = src[dr:dr + tr, dc:dc + ow, :].reshape(tr * ow, cpi)
            acc = acc + jnp.dot(tap, w1_ref[kh * 3 + kw],
                                preferred_element_type=jnp.float32)

    # Partial BN2 stats (summed over batch x strips in the wrapper).
    s = jnp.sum(acc, axis=0, keepdims=True)
    ss = jnp.sum(acc * acc, axis=0, keepdims=True)
    st2_ref[...] = jnp.concatenate([s, ss], axis=0)

    # Single aligned, lane-dense store of the strip (no spatial padding here).
    y1_ref[...] = acc.reshape(tr, ow, cpo).astype(y1_ref.dtype)


def conv2_kernel(y1_ref, ytop_ref, ybot_ref, aff2_ref, w2_ref, ph_ref, wd_ref,
                 o_ref, a2p_ref, *, tr, ow):
    """out strip = conv3x3_s1(relu(bn2(y1))) + x[:, ::2, ::2, :] @ wd.

    y1_ref  : (tr, ow, Cpo) bf16   y1 strip
    ytop/bot: (1, ow, Cpo) bf16    halo rows from neighbor strips (clamped index maps)
    ph_ref  : (tr+1, owp, Cpi) bf16 odd/odd phase strip (x[::2, ::2]) for the downsample
    a2p_ref : VMEM scratch (tr+2, ow+2, Cpo) bf16  zero-padded BN2+ReLU activations
    """
    cpi = wd_ref.shape[0]
    cpo = w2_ref.shape[-1]
    t = pl.program_id(1)
    nt = pl.num_programs(1)

    aff = aff2_ref[...]
    scale = aff[0:1, :].reshape(1, 1, cpo)
    shift = aff[1:2, :].reshape(1, 1, cpo)

    def bn_relu(v):
        return jnp.maximum(v.astype(jnp.float32) * scale + shift, 0.0)

    a2 = bn_relu(y1_ref[...]).astype(jnp.bfloat16)                     # (tr, ow, cpo)
    top = (bn_relu(ytop_ref[...]) *
           (t > 0).astype(jnp.float32)).astype(jnp.bfloat16)           # (1, ow, cpo)
    bot = (bn_relu(ybot_ref[...]) *
           (t < nt - 1).astype(jnp.float32)).astype(jnp.bfloat16)      # (1, ow, cpo)

    # Zero-padded activation strip assembled in VMEM (halo rows + zero columns).
    a2p_ref[...] = jnp.zeros_like(a2p_ref)
    a2p_ref[0:1, 1:ow + 1, :] = top
    a2p_ref[1:tr + 1, 1:ow + 1, :] = a2
    a2p_ref[tr + 1:tr + 2, 1:ow + 1, :] = bot

    # Fused 1x1 stride-2 downsample: the odd/odd phase holds x[:, ::2, ::2, :].
    xd = ph_ref[0:tr, 0:ow, :].reshape(tr * ow, cpi)
    acc = jnp.dot(xd, wd_ref[...], preferred_element_type=jnp.float32)

    for kh in range(3):
        for kw in range(3):
            tap = a2p_ref[kh:kh + tr, kw:kw + ow, :].reshape(tr * ow, cpo)
            acc = acc + jnp.dot(tap, w2_ref[kh * 3 + kw],
                                preferred_element_type=jnp.float32)

    o_ref[...] = acc.reshape(tr, ow, cpo)


# --------------------------------- wrapper -----------------------------------

@jax.jit
def resblock_down(x_nchw, params):
    x = jnp.transpose(x_nchw, (0, 2, 3, 1)).astype(jnp.float32)  # NCHW -> NHWC
    n, h, w, cin = x.shape
    assert h % 2 == 0 and w % 2 == 0
    w1, w2, wd = params["w1"], params["w2"], params["wd"]
    cout = w1.shape[-1]
    oh, ow = h // 2, w // 2
    cpi = _round_up(cin, LANE)
    cpo = _round_up(cout, LANE)
    ohp, owp = oh + 1, ow + 1

    vmem_limit = _vmem_budget()
    tr = _pick_tile_rows(oh, ow, owp, cpi, cpo, vmem_limit)
    nt = oh // tr

    # ---- BN1 global stats directly from f32 x (grid over batch only) ----
    sums1 = pl.pallas_call(
        bn_stats_kernel,
        out_shape=jax.ShapeDtypeStruct((2, cin), jnp.float32),
        grid=(n,),
        in_specs=[pl.BlockSpec((None, h, w, cin), lambda b: (b, 0, 0, 0))],
        out_specs=pl.BlockSpec((2, cin), lambda b: (0, 0)),
        compiler_params=pltpu.CompilerParams(
            dimension_semantics=("arbitrary",),
            vmem_limit_bytes=vmem_limit),
    )(x)

    cnt1 = n * h * w
    mean1 = sums1[0] / cnt1
    var1 = sums1[1] / cnt1 - mean1 * mean1
    scale1 = params["g1"] * lax.rsqrt(var1 + EPS)
    shift1 = params["b1"] - mean1 * scale1
    aff1 = jnp.stack([jnp.pad(scale1, (0, cpi - cin)),
                      jnp.pad(shift1, (0, cpi - cin))], axis=0)       # (2, cpi) f32

    # ---- bf16 stride-2 phases of the spatially/channel padded input, pre-tiled
    #      into row strips with a one-row halo (cheap XLA slicing; no im2col) ----
    xpad = jnp.pad(x, ((0, 0), (1, 1), (1, 1), (0, cpi - cin))).astype(jnp.bfloat16)
    phases = jnp.stack(
        [xpad[:, 0::2, 0::2, :], xpad[:, 0::2, 1::2, :],
         xpad[:, 1::2, 0::2, :], xpad[:, 1::2, 1::2, :]],
        axis=1)                                                       # (N, 4, ohp, owp, cpi)
    if nt == 1:
        phases_t = phases                                             # (N, 4, tr+1, owp, cpi)
    else:
        phases_t = jnp.stack(
            [phases[:, :, i * tr:i * tr + tr + 1] for i in range(nt)], axis=1
        ).reshape(n * nt, 4, tr + 1, owp, cpi)

    # padded bf16 weights, tap-major
    w1p = jnp.pad(w1, ((0, 0), (0, 0), (0, cpi - cin), (0, cpo - cout))
                  ).reshape(9, cpi, cpo).astype(jnp.bfloat16)
    w2p = jnp.pad(w2, ((0, 0), (0, 0), (0, cpo - cout), (0, cpo - cout))
                  ).reshape(9, cpo, cpo).astype(jnp.bfloat16)
    wdp = jnp.pad(wd, ((0, cpi - cin), (0, cpo - cout))).astype(jnp.bfloat16)

    # ---- Conv3x3/s2 fused with BN1+ReLU; emits BN2 partial stats; row-strip grid ----
    y1, st2 = pl.pallas_call(
        functools.partial(conv1_kernel, tr=tr, ow=ow, ohp=ohp),
        out_shape=(jax.ShapeDtypeStruct((n, oh, ow, cpo), jnp.bfloat16),
                   jax.ShapeDtypeStruct((n, nt, 2, cpo), jnp.float32)),
        grid=(n, nt),
        in_specs=[
            pl.BlockSpec((None, 4, tr + 1, owp, cpi),
                         lambda b, t: (b * nt + t, 0, 0, 0, 0)),
            pl.BlockSpec((2, cpi), lambda b, t: (0, 0)),
            pl.BlockSpec((9, cpi, cpo), lambda b, t: (0, 0, 0)),
        ],
        out_specs=(
            pl.BlockSpec((None, tr, ow, cpo), lambda b, t: (b, t, 0, 0)),
            pl.BlockSpec((None, None, 2, cpo), lambda b, t: (b, t, 0, 0)),
        ),
        compiler_params=pltpu.CompilerParams(
            dimension_semantics=("parallel", "parallel"),
            vmem_limit_bytes=vmem_limit),
    )(phases_t, aff1, w1p)

    sums2 = jnp.sum(st2, axis=(0, 1))                                 # (2, cpo)
    cnt2 = n * oh * ow
    mean2 = sums2[0, :cout] / cnt2
    var2 = sums2[1, :cout] / cnt2 - mean2 * mean2
    scale2 = params["g2"] * lax.rsqrt(var2 + EPS)
    shift2 = params["b2"] - mean2 * scale2
    aff2 = jnp.stack([jnp.pad(scale2, (0, cpo - cout)),
                      jnp.pad(shift2, (0, cpo - cout))], axis=0)      # (2, cpo) f32

    # ---- Conv3x3/s1 fused with BN2+ReLU + 1x1/s2 downsample add; row-strip grid ----
    out = pl.pallas_call(
        functools.partial(conv2_kernel, tr=tr, ow=ow),
        out_shape=jax.ShapeDtypeStruct((n, oh, ow, cpo), jnp.float32),
        grid=(n, nt),
        in_specs=[
            pl.BlockSpec((None, tr, ow, cpo), lambda b, t: (b, t, 0, 0)),
            pl.BlockSpec((None, 1, ow, cpo),
                         lambda b, t: (b, jnp.maximum(t * tr - 1, 0), 0, 0)),
            pl.BlockSpec((None, 1, ow, cpo),
                         lambda b, t: (b, jnp.minimum(t * tr + tr, oh - 1), 0, 0)),
            pl.BlockSpec((2, cpo), lambda b, t: (0, 0)),
            pl.BlockSpec((9, cpo, cpo), lambda b, t: (0, 0, 0)),
            pl.BlockSpec((None, None, tr + 1, owp, cpi),
                         lambda b, t: (b * nt + t, 3, 0, 0, 0)),
            pl.BlockSpec((cpi, cpo), lambda b, t: (0, 0)),
        ],
        out_specs=pl.BlockSpec((None, tr, ow, cpo), lambda b, t: (b, t, 0, 0)),
        scratch_shapes=[pltpu.VMEM((tr + 2, ow + 2, cpo), jnp.bfloat16)],
        compiler_params=pltpu.CompilerParams(
            dimension_semantics=("parallel", "parallel"),
            vmem_limit_bytes=vmem_limit),
    )(y1, y1, y1, aff2, w2p, phases_t, wdp)

    return out[..., :cout]                                            # NHWC


# -------------------------- pure-JAX reference (check) ------------------------

def reference(x_nchw, params):
    x = jnp.transpose(x_nchw, (0, 2, 3, 1)).astype(jnp.float32)
    hi = lax.Precision.HIGHEST

    def bn(t, g, b):
        m = jnp.mean(t, axis=(0, 1, 2), keepdims=True)
        v = jnp.mean((t - m) ** 2, axis=(0, 1, 2), keepdims=True)
        return (t - m) * lax.rsqrt(v + EPS) * g.reshape(1, 1, 1, -1) + b.reshape(1, 1, 1, -1)

    a = jax.nn.relu(bn(x, params["g1"], params["b1"]))
    y1 = lax.conv_general_dilated(a, params["w1"], (2, 2), ((1, 1), (1, 1)),
                                  dimension_numbers=("NHWC", "HWIO", "NHWC"),
                                  precision=hi)
    a2 = jax.nn.relu(bn(y1, params["g2"], params["b2"]))
    y2 = lax.conv_general_dilated(a2, params["w2"], (1, 1), ((1, 1), (1, 1)),
                                  dimension_numbers=("NHWC", "HWIO", "NHWC"),
                                  precision=hi)
    d = lax.conv_general_dilated(
        x, params["wd"].reshape(1, 1, *params["wd"].shape),
        (2, 2), ((0, 0), (0, 0)),
        dimension_numbers=("NHWC", "HWIO", "NHWC"), precision=hi)
    return d + y2


# ----------------------------------- main -------------------------------------

if __name__ == "__main__":
    N, Cin, Cout, H, W = 2, 4, 8, 16, 16

    key = jax.random.PRNGKey(0)
    kx, k1, k2, kd = jax.random.split(key, 4)

    x_nchw = jax.random.normal(kx, (N, Cin, H, W), dtype=jnp.float32)

    params = {
        # BatchNorm2d default init: weight=1, bias=0 (training-mode batch statistics)
        "g1": jnp.ones((Cin,), jnp.float32),
        "b1": jnp.zeros((Cin,), jnp.float32),
        "g2": jnp.ones((Cout,), jnp.float32),
        "b2": jnp.zeros((Cout,), jnp.float32),
        # Conv weights, HWIO layout, no bias (matches the module)
        "w1": 0.1 * jax.random.normal(k1, (3, 3, Cin, Cout), jnp.float32),
        "w2": 0.1 * jax.random.normal(k2, (3, 3, Cout, Cout), jnp.float32),
        "wd": 0.1 * jax.random.normal(kd, (Cin, Cout), jnp.float32),
    }

    out = jax.block_until_ready(resblock_down(x_nchw, params))
    ref = jax.block_until_ready(reference(x_nchw, params))

    assert out.shape == (N, H // 2, W // 2, Cout), out.shape
    err = float(jnp.max(jnp.abs(out - ref)))
    # bf16 activations/weights on the MXU vs an f32 HIGHEST-precision reference
    assert err < 3e-2, err

    print("KERNEL_OK")
</pallas_src>

<mosaic_0001>
module attributes {stable_mosaic.version = 11 : i64} {
  func.func @bn_stats_kernel(%arg0: i32, %arg1: memref<1x16x16x4xf32, #tpu.memory_space<vmem>>, %arg2: memref<2x4xf32, #tpu.memory_space<vmem>>) attributes {dimension_semantics = [#tpu.dimension_semantics<arbitrary>], iteration_bounds = array<i64: 2>, scalar_prefetch = 0 : i64, scratch_operands = 0 : i64, tpu.core_type = #tpu.core_type<tc>, window_params = [{transform_indices = @transform_0, window_bounds = array<i64: 1, 16, 16, 4>}, {pipeline_mode = #tpu.pipeline_mode<synchronous>, transform_indices = @transform_1, window_bounds = array<i64: 2, 4>}]} {
    %c0_i32 = arith.constant 0 : i32
    %0 = arith.cmpi eq, %arg0, %c0_i32 : i32
    %1 = arith.extui %0 : i1 to i32
    %c0_i32_0 = arith.constant 0 : i32
    %2 = arith.cmpi ne, %1, %c0_i32_0 : i32
    scf.if %2 {
      %cst_9 = arith.constant 0.000000e+00 : f32
      %16 = vector.broadcast %cst_9 : f32 to vector<2x4xf32>
      %c0_10 = arith.constant 0 : index
      %c0_11 = arith.constant 0 : index
      %17 = vector.load %arg2[%c0_10, %c0_11] : memref<2x4xf32, #tpu.memory_space<vmem>>, vector<2x4xf32>
      tpu.vector_store %arg2[%c0_10, %c0_11], %16 {strides = array<i32>} : memref<2x4xf32, #tpu.memory_space<vmem>>, vector<2x4xf32>,
    } else {
    }
    %c0 = arith.constant 0 : index
    %c0_1 = arith.constant 0 : index
    %c0_2 = arith.constant 0 : index
    %c0_3 = arith.constant 0 : index
    %3 = vector.load %arg1[%c0, %c0_1, %c0_2, %c0_3] : memref<1x16x16x4xf32, #tpu.memory_space<vmem>>, vector<1x16x16x4xf32>
    %4 = vector.shape_cast %3 : vector<1x16x16x4xf32> to vector<16x16x4xf32>
    %cst = arith.constant dense<0.000000e+00> : vector<4xf32>
    %5 = vector.multi_reduction <add>, %4, %cst [0, 1] : vector<16x16x4xf32> to vector<4xf32>
    %6 = vector.shape_cast %5 : vector<4xf32> to vector<1x1x4xf32>
    %7 = vector.shape_cast %6 : vector<1x1x4xf32> to vector<1x4xf32>
    %8 = arith.mulf %4, %4 : vector<16x16x4xf32>
    %cst_4 = arith.constant dense<0.000000e+00> : vector<4xf32>
    %9 = vector.multi_reduction <add>, %8, %cst_4 [0, 1] : vector<16x16x4xf32> to vector<4xf32>
    %10 = vector.shape_cast %9 : vector<4xf32> to vector<1x1x4xf32>
    %11 = vector.shape_cast %10 : vector<1x1x4xf32> to vector<1x4xf32>
    %c0_5 = arith.constant 0 : index
    %c0_6 = arith.constant 0 : index
    %12 = vector.load %arg2[%c0_5, %c0_6] : memref<2x4xf32, #tpu.memory_space<vmem>>, vector<2x4xf32>
    %13 = tpu.concatenate %7, %11 in 0 : vector<1x4xf32>, vector<1x4xf32> -> vector<2x4xf32>
    %14 = arith.addf %12, %13 : vector<2x4xf32>
    %c0_7 = arith.constant 0 : index
    %c0_8 = arith.constant 0 : index
    %15 = vector.load %arg2[%c0_7, %c0_8] : memref<2x4xf32, #tpu.memory_space<vmem>>, vector<2x4xf32>
    tpu.vector_store %arg2[%c0_7, %c0_8], %14 {strides = array<i32>} : memref<2x4xf32, #tpu.memory_space<vmem>>, vector<2x4xf32>,
    return
  }
  func.func @transform_0(%arg0: i32) -> (i32, i32, i32, i32) {
    %c0_i32 = arith.constant 0 : i32
    %c0_i32_0 = arith.constant 0 : i32
    %c0_i32_1 = arith.constant 0 : i32
    %c0_i32_2 = arith.constant 0 : i32
    return %arg0, %c0_i32, %c0_i32_0, %c0_i32_1 : i32, i32, i32, i32
  }
  func.func @transform_1(%arg0: i32) -> (i32, i32) {
    %c0_i32 = arith.constant 0 : i32
    %c0_i32_0 = arith.constant 0 : i32
    %c0_i32_1 = arith.constant 0 : i32
    return %c0_i32, %c0_i32_0 : i32, i32
  }
}

module attributes {stable_mosaic.version = 11 : i64} {
  func.func @conv1_kernel(%arg0: i32, %arg1: i32, %arg2: memref<1x4x9x9x128xbf16, #tpu.memory_space<vmem>>, %arg3: memref<2x128xf32, #tpu.memory_space<vmem>>, %arg4: memref<9x128x128xbf16, #tpu.memory_space<vmem>>, %arg5: memref<1x8x8x128xbf16, #tpu.memory_space<vmem>>, %arg6: memref<1x1x2x128xf32, #tpu.memory_space<vmem>>) attributes {dimension_semantics = [#tpu.dimension_semantics<parallel>, #tpu.dimension_semantics<parallel>], iteration_bounds = array<i64: 2, 1>, scalar_prefetch = 0 : i64, scratch_operands = 0 : i64, tpu.core_type = #tpu.core_type<tc>, window_params = [{transform_indices = @transform_0, window_bounds = array<i64: 1, 4, 9, 9, 128>}, {pipeline_mode = #tpu.pipeline_mode<synchronous>, transform_indices = @transform_1, window_bounds = array<i64: 2, 128>}, {pipeline_mode = #tpu.pipeline_mode<synchronous>, transform_indices = @transform_2, window_bounds = array<i64: 9, 128, 128>}, {transform_indices = @transform_3, window_bounds = array<i64: 1, 8, 8, 128>}, {transform_indices = @transform_4, window_bounds = array<i64: 1, 1, 2, 128>}]} {
    %c0 = arith.constant 0 : index
    %c0_0 = arith.constant 0 : index
    %0 = vector.load %arg3[%c0, %c0_0] : memref<2x128xf32, #tpu.memory_space<vmem>>, vector<2x128xf32>
    %1 = vector.extract_strided_slice %0 {offsets = [0, 0], sizes = [1, 128], strides = [1, 1]} : vector<2x128xf32> to vector<1x128xf32>
    %2 = vector.shape_cast %1 : vector<1x128xf32> to vector<1x1x128xf32>
    %3 = vector.extract_strided_slice %0 {offsets = [1, 0], sizes = [1, 128], strides = [1, 1]} : vector<2x128xf32> to vector<1x128xf32>
    %4 = vector.shape_cast %3 : vector<1x128xf32> to vector<1x1x128xf32>
    %5 = tpu.iota {dimensions = array<i32: 0>} : vector<9x9x1xi32>
    %c8_i32 = arith.constant 8 : i32
    %6 = arith.muli %arg1, %c8_i32 : i32
    %7 = vector.broadcast %6 : i32 to vector<9x9x1xi32>
    %8 = arith.addi %5, %7 : vector<9x9x1xi32>
    %9 = tpu.iota {dimensions = array<i32: 1>} : vector<9x9x1xi32>
    %c0_1 = arith.constant 0 : index
    %c0_2 = arith.constant 0 : index
    %c0_3 = arith.constant 0 : index
    %c0_4 = arith.constant 0 : index
    %c0_5 = arith.constant 0 : index
    %10 = vector.load %arg2[%c0_1, %c0_2, %c0_3, %c0_4, %c0_5] : memref<1x4x9x9x128xbf16, #tpu.memory_space<vmem>>, vector<1x1x9x9x128xbf16>
    %11 = vector.shape_cast %10 : vector<1x1x9x9x128xbf16> to vector<9x9x128xbf16>
    %12 = arith.extf %11 : vector<9x9x128xbf16> to vector<9x9x128xf32>
    %13 = vector.broadcast %2 : vector<1x1x128xf32> to vector<9x9x128xf32>
    %14 = arith.mulf %12, %13 : vector<9x9x128xf32>
    %15 = vector.broadcast %4 : vector<1x1x128xf32> to vector<9x9x128xf32>
    %16 = arith.addf %14, %15 : vector<9x9x128xf32>
    %cst = arith.constant 0.000000e+00 : f32
    %17 = vector.broadcast %cst : f32 to vector<9x9x128xf32>
    %18 = arith.maximumf %16, %17 : vector<9x9x128xf32>
    %c0_i32 = arith.constant 0 : i32
    %19 = vector.broadcast %c0_i32 : i32 to vector<9x9x1xi32>
    %20 = arith.cmpi ne, %8, %19 : vector<9x9x1xi32>
    %c0_i32_6 = arith.constant 0 : i32
    %21 = vector.broadcast %c0_i32_6 : i32 to vector<9x9x1xi32>
    %22 = arith.cmpi ne, %9, %21 : vector<9x9x1xi32>
    %23 = arith.andi %20, %22 : vector<9x9x1xi1>
    %cst_7 = arith.constant 0.000000e+00 : f32
    %24 = vector.shape_cast %23 : vector<9x9x1xi1> to vector<9x9x1xi1>
    %25 = vector.broadcast %24 : vector<9x9x1xi1> to vector<9x9x128xi1>
    %26 = vector.broadcast %cst_7 : f32 to vector<9x9x128xf32>
    %27 = arith.select %25, %18, %26 : vector<9x9x128xi1>, vector<9x9x128xf32>
    %28 = arith.truncf %27 : vector<9x9x128xf32> to vector<9x9x128xbf16>
    %c0_8 = arith.constant 0 : index
    %c1 = arith.constant 1 : index
    %c0_9 = arith.constant 0 : index
    %c0_10 = arith.constant 0 : index
    %c0_11 = arith.constant 0 : index
    %29 = vector.load %arg2[%c0_8, %c1, %c0_9, %c0_10, %c0_11] : memref<1x4x9x9x128xbf16, #tpu.memory_space<vmem>>, vector<1x1x9x9x128xbf16>
    %30 = vector.shape_cast %29 : vector<1x1x9x9x128xbf16> to vector<9x9x128xbf16>
    %31 = arith.extf %30 : vector<9x9x128xbf16> to vector<9x9x128xf32>
    %32 = vector.broadcast %2 : vector<1x1x128xf32> to vector<9x9x128xf32>
    %33 = arith.mulf %31, %32 : vector<9x9x128xf32>
    %34 = vector.broadcast %4 : vector<1x1x128xf32> to vector<9x9x128xf32>
    %35 = arith.addf %33, %34 : vector<9x9x128xf32>
    %cst_12 = arith.constant 0.000000e+00 : f32
    %36 = vector.broadcast %cst_12 : f32 to vector<9x9x128xf32>
    %37 = arith.maximumf %35, %36 : vector<9x9x128xf32>
    %c0_i32_13 = arith.constant 0 : i32
    %38 = vector.broadcast %c0_i32_13 : i32 to vector<9x9x1xi32>
    %39 = arith.cmpi ne, %8, %38 : vector<9x9x1xi32>
    %c8_i32_14 = arith.constant 8 : i32
    %40 = vector.broadcast %c8_i32_14 : i32 to vector<9x9x1xi32>
    %41 = arith.cmpi ne, %9, %40 : vector<9x9x1xi32>
    %42 = arith.andi %39, %41 : vector<9x9x1xi1>
    %cst_15 = arith.constant 0.000000e+00 : f32
    %43 = vector.shape_cast %42 : vector<9x9x1xi1> to vector<9x9x1xi1>
    %44 = vector.broadcast %43 : vector<9x9x1xi1> to vector<9x9x128xi1>
    %45 = vector.broadcast %cst_15 : f32 to vector<9x9x128xf32>
    %46 = arith.select %44, %37, %45 : vector<9x9x128xi1>, vector<9x9x128xf32>
    %47 = arith.truncf %46 : vector<9x9x128xf32> to vector<9x9x128xbf16>
    %c0_16 = arith.constant 0 : index
    %c2 = arith.constant 2 : index
    %c0_17 = arith.constant 0 : index
    %c0_18 = arith.constant 0 : index
    %c0_19 = arith.constant 0 : index
    %48 = vector.load %arg2[%c0_16, %c2, %c0_17, %c0_18, %c0_19] : memref<1x4x9x9x128xbf16, #tpu.memory_space<vmem>>, vector<1x1x9x9x128xbf16>
    %49 = vector.shape_cast %48 : vector<1x1x9x9x128xbf16> to vector<9x9x128xbf16>
    %50 = arith.extf %49 : vector<9x9x128xbf16> to vector<9x9x128xf32>
    %51 = vector.broadcast %2 : vector<1x1x128xf32> to vector<9x9x128xf32>
    %52 = arith.mulf %50, %51 : vector<9x9x128xf32>
    %53 = vector.broadcast %4 : vector<1x1x128xf32> to vector<9x9x128xf32>
    %54 = arith.addf %52, %53 : vector<9x9x128xf32>
    %cst_20 = arith.constant 0.000000e+00 : f32
    %55 = vector.broadcast %cst_20 : f32 to vector<9x9x128xf32>
    %56 = arith.maximumf %54, %55 : vector<9x9x128xf32>
    %c8_i32_21 = arith.constant 8 : i32
    %57 = vector.broadcast %c8_i32_21 : i32 to vector<9x9x1xi32>
    %58 = arith.cmpi ne, %8, %57 : vector<9x9x1xi32>
    %c0_i32_22 = arith.constant 0 : i32
    %59 = vector.broadcast %c0_i32_22 : i32 to vector<9x9x1xi32>
    %60 = arith.cmpi ne, %9, %59 : vector<9x9x1xi32>
    %61 = arith.andi %58, %60 : vector<9x9x1xi1>
    %cst_23 = arith.constant 0.000000e+00 : f32
    %62 = vector.shape_cast %61 : vector<9x9x1xi1> to vector<9x9x1xi1>
    %63 = vector.broadcast %62 : vector<9x9x1xi1> to vector<9x9x128xi1>
    %64 = vector.broadcast %cst_23 : f32 to vector<9x9x128xf32>
    %65 = arith.select %63, %56, %64 : vector<9x9x128xi1>, vector<9x9x128xf32>
    %66 = arith.truncf %65 : vector<9x9x128xf32> to vector<9x9x128xbf16>
    %c0_24 = arith.constant 0 : index
    %c3 = arith.constant 3 : index
    %c0_25 = arith.constant 0 : index
    %c0_26 = arith.constant 0 : index
    %c0_27 = arith.constant 0 : index
    %67 = vector.load %arg2[%c0_24, %c3, %c0_25, %c0_26, %c0_27] : memref<1x4x9x9x128xbf16, #tpu.memory_space<vmem>>, vector<1x1x9x9x128xbf16>
    %68 = vector.shape_cast %67 : vector<1x1x9x9x128xbf16> to vector<9x9x128xbf16>
    %69 = arith.extf %68 : vector<9x9x128xbf16> to vector<9x9x128xf32>
    %70 = vector.broadcast %2 : vector<1x1x128xf32> to vector<9x9x128xf32>
    %71 = arith.mulf %69, %70 : vector<9x9x128xf32>
    %72 = vector.broadcast %4 : vector<1x1x128xf32> to vector<9x9x128xf32>
    %73 = arith.addf %71, %72 : vector<9x9x128xf32>
    %cst_28 = arith.constant 0.000000e+00 : f32
    %74 = vector.broadcast %cst_28 : f32 to vector<9x9x128xf32>
    %75 = arith.maximumf %73, %74 : vector<9x9x128xf32>
    %c8_i32_29 = arith.constant 8 : i32
    %76 = vector.broadcast %c8_i32_29 : i32 to vector<9x9x1xi32>
    %77 = arith.cmpi ne, %8, %76 : vector<9x9x1xi32>
    %c8_i32_30 = arith.constant 8 : i32
    %78 = vector.broadcast %c8_i32_30 : i32 to vector<9x9x1xi32>
    %79 = arith.cmpi ne, %9, %78 : vector<9x9x1xi32>
    %80 = arith.andi %77, %79 : vector<9x9x1xi1>
    %cst_31 = arith.constant 0.000000e+00 : f32
    %81 = vector.shape_cast %80 : vector<9x9x1xi1> to vector<9x9x1xi1>
    %82 = vector.broadcast %81 : vector<9x9x1xi1> to vector<9x9x128xi1>
    %83 = vector.broadcast %cst_31 : f32 to vector<9x9x128xf32>
    %84 = arith.select %82, %75, %83 : vector<9x9x128xi1>, vector<9x9x128xf32>
    %85 = arith.truncf %84 : vector<9x9x128xf32> to vector<9x9x128xbf16>
    %cst_32 = arith.constant 0.000000e+00 : f32
    %86 = vector.broadcast %cst_32 : f32 to vector<64x128xf32>
    %87 = vector.extract_strided_slice %28 {offsets = [0, 0, 0], sizes = [8, 8, 128], strides = [1, 1, 1]} : vector<9x9x128xbf16> to vector<8x8x128xbf16>
    %88 = vector.shape_cast %87 : vector<8x8x128xbf16> to vector<64x128xbf16>
    %c0_33 = arith.constant 0 : index
    %c0_34 = arith.constant 0 : index
    %c0_35 = arith.constant 0 : index
    %89 = vector.load %arg4[%c0_33, %c0_34, %c0_35] : memref<9x128x128xbf16, #tpu.memory_space<vmem>>, vector<1x128x128xbf16>
    %90 = vector.shape_cast %89 : vector<1x128x128xbf16> to vector<128x128xbf16>
    %cst_36 = arith.constant dense<0.000000e+00> : vector<64x128xf32>
    %91 = tpu.matmul %88, %90, %cst_36 {dimension_numbers = #tpu.dot_dimension_numbers<[1], [0], [0], [1], [0, 0, 1, 1], [], []>} : vector<64x128xbf16>, vector<128x128xbf16>, vector<64x128xf32> -> vector<64x128xf32>
    %92 = arith.addf %86, %91 : vector<64x128xf32>
    %93 = vector.extract_strided_slice %47 {offsets = [0, 0, 0], sizes = [8, 8, 128], strides = [1, 1, 1]} : vector<9x9x128xbf16> to vector<8x8x128xbf16>
    %94 = vector.shape_cast %93 : vector<8x8x128xbf16> to vector<64x128xbf16>
    %c1_37 = arith.constant 1 : index
    %c0_38 = arith.constant 0 : index
    %c0_39 = arith.constant 0 : index
    %95 = vector.load %arg4[%c1_37, %c0_38, %c0_39] : memref<9x128x128xbf16, #tpu.memory_space<vmem>>, vector<1x128x128xbf16>
    %96 = vector.shape_cast %95 : vector<1x128x128xbf16> to vector<128x128xbf16>
    %cst_40 = arith.constant dense<0.000000e+00> : vector<64x128xf32>
    %97 = tpu.matmul %94, %96, %cst_40 {dimension_numbers = #tpu.dot_dimension_numbers<[1], [0], [0], [1], [0, 0, 1, 1], [], []>} : vector<64x128xbf16>, vector<128x128xbf16>, vector<64x128xf32> -> vector<64x128xf32>
    %98 = arith.addf %92, %97 : vector<64x128xf32>
    %99 = vector.extract_strided_slice %28 {offsets = [0, 1, 0], sizes = [8, 8, 128], strides = [1, 1, 1]} : vector<9x9x128xbf16> to vector<8x8x128xbf16>
    %100 = vector.shape_cast %99 : vector<8x8x128xbf16> to vector<64x128xbf16>
    %c2_41 = arith.constant 2 : index
    %c0_42 = arith.constant 0 : index
    %c0_43 = arith.constant 0 : index
    %101 = vector.load %arg4[%c2_41, %c0_42, %c0_43] : memref<9x128x128xbf16, #tpu.memory_space<vmem>>, vector<1x128x128xbf16>
    %102 = vector.shape_cast %101 : vector<1x128x128xbf16> to vector<128x128xbf16>
    %cst_44 = arith.constant dense<0.000000e+00> : vector<64x128xf32>
    %103 = tpu.matmul %100, %102, %cst_44 {dimension_numbers = #tpu.dot_dimension_numbers<[1], [0], [0], [1], [0, 0, 1, 1], [], []>} : vector<64x128xbf16>, vector<128x128xbf16>, vector<64x128xf32> -> vector<64x128xf32>
    %104 = arith.addf %98, %103 : vector<64x128xf32>
    %105 = vector.extract_strided_slice %66 {offsets = [0, 0, 0], sizes = [8, 8, 128], strides = [1, 1, 1]} : vector<9x9x128xbf16> to vector<8x8x128xbf16>
    %106 = vector.shape_cast %105 : vector<8x8x128xbf16> to vector<64x128xbf16>
    %c3_45 = arith.constant 3 : index
    %c0_46 = arith.constant 0 : index
    %c0_47 = arith.constant 0 : index
    %107 = vector.load %arg4[%c3_45, %c0_46, %c0_47] : memref<9x128x128xbf16, #tpu.memory_space<vmem>>, vector<1x128x128xbf16>
    %108 = vector.shape_cast %107 : vector<1x128x128xbf16> to vector<128x128xbf16>
    %cst_48 = arith.constant dense<0.000000e+00> : vector<64x128xf32>
    %109 = tpu.matmul %106, %108, %cst_48 {dimension_numbers = #tpu.dot_dimension_numbers<[1], [0], [0], [1], [0, 0, 1, 1], [], []>} : vector<64x128xbf16>, vector<128x128xbf16>, vector<64x128xf32> -> vector<64x128xf32>
    %110 = arith.addf %104, %109 : vector<64x128xf32>
    %111 = vector.extract_strided_slice %85 {offsets = [0, 0, 0], sizes = [8, 8, 128], strides = [1, 1, 1]} : vector<9x9x128xbf16> to vector<8x8x128xbf16>
    %112 = vector.shape_cast %111 : vector<8x8x128xbf16> to vector<64x128xbf16>
    %c4 = arith.constant 4 : index
    %c0_49 = arith.constant 0 : index
    %c0_50 = arith.constant 0 : index
    %113 = vector.load %arg4[%c4, %c0_49, %c0_50] : memref<9x128x128xbf16, #tpu.memory_space<vmem>>, vector<1x128x128xbf16>
    %114 = vector.shape_cast %113 : vector<1x128x128xbf16> to vector<128x128xbf16>
    %cst_51 = arith.constant dense<0.000000e+00> : vector<64x128xf32>
    %115 = tpu.matmul %112, %114, %cst_51 {dimension_numbers = #tpu.dot_dimension_numbers<[1], [0], [0], [1], [0, 0, 1, 1], [], []>} : vector<64x128xbf16>, vector<128x128xbf16>, vector<64x128xf32> -> vector<64x128xf32>
    %116 = arith.addf %110, %115 : vector<64x128xf32>
    %117 = vector.extract_strided_slice %66 {offsets = [0, 1, 0], sizes = [8, 8, 128], strides = [1, 1, 1]} : vector<9x9x128xbf16> to vector<8x8x128xbf16>
    %118 = vector.shape_cast %117 : vector<8x8x128xbf16> to vector<64x128xbf16>
    %c5 = arith.constant 5 : index
    %c0_52 = arith.constant 0 : index
    %c0_53 = arith.constant 0 : index
    %119 = vector.load %arg4[%c5, %c0_52, %c0_53] : memref<9x128x128xbf16, #tpu.memory_space<vmem>>, vector<1x128x128xbf16>
    %120 = vector.shape_cast %119 : vector<1x128x128xbf16> to vector<128x128xbf16>
    %cst_54 = arith.constant dense<0.000000e+00> : vector<64x128xf32>
    %121 = tpu.matmul %118, %120, %cst_54 {dimension_numbers = #tpu.dot_dimension_numbers<[1], [0], [0], [1], [0, 0, 1, 1], [], []>} : vector<64x128xbf16>, vector<128x128xbf16>, vector<64x128xf32> -> vector<64x128xf32>
    %122 = arith.addf %116, %121 : vector<64x128xf32>
    %123 = vector.extract_strided_slice %28 {offsets = [1, 0, 0], sizes = [8, 8, 128], strides = [1, 1, 1]} : vector<9x9x128xbf16> to vector<8x8x128xbf16>
    %124 = vector.shape_cast %123 : vector<8x8x128xbf16> to vector<64x128xbf16>
    %c6 = arith.constant 6 : index
    %c0_55 = arith.constant 0 : index
    %c0_56 = arith.constant 0 : index
    %125 = vector.load %arg4[%c6, %c0_55, %c0_56] : memref<9x128x128xbf16, #tpu.memory_space<vmem>>, vector<1x128x128xbf16>
    %126 = vector.shape_cast %125 : vector<1x128x128xbf16> to vector<128x128xbf16>
    %cst_57 = arith.constant dense<0.000000e+00> : vector<64x128xf32>
    %127 = tpu.matmul %124, %126, %cst_57 {dimension_numbers = #tpu.dot_dimension_numbers<[1], [0], [0], [1], [0, 0, 1, 1], [], []>} : vector<64x128xbf16>, vector<128x128xbf16>, vector<64x128xf32> -> vector<64x128xf32>
    %128 = arith.addf %122, %127 : vector<64x128xf32>
    %129 = vector.extract_strided_slice %47 {offsets = [1, 0, 0], sizes = [8, 8, 128], strides = [1, 1, 1]} : vector<9x9x128xbf16> to vector<8x8x128xbf16>
    %130 = vector.shape_cast %129 : vector<8x8x128xbf16> to vector<64x128xbf16>
    %c7 = arith.constant 7 : index
    %c0_58 = arith.constant 0 : index
    %c0_59 = arith.constant 0 : index
    %131 = vector.load %arg4[%c7, %c0_58, %c0_59] : memref<9x128x128xbf16, #tpu.memory_space<vmem>>, vector<1x128x128xbf16>
    %132 = vector.shape_cast %131 : vector<1x128x128xbf16> to vector<128x128xbf16>
    %cst_60 = arith.constant dense<0.000000e+00> : vector<64x128xf32>
    %133 = tpu.matmul %130, %132, %cst_60 {dimension_numbers = #tpu.dot_dimension_numbers<[1], [0], [0], [1], [0, 0, 1, 1], [], []>} : vector<64x128xbf16>, vector<128x128xbf16>, vector<64x128xf32> -> vector<64x128xf32>
    %134 = arith.addf %128, %133 : vector<64x128xf32>
    %135 = vector.extract_strided_slice %28 {offsets = [1, 1, 0], sizes = [8, 8, 128], strides = [1, 1, 1]} : vector<9x9x128xbf16> to vector<8x8x128xbf16>
    %136 = vector.shape_cast %135 : vector<8x8x128xbf16> to vector<64x128xbf16>
    %c8 = arith.constant 8 : index
    %c0_61 = arith.constant 0 : index
    %c0_62 = arith.constant 0 : index
    %137 = vector.load %arg4[%c8, %c0_61, %c0_62] : memref<9x128x128xbf16, #tpu.memory_space<vmem>>, vector<1x128x128xbf16>
    %138 = vector.shape_cast %137 : vector<1x128x128xbf16> to vector<128x128xbf16>
    %cst_63 = arith.constant dense<0.000000e+00> : vector<64x128xf32>
    %139 = tpu.matmul %136, %138, %cst_63 {dimension_numbers = #tpu.dot_dimension_numbers<[1], [0], [0], [1], [0, 0, 1, 1], [], []>} : vector<64x128xbf16>, vector<128x128xbf16>, vector<64x128xf32> -> vector<64x128xf32>
    %140 = arith.addf %134, %139 : vector<64x128xf32>
    %cst_64 = arith.constant dense<0.000000e+00> : vector<128xf32>
    %141 = vector.multi_reduction <add>, %140, %cst_64 [0] : vector<64x128xf32> to vector<128xf32>
    %142 = vector.shape_cast %141 : vector<128xf32> to vector<1x128xf32>
    %143 = arith.mulf %140, %140 : vector<64x128xf32>
    %cst_65 = arith.constant dense<0.000000e+00> : vector<128xf32>
    %144 = vector.multi_reduction <add>, %143, %cst_65 [0] : vector<64x128xf32> to vector<128xf32>
    %145 = vector.shape_cast %144 : vector<128xf32> to vector<1x128xf32>
    %146 = tpu.concatenate %142, %145 in 0 : vector<1x128xf32>, vector<1x128xf32> -> vector<2x128xf32>
    %c0_66 = arith.constant 0 : index
    %c0_67 = arith.constant 0 : index
    %c0_68 = arith.constant 0 : index
    %c0_69 = arith.constant 0 : index
    %147 = vector.load %arg6[%c0_66, %c0_67, %c0_68, %c0_69] : memref<1x1x2x128xf32, #tpu.memory_space<vmem>>, vector<1x1x2x128xf32>
    %148 = vector.shape_cast %147 : vector<1x1x2x128xf32> to vector<2x128xf32>
    %149 = vector.shape_cast %146 : vector<2x128xf32> to vector<1x1x2x128xf32>
    tpu.vector_store %arg6[%c0_66, %c0_67, %c0_68, %c0_69], %149 {strides = array<i32>} : memref<1x1x2x128xf32, #tpu.memory_space<vmem>>, vector<1x1x2x128xf32>,
    %150 = vector.shape_cast %140 : vector<64x128xf32> to vector<8x8x128xf32>
    %151 = arith.truncf %150 : vector<8x8x128xf32> to vector<8x8x128xbf16>
    %c0_70 = arith.constant 0 : index
    %c0_71 = arith.constant 0 : index
    %c0_72 = arith.constant 0 : index
    %c0_73 = arith.constant 0 : index
    %152 = vector.load %arg5[%c0_70, %c0_71, %c0_72, %c0_73] : memref<1x8x8x128xbf16, #tpu.memory_space<vmem>>, vector<1x8x8x128xbf16>
    %153 = vector.shape_cast %152 : vector<1x8x8x128xbf16> to vector<8x8x128xbf16>
    %154 = vector.shape_cast %151 : vector<8x8x128xbf16> to vector<1x8x8x128xbf16>
    tpu.vector_store %arg5[%c0_70, %c0_71, %c0_72, %c0_73], %154 {strides = array<i32>} : memref<1x8x8x128xbf16, #tpu.memory_space<vmem>>, vector<1x8x8x128xbf16>,
    return
  }
  func.func @transform_0(%arg0: i32, %arg1: i32) -> (i32, i32, i32, i32, i32) {
    %c1_i32 = arith.constant 1 : i32
    %0 = arith.muli %arg0, %c1_i32 : i32
    %1 = arith.addi %0, %arg1 : i32
    %c0_i32 = arith.constant 0 : i32
    %c0_i32_0 = arith.constant 0 : i32
    %c0_i32_1 = arith.constant 0 : i32
    %c0_i32_2 = arith.constant 0 : i32
    %c0_i32_3 = arith.constant 0 : i32
    return %1, %c0_i32, %c0_i32_0, %c0_i32_1, %c0_i32_2 : i32, i32, i32, i32, i32
  }
  func.func @transform_1(%arg0: i32, %arg1: i32) -> (i32, i32) {
    %c0_i32 = arith.constant 0 : i32
    %c0_i32_0 = arith.constant 0 : i32
    %c0_i32_1 = arith.constant 0 : i32
    return %c0_i32, %c0_i32_0 : i32, i32
  }
  func.func @transform_2(%arg0: i32, %arg1: i32) -> (i32, i32, i32) {
    %c0_i32 = arith.constant 0 : i32
    %c0_i32_0 = arith.constant 0 : i32
    %c0_i32_1 = arith.constant 0 : i32
    %c0_i32_2 = arith.constant 0 : i32
    return %c0_i32, %c0_i32_0, %c0_i32_1 : i32, i32, i32
  }
  func.func @transform_3(%arg0: i32, %arg1: i32) -> (i32, i32, i32, i32) {
    %c0_i32 = arith.constant 0 : i32
    %c0_i32_0 = arith.constant 0 : i32
    %c0_i32_1 = arith.constant 0 : i32
    return %arg0, %arg1, %c0_i32, %c0_i32_0 : i32, i32, i32, i32
  }
  func.func @transform_4(%arg0: i32, %arg1: i32) -> (i32, i32, i32, i32) {
    %c0_i32 = arith.constant 0 : i32
    %c0_i32_0 = arith.constant 0 : i32
    %c0_i32_1 = arith.constant 0 : i32
    return %arg0, %arg1, %c0_i32, %c0_i32_0 : i32, i32, i32, i32
  }
}

module attributes {stable_mosaic.version = 11 : i64} {
  func.func @conv2_kernel(%arg0: i32, %arg1: i32, %arg2: memref<1x8x8x128xbf16, #tpu.memory_space<vmem>>, %arg3: memref<1x1x8x128xbf16, #tpu.memory_space<vmem>>, %arg4: memref<1x1x8x128xbf16, #tpu.memory_space<vmem>>, %arg5: memref<2x128xf32, #tpu.memory_space<vmem>>, %arg6: memref<9x128x128xbf16, #tpu.memory_space<vmem>>, %arg7: memref<1x1x9x9x128xbf16, #tpu.memory_space<vmem>>, %arg8: memref<128x128xbf16, #tpu.memory_space<vmem>>, %arg9: memref<1x8x8x128xf32, #tpu.memory_space<vmem>>, %arg10: memref<10x10x128xbf16, #tpu.memory_space<vmem>>) attributes {dimension_semantics = [#tpu.dimension_semantics<parallel>, #tpu.dimension_semantics<parallel>], iteration_bounds = array<i64: 2, 1>, scalar_prefetch = 0 : i64, scratch_operands = 1 : i64, tpu.core_type = #tpu.core_type<tc>, window_params = [{transform_indices = @transform_0, window_bounds = array<i64: 1, 8, 8, 128>}, {transform_indices = @transform_1, window_bounds = array<i64: 1, 1, 8, 128>}, {transform_indices = @transform_2, window_bounds = array<i64: 1, 1, 8, 128>}, {pipeline_mode = #tpu.pipeline_mode<synchronous>, transform_indices = @transform_3, window_bounds = array<i64: 2, 128>}, {pipeline_mode = #tpu.pipeline_mode<synchronous>, transform_indices = @transform_4, window_bounds = array<i64: 9, 128, 128>}, {transform_indices = @transform_5, window_bounds = array<i64: 1, 1, 9, 9, 128>}, {pipeline_mode = #tpu.pipeline_mode<synchronous>, transform_indices = @transform_6, window_bounds = array<i64: 128, 128>}, {transform_indices = @transform_7, window_bounds = array<i64: 1, 8, 8, 128>}]} {
    %c0 = arith.constant 0 : index
    %c0_0 = arith.constant 0 : index
    %0 = vector.load %arg5[%c0, %c0_0] : memref<2x128xf32, #tpu.memory_space<vmem>>, vector<2x128xf32>
    %1 = vector.extract_strided_slice %0 {offsets = [0, 0], sizes = [1, 128], strides = [1, 1]} : vector<2x128xf32> to vector<1x128xf32>
    %2 = vector.shape_cast %1 : vector<1x128xf32> to vector<1x1x128xf32>
    %3 = vector.extract_strided_slice %0 {offsets = [1, 0], sizes = [1, 128], strides = [1, 1]} : vector<2x128xf32> to vector<1x128xf32>
    %4 = vector.shape_cast %3 : vector<1x128xf32> to vector<1x1x128xf32>
    %c0_1 = arith.constant 0 : index
    %c0_2 = arith.constant 0 : index
    %c0_3 = arith.constant 0 : index
    %c0_4 = arith.constant 0 : index
    %5 = vector.load %arg2[%c0_1, %c0_2, %c0_3, %c0_4] : memref<1x8x8x128xbf16, #tpu.memory_space<vmem>>, vector<1x8x8x128xbf16>
    %6 = vector.shape_cast %5 : vector<1x8x8x128xbf16> to vector<8x8x128xbf16>
    %7 = arith.extf %6 : vector<8x8x128xbf16> to vector<8x8x128xf32>
    %8 = vector.broadcast %2 : vector<1x1x128xf32> to vector<8x8x128xf32>
    %9 = arith.mulf %7, %8 : vector<8x8x128xf32>
    %10 = vector.broadcast %4 : vector<1x1x128xf32> to vector<8x8x128xf32>
    %11 = arith.addf %9, %10 : vector<8x8x128xf32>
    %cst = arith.constant 0.000000e+00 : f32
    %12 = vector.broadcast %cst : f32 to vector<8x8x128xf32>
    %13 = arith.maximumf %11, %12 : vector<8x8x128xf32>
    %14 = arith.truncf %13 : vector<8x8x128xf32> to vector<8x8x128xbf16>
    %c0_5 = arith.constant 0 : index
    %c0_6 = arith.constant 0 : index
    %c0_7 = arith.constant 0 : index
    %c0_8 = arith.constant 0 : index
    %15 = vector.load %arg3[%c0_5, %c0_6, %c0_7, %c0_8] : memref<1x1x8x128xbf16, #tpu.memory_space<vmem>>, vector<1x1x8x128xbf16>
    %16 = vector.shape_cast %15 : vector<1x1x8x128xbf16> to vector<1x8x128xbf16>
    %17 = arith.extf %16 : vector<1x8x128xbf16> to vector<1x8x128xf32>
    %18 = vector.broadcast %2 : vector<1x1x128xf32> to vector<1x8x128xf32>
    %19 = arith.mulf %17, %18 : vector<1x8x128xf32>
    %20 = vector.broadcast %4 : vector<1x1x128xf32> to vector<1x8x128xf32>
    %21 = arith.addf %19, %20 : vector<1x8x128xf32>
    %cst_9 = arith.constant 0.000000e+00 : f32
    %22 = vector.broadcast %cst_9 : f32 to vector<1x8x128xf32>
    %23 = arith.maximumf %21, %22 : vector<1x8x128xf32>
    %c0_i32 = arith.constant 0 : i32
    %24 = arith.cmpi sgt, %arg1, %c0_i32 : i32
    %25 = arith.extui %24 : i1 to i32
    %26 = arith.sitofp %25 : i32 to f32
    %27 = vector.broadcast %26 : f32 to vector<1x8x128xf32>
    %28 = arith.mulf %23, %27 : vector<1x8x128xf32>
    %29 = arith.truncf %28 : vector<1x8x128xf32> to vector<1x8x128xbf16>
    %c0_10 = arith.constant 0 : index
    %c0_11 = arith.constant 0 : index
    %c0_12 = arith.constant 0 : index
    %c0_13 = arith.constant 0 : index
    %30 = vector.load %arg4[%c0_10, %c0_11, %c0_12, %c0_13] : memref<1x1x8x128xbf16, #tpu.memory_space<vmem>>, vector<1x1x8x128xbf16>
    %31 = vector.shape_cast %30 : vector<1x1x8x128xbf16> to vector<1x8x128xbf16>
    %32 = arith.extf %31 : vector<1x8x128xbf16> to vector<1x8x128xf32>
    %33 = vector.broadcast %2 : vector<1x1x128xf32> to vector<1x8x128xf32>
    %34 = arith.mulf %32, %33 : vector<1x8x128xf32>
    %35 = vector.broadcast %4 : vector<1x1x128xf32> to vector<1x8x128xf32>
    %36 = arith.addf %34, %35 : vector<1x8x128xf32>
    %cst_14 = arith.constant 0.000000e+00 : f32
    %37 = vector.broadcast %cst_14 : f32 to vector<1x8x128xf32>
    %38 = arith.maximumf %36, %37 : vector<1x8x128xf32>
    %c0_i32_15 = arith.constant 0 : i32
    %39 = arith.cmpi slt, %arg1, %c0_i32_15 : i32
    %40 = arith.extui %39 : i1 to i32
    %41 = arith.sitofp %40 : i32 to f32
    %42 = vector.broadcast %41 : f32 to vector<1x8x128xf32>
    %43 = arith.mulf %38, %42 : vector<1x8x128xf32>
    %44 = arith.truncf %43 : vector<1x8x128xf32> to vector<1x8x128xbf16>
    %cst_16 = arith.constant 0.000000e+00 : bf16
    %45 = vector.broadcast %cst_16 : bf16 to vector<10x10x128xbf16>
    %c0_17 = arith.constant 0 : index
    %c0_18 = arith.constant 0 : index
    %c0_19 = arith.constant 0 : index
    %46 = vector.load %arg10[%c0_17, %c0_18, %c0_19] : memref<10x10x128xbf16, #tpu.memory_space<vmem>>, vector<10x10x128xbf16>
    tpu.vector_store %arg10[%c0_17, %c0_18, %c0_19], %45 {strides = array<i32>} : memref<10x10x128xbf16, #tpu.memory_space<vmem>>, vector<10x10x128xbf16>,
    %c0_20 = arith.constant 0 : index
    %c1 = arith.constant 1 : index
    %c0_21 = arith.constant 0 : index
    %47 = vector.load %arg10[%c0_20, %c1, %c0_21] : memref<10x10x128xbf16, #tpu.memory_space<vmem>>, vector<1x8x128xbf16>
    tpu.vector_store %arg10[%c0_20, %c1, %c0_21], %29 {strides = array<i32>} : memref<10x10x128xbf16, #tpu.memory_space<vmem>>, vector<1x8x128xbf16>,
    %c1_22 = arith.constant 1 : index
    %c1_23 = arith.constant 1 : index
    %c0_24 = arith.constant 0 : index
    %48 = vector.load %arg10[%c1_22, %c1_23, %c0_24] : memref<10x10x128xbf16, #tpu.memory_space<vmem>>, vector<8x8x128xbf16>
    tpu.vector_store %arg10[%c1_22, %c1_23, %c0_24], %14 {strides = array<i32>} : memref<10x10x128xbf16, #tpu.memory_space<vmem>>, vector<8x8x128xbf16>,
    %c9 = arith.constant 9 : index
    %c1_25 = arith.constant 1 : index
    %c0_26 = arith.constant 0 : index
    %49 = vector.load %arg10[%c9, %c1_25, %c0_26] : memref<10x10x128xbf16, #tpu.memory_space<vmem>>, vector<1x8x128xbf16>
    tpu.vector_store %arg10[%c9, %c1_25, %c0_26], %44 {strides = array<i32>} : memref<10x10x128xbf16, #tpu.memory_space<vmem>>, vector<1x8x128xbf16>,
    %c0_27 = arith.constant 0 : index
    %c0_28 = arith.constant 0 : index
    %c0_29 = arith.constant 0 : index
    %c0_30 = arith.constant 0 : index
    %c0_31 = arith.constant 0 : index
    %50 = vector.load %arg7[%c0_27, %c0_28, %c0_29, %c0_30, %c0_31] : memref<1x1x9x9x128xbf16, #tpu.memory_space<vmem>>, vector<1x1x8x8x128xbf16>
    %51 = vector.shape_cast %50 : vector<1x1x8x8x128xbf16> to vector<8x8x128xbf16>
    %52 = vector.shape_cast %51 : vector<8x8x128xbf16> to vector<64x128xbf16>
    %c0_32 = arith.constant 0 : index
    %c0_33 = arith.constant 0 : index
    %53 = vector.load %arg8[%c0_32, %c0_33] : memref<128x128xbf16, #tpu.memory_space<vmem>>, vector<128x128xbf16>
    %cst_34 = arith.constant dense<0.000000e+00> : vector<64x128xf32>
    %54 = tpu.matmul %52, %53, %cst_34 {dimension_numbers = #tpu.dot_dimension_numbers<[1], [0], [0], [1], [0, 0, 1, 1], [], []>} : vector<64x128xbf16>, vector<128x128xbf16>, vector<64x128xf32> -> vector<64x128xf32>
    %c0_35 = arith.constant 0 : index
    %c0_36 = arith.constant 0 : index
    %c0_37 = arith.constant 0 : index
    %55 = vector.load %arg10[%c0_35, %c0_36, %c0_37] : memref<10x10x128xbf16, #tpu.memory_space<vmem>>, vector<8x8x128xbf16>
    %56 = vector.shape_cast %55 : vector<8x8x128xbf16> to vector<64x128xbf16>
    %c0_38 = arith.constant 0 : index
    %c0_39 = arith.constant 0 : index
    %c0_40 = arith.constant 0 : index
    %57 = vector.load %arg6[%c0_38, %c0_39, %c0_40] : memref<9x128x128xbf16, #tpu.memory_space<vmem>>, vector<1x128x128xbf16>
    %58 = vector.shape_cast %57 : vector<1x128x128xbf16> to vector<128x128xbf16>
    %cst_41 = arith.constant dense<0.000000e+00> : vector<64x128xf32>
    %59 = tpu.matmul %56, %58, %cst_41 {dimension_numbers = #tpu.dot_dimension_numbers<[1], [0], [0], [1], [0, 0, 1, 1], [], []>} : vector<64x128xbf16>, vector<128x128xbf16>, vector<64x128xf32> -> vector<64x128xf32>
    %60 = arith.addf %54, %59 : vector<64x128xf32>
    %c0_42 = arith.constant 0 : index
    %c1_43 = arith.constant 1 : index
    %c0_44 = arith.constant 0 : index
    %61 = vector.load %arg10[%c0_42, %c1_43, %c0_44] : memref<10x10x128xbf16, #tpu.memory_space<vmem>>, vector<8x8x128xbf16>
    %62 = vector.shape_cast %61 : vector<8x8x128xbf16> to vector<64x128xbf16>
    %c1_45 = arith.constant 1 : index
    %c0_46 = arith.constant 0 : index
    %c0_47 = arith.constant 0 : index
    %63 = vector.load %arg6[%c1_45, %c0_46, %c0_47] : memref<9x128x128xbf16, #tpu.memory_space<vmem>>, vector<1x128x128xbf16>
    %64 = vector.shape_cast %63 : vector<1x128x128xbf16> to vector<128x128xbf16>
    %cst_48 = arith.constant dense<0.000000e+00> : vector<64x128xf32>
    %65 = tpu.matmul %62, %64, %cst_48 {dimension_numbers = #tpu.dot_dimension_numbers<[1], [0], [0], [1], [0, 0, 1, 1], [], []>} : vector<64x128xbf16>, vector<128x128xbf16>, vector<64x128xf32> -> vector<64x128xf32>
    %66 = arith.addf %60, %65 : vector<64x128xf32>
    %c0_49 = arith.constant 0 : index
    %c2 = arith.constant 2 : index
    %c0_50 = arith.constant 0 : index
    %67 = vector.load %arg10[%c0_49, %c2, %c0_50] : memref<10x10x128xbf16, #tpu.memory_space<vmem>>, vector<8x8x128xbf16>
    %68 = vector.shape_cast %67 : vector<8x8x128xbf16> to vector<64x128xbf16>
    %c2_51 = arith.constant 2 : index
    %c0_52 = arith.constant 0 : index
    %c0_53 = arith.constant 0 : index
    %69 = vector.load %arg6[%c2_51, %c0_52, %c0_53] : memref<9x128x128xbf16, #tpu.memory_space<vmem>>, vector<1x128x128xbf16>
    %70 = vector.shape_cast %69 : vector<1x128x128xbf16> to vector<128x128xbf16>
    %cst_54 = arith.constant dense<0.000000e+00> : vector<64x128xf32>
    %71 = tpu.matmul %68, %70, %cst_54 {dimension_numbers = #tpu.dot_dimension_numbers<[1], [0], [0], [1], [0, 0, 1, 1], [], []>} : vector<64x128xbf16>, vector<128x128xbf16>, vector<64x128xf32> -> vector<64x128xf32>
    %72 = arith.addf %66, %71 : vector<64x128xf32>
    %c1_55 = arith.constant 1 : index
    %c0_56 = arith.constant 0 : index
    %c0_57 = arith.constant 0 : index
    %73 = vector.load %arg10[%c1_55, %c0_56, %c0_57] : memref<10x10x128xbf16, #tpu.memory_space<vmem>>, vector<8x8x128xbf16>
    %74 = vector.shape_cast %73 : vector<8x8x128xbf16> to vector<64x128xbf16>
    %c3 = arith.constant 3 : index
    %c0_58 = arith.constant 0 : index
    %c0_59 = arith.constant 0 : index
    %75 = vector.load %arg6[%c3, %c0_58, %c0_59] : memref<9x128x128xbf16, #tpu.memory_space<vmem>>, vector<1x128x128xbf16>
    %76 = vector.shape_cast %75 : vector<1x128x128xbf16> to vector<128x128xbf16>
    %cst_60 = arith.constant dense<0.000000e+00> : vector<64x128xf32>
    %77 = tpu.matmul %74, %76, %cst_60 {dimension_numbers = #tpu.dot_dimension_numbers<[1], [0], [0], [1], [0, 0, 1, 1], [], []>} : vector<64x128xbf16>, vector<128x128xbf16>, vector<64x128xf32> -> vector<64x128xf32>
    %78 = arith.addf %72, %77 : vector<64x128xf32>
    %c1_61 = arith.constant 1 : index
    %c1_62 = arith.constant 1 : index
    %c0_63 = arith.constant 0 : index
    %79 = vector.load %arg10[%c1_61, %c1_62, %c0_63] : memref<10x10x128xbf16, #tpu.memory_space<vmem>>, vector<8x8x128xbf16>
    %80 = vector.shape_cast %79 : vector<8x8x128xbf16> to vector<64x128xbf16>
    %c4 = arith.constant 4 : index
    %c0_64 = arith.constant 0 : index
    %c0_65 = arith.constant 0 : index
    %81 = vector.load %arg6[%c4, %c0_64, %c0_65] : memref<9x128x128xbf16, #tpu.memory_space<vmem>>, vector<1x128x128xbf16>
    %82 = vector.shape_cast %81 : vector<1x128x128xbf16> to vector<128x128xbf16>
    %cst_66 = arith.constant dense<0.000000e+00> : vector<64x128xf32>
    %83 = tpu.matmul %80, %82, %cst_66 {dimension_numbers = #tpu.dot_dimension_numbers<[1], [0], [0], [1], [0, 0, 1, 1], [], []>} : vector<64x128xbf16>, vector<128x128xbf16>, vector<64x128xf32> -> vector<64x128xf32>
    %84 = arith.addf %78, %83 : vector<64x128xf32>
    %c1_67 = arith.constant 1 : index
    %c2_68 = arith.constant 2 : index
    %c0_69 = arith.constant 0 : index
    %85 = vector.load %arg10[%c1_67, %c2_68, %c0_69] : memref<10x10x128xbf16, #tpu.memory_space<vmem>>, vector<8x8x128xbf16>
    %86 = vector.shape_cast %85 : vector<8x8x128xbf16> to vector<64x128xbf16>
    %c5 = arith.constant 5 : index
    %c0_70 = arith.constant 0 : index
    %c0_71 = arith.constant 0 : index
    %87 = vector.load %arg6[%c5, %c0_70, %c0_71] : memref<9x128x128xbf16, #tpu.memory_space<vmem>>, vector<1x128x128xbf16>
    %88 = vector.shape_cast %87 : vector<1x128x128xbf16> to vector<128x128xbf16>
    %cst_72 = arith.constant dense<0.000000e+00> : vector<64x128xf32>
    %89 = tpu.matmul %86, %88, %cst_72 {dimension_numbers = #tpu.dot_dimension_numbers<[1], [0], [0], [1], [0, 0, 1, 1], [], []>} : vector<64x128xbf16>, vector<128x128xbf16>, vector<64x128xf32> -> vector<64x128xf32>
    %90 = arith.addf %84, %89 : vector<64x128xf32>
    %c2_73 = arith.constant 2 : index
    %c0_74 = arith.constant 0 : index
    %c0_75 = arith.constant 0 : index
    %91 = vector.load %arg10[%c2_73, %c0_74, %c0_75] : memref<10x10x128xbf16, #tpu.memory_space<vmem>>, vector<8x8x128xbf16>
    %92 = vector.shape_cast %91 : vector<8x8x128xbf16> to vector<64x128xbf16>
    %c6 = arith.constant 6 : index
    %c0_76 = arith.constant 0 : index
    %c0_77 = arith.constant 0 : index
    %93 = vector.load %arg6[%c6, %c0_76, %c0_77] : memref<9x128x128xbf16, #tpu.memory_space<vmem>>, vector<1x128x128xbf16>
    %94 = vector.shape_cast %93 : vector<1x128x128xbf16> to vector<128x128xbf16>
    %cst_78 = arith.constant dense<0.000000e+00> : vector<64x128xf32>
    %95 = tpu.matmul %92, %94, %cst_78 {dimension_numbers = #tpu.dot_dimension_numbers<[1], [0], [0], [1], [0, 0, 1, 1], [], []>} : vector<64x128xbf16>, vector<128x128xbf16>, vector<64x128xf32> -> vector<64x128xf32>
    %96 = arith.addf %90, %95 : vector<64x128xf32>
    %c2_79 = arith.constant 2 : index
    %c1_80 = arith.constant 1 : index
    %c0_81 = arith.constant 0 : index
    %97 = vector.load %arg10[%c2_79, %c1_80, %c0_81] : memref<10x10x128xbf16, #tpu.memory_space<vmem>>, vector<8x8x128xbf16>
    %98 = vector.shape_cast %97 : vector<8x8x128xbf16> to vector<64x128xbf16>
    %c7 = arith.constant 7 : index
    %c0_82 = arith.constant 0 : index
    %c0_83 = arith.constant 0 : index
    %99 = vector.load %arg6[%c7, %c0_82, %c0_83] : memref<9x128x128xbf16, #tpu.memory_space<vmem>>, vector<1x128x128xbf16>
    %100 = vector.shape_cast %99 : vector<1x128x128xbf16> to vector<128x128xbf16>
    %cst_84 = arith.constant dense<0.000000e+00> : vector<64x128xf32>
    %101 = tpu.matmul %98, %100, %cst_84 {dimension_numbers = #tpu.dot_dimension_numbers<[1], [0], [0], [1], [0, 0, 1, 1], [], []>} : vector<64x128xbf16>, vector<128x128xbf16>, vector<64x128xf32> -> vector<64x128xf32>
    %102 = arith.addf %96, %101 : vector<64x128xf32>
    %c2_85 = arith.constant 2 : index
    %c2_86 = arith.constant 2 : index
    %c0_87 = arith.constant 0 : index
    %103 = vector.load %arg10[%c2_85, %c2_86, %c0_87] : memref<10x10x128xbf16, #tpu.memory_space<vmem>>, vector<8x8x128xbf16>
    %104 = vector.shape_cast %103 : vector<8x8x128xbf16> to vector<64x128xbf16>
    %c8 = arith.constant 8 : index
    %c0_88 = arith.constant 0 : index
    %c0_89 = arith.constant 0 : index
    %105 = vector.load %arg6[%c8, %c0_88, %c0_89] : memref<9x128x128xbf16, #tpu.memory_space<vmem>>, vector<1x128x128xbf16>
    %106 = vector.shape_cast %105 : vector<1x128x128xbf16> to vector<128x128xbf16>
    %cst_90 = arith.constant dense<0.000000e+00> : vector<64x128xf32>
    %107 = tpu.matmul %104, %106, %cst_90 {dimension_numbers = #tpu.dot_dimension_numbers<[1], [0], [0], [1], [0, 0, 1, 1], [], []>} : vector<64x128xbf16>, vector<128x128xbf16>, vector<64x128xf32> -> vector<64x128xf32>
    %108 = arith.addf %102, %107 : vector<64x128xf32>
    %109 = vector.shape_cast %108 : vector<64x128xf32> to vector<8x8x128xf32>
    %c0_91 = arith.constant 0 : index
    %c0_92 = arith.constant 0 : index
    %c0_93 = arith.constant 0 : index
    %c0_94 = arith.constant 0 : index
    %110 = vector.load %arg9[%c0_91, %c0_92, %c0_93, %c0_94] : memref<1x8x8x128xf32, #tpu.memory_space<vmem>>, vector<1x8x8x128xf32>
    %111 = vector.shape_cast %110 : vector<1x8x8x128xf32> to vector<8x8x128xf32>
    %112 = vector.shape_cast %109 : vector<8x8x128xf32> to vector<1x8x8x128xf32>
    tpu.vector_store %arg9[%c0_91, %c0_92, %c0_93, %c0_94], %112 {strides = array<i32>} : memref<1x8x8x128xf32, #tpu.memory_space<vmem>>, vector<1x8x8x128xf32>,
    return
  }
  func.func @transform_0(%arg0: i32, %arg1: i32) -> (i32, i32, i32, i32) {
    %c0_i32 = arith.constant 0 : i32
    %c0_i32_0 = arith.constant 0 : i32
    %c0_i32_1 = arith.constant 0 : i32
    return %arg0, %arg1, %c0_i32, %c0_i32_0 : i32, i32, i32, i32
  }
  func.func @transform_1(%arg0: i32, %arg1: i32) -> (i32, i32, i32, i32) {
    %c8_i32 = arith.constant 8 : i32
    %0 = arith.muli %arg1, %c8_i32 : i32
    %c1_i32 = arith.constant 1 : i32
    %1 = arith.subi %0, %c1_i32 : i32
    %c0_i32 = arith.constant 0 : i32
    %2 = arith.maxsi %1, %c0_i32 : i32
    %c0_i32_0 = arith.constant 0 : i32
    %c0_i32_1 = arith.constant 0 : i32
    %c0_i32_2 = arith.constant 0 : i32
    return %arg0, %2, %c0_i32_0, %c0_i32_1 : i32, i32, i32, i32
  }
  func.func @transform_2(%arg0: i32, %arg1: i32) -> (i32, i32, i32, i32) {
    %c8_i32 = arith.constant 8 : i32
    %0 = arith.muli %arg1, %c8_i32 : i32
    %c8_i32_0 = arith.constant 8 : i32
    %1 = arith.addi %0, %c8_i32_0 : i32
    %c7_i32 = arith.constant 7 : i32
    %2 = arith.minsi %1, %c7_i32 : i32
    %c0_i32 = arith.constant 0 : i32
    %c0_i32_1 = arith.constant 0 : i32
    %c0_i32_2 = arith.constant 0 : i32
    return %arg0, %2, %c0_i32, %c0_i32_1 : i32, i32, i32, i32
  }
  func.func @transform_3(%arg0: i32, %arg1: i32) -> (i32, i32) {
    %c0_i32 = arith.constant 0 : i32
    %c0_i32_0 = arith.constant 0 : i32
    %c0_i32_1 = arith.constant 0 : i32
    return %c0_i32, %c0_i32_0 : i32, i32
  }
  func.func @transform_4(%arg0: i32, %arg1: i32) -> (i32, i32, i32) {
    %c0_i32 = arith.constant 0 : i32
    %c0_i32_0 = arith.constant 0 : i32
    %c0_i32_1 = arith.constant 0 : i32
    %c0_i32_2 = arith.constant 0 : i32
    return %c0_i32, %c0_i32_0, %c0_i32_1 : i32, i32, i32
  }
  func.func @transform_5(%arg0: i32, %arg1: i32) -> (i32, i32, i32, i32, i32) {
    %c1_i32 = arith.constant 1 : i32
    %0 = arith.muli %arg0, %c1_i32 : i32
    %1 = arith.addi %0, %arg1 : i32
    %c3_i32 = arith.constant 3 : i32
    %c0_i32 = arith.constant 0 : i32
    %c0_i32_0 = arith.constant 0 : i32
    %c0_i32_1 = arith.constant 0 : i32
    %c0_i32_2 = arith.constant 0 : i32
    return %1, %c3_i32, %c0_i32, %c0_i32_0, %c0_i32_1 : i32, i32, i32, i32, i32
  }
  func.func @transform_6(%arg0: i32, %arg1: i32) -> (i32, i32) {
    %c0_i32 = arith.constant 0 : i32
    %c0_i32_0 = arith.constant 0 : i32
    %c0_i32_1 = arith.constant 0 : i32
    return %c0_i32, %c0_i32_0 : i32, i32
  }
  func.func @transform_7(%arg0: i32, %arg1: i32) -> (i32, i32, i32, i32) {
    %c0_i32 = arith.constant 0 : i32
    %c0_i32_0 = arith.constant 0 : i32
    %c0_i32_1 = arith.constant 0 : i32
    return %arg0, %arg1, %c0_i32, %c0_i32_0 : i32, i32, i32, i32
  }
}

</mosaic_0001>

<llo_original>
// kernel: resblock_down.3
$region0: #{resblock_down.3}
  #allocation0 [shape = 'u32[]', space=smem, size = 0x4, offset = 0x4, fixed_abs, tag = 'smem constant byte address 0x4 - core index']
  #allocation1 [shape = 'u32[144,128]{1,0:T(1,128)}', space=vmem, size = 0x12000, scoped, tag = 'internal scratch']
  %s0 = inlined_call_operand.vmem [shape: f32[2,16,16,4], index: 0, kind: input, shape index: {}]
  %s1 = inlined_call_operand.vmem [shape: f32[2,4], index: 1, kind: output, shape index: {}]
  %s2 = sld [smem:[#allocation0]]
  $region41: #{resblock_down.3} parent=0
    _
  %s4 = ssub.s32 1, %s2
  %s5 = scalar_select 0, %s4, %s2
  loop: start=0, step=1, limit=4
  $region2: #{resblock_down.3} parent=0 // loop_pre_header
    _
  $region3: #{resblock_down.3} parent=0 // loop_header
    %s7 = sphi 0, %s11
    %p8 = scmp.ge.s32.totalorder %s7, 4
    %s17 = sphi 0, %s19
    %s20 = sphi 0, %s17
    %s21 = sphi 0, %s20
    %s37 = sphi 0, %s21
    %s41 = sphi 0, %s41
    %s43 = sphi 0, %s41
    %s44 = sphi 0, %s43
    %s58 = sphi 0, %s44
  $region4: #{resblock_down.3} parent=0 // loop_header_branch
    %10 = sbr.rel (%p8) target = $region8
  $region5: #{resblock_down.3} parent=0 // loop_body
    %s12 = ssub.s32 %s7, 1
    %s13 = ssub.s32 %s7, 2
    %s14 = sadd.s32 %s7, 1
    %s15 = ssub.s32 %s7, %s14
    %p16 = scmp.eq.s32.totalorder %s15, 0
    %s18 = sadd.s32 %s17, 1
    %s19 = scalar_select %p16, %s17, %s18
    %p22 = pneg %p16
    %p23 = scmp.eq.s32.totalorder %s7, 1
    %p24 = por %p22, %p23
    %p25 = scmp.ne.s32.totalorder %s17, %s20
    %p26 = scmp.eq.s32.totalorder %s7, 0
    %p27 = por %p25, %p26
    %p28 = scmp.ne.s32.totalorder %s17, %s20
    %p29 = scmp.eq.s32.totalorder %s12, 1
    %p30 = por %p28, %p29
    %p31 = scmp.ne.s32.totalorder %s20, %s21
    %p32 = scmp.eq.s32.totalorder %s12, 0
    %p33 = por %p31, %p32
    %p34 = scmp.ne.s32.totalorder %s20, %s21
    %p35 = scmp.eq.s32.totalorder %s13, 1
    %p36 = por %p34, %p35
    %p38 = scmp.ne.s32.totalorder %s21, %s37
    %p39 = scmp.eq.s32.totalorder %s13, 0
    %p40 = por %p38, %p39
    %s42 = sadd.s32 %s41, 1
    %p45 = scmp.eq.s32.totalorder %s7, 1
    %p46 = scmp.ne.s32.totalorder %s41, %s43
    %p47 = scmp.eq.s32.totalorder %s7, 0
    %p48 = por %p46, %p47
    %p49 = scmp.ne.s32.totalorder %s41, %s43
    %p50 = scmp.eq.s32.totalorder %s12, 1
    %p51 = por %p49, %p50
    %p52 = scmp.ne.s32.totalorder %s43, %s44
    %p53 = scmp.eq.s32.totalorder %s12, 0
    %p54 = por %p52, %p53
    %p55 = scmp.ne.s32.totalorder %s43, %s44
    %p56 = scmp.eq.s32.totalorder %s13, 1
    %p57 = por %p55, %p56
    %p59 = scmp.ne.s32.totalorder %s44, %s58
    %p60 = scmp.eq.s32.totalorder %s13, 0
    %p61 = por %p59, %p60
    %p62 = scmp.le.s32.totalorder 1, %s7
    %p63 = scmp.lt.s32.totalorder %s7, 3
    %p64 = pnand %p62, %p63
    %p65 = pneg %p64
    // Predicated region
    $region9: #{resblock_down.3} parent=5 // pred_check
      _
    $region10: #{resblock_down.3} parent=5 // pred_check_branch
      %67 = sbr.rel (%p64) target = $region12
    $region11: #{resblock_down.3} parent=5 // pred_region
      %s68 = ssub.s32 %s7, 1
    $region12: #{resblock_down.3} parent=5 // pred_fallthru
      _
    %p69 = scmp.lt.s32.totalorder %s7, 2
    // Predicated region
    $region13: #{resblock_down.3} parent=5 // pred_check
      %p70 = pneg %p69
    $region14: #{resblock_down.3} parent=5 // pred_check_branch
      %72 = sbr.rel (%p70) target = $region16
    $region15: #{resblock_down.3} parent=5 // pred_region
      // Predicated region
      $region17: #{resblock_down.3} parent=15 // pred_check
        %p73 = pneg %p27
      $region18: #{resblock_down.3} parent=15 // pred_check_branch
        %75 = sbr.rel (%p73) target = $region20
      $region19: #{resblock_down.3} parent=15 // pred_region
        %p76 = scmp.lt.s32.totalorder %s7, 1
        %s77 = scalar_select %p76, %s7, 1
        %s78 = smul.addr %s77, 32
        %s79 = smul.addr %s78, 8
        %s80 = scalar_lea.vmem %s0, %s79
      $region20: #{resblock_down.3} parent=15 // pred_fallthru
        _
    $region16: #{resblock_down.3} parent=5 // pred_fallthru
      _
    %p81 = scmp.le.s32.totalorder 1, %s7
    %p82 = scmp.lt.s32.totalorder %s7, 3
    %p83 = pnand %p81, %p82
    %p84 = pneg %p83
    // Predicated region
    $region21: #{resblock_down.3} parent=5 // pred_check
      _
    $region22: #{resblock_down.3} parent=5 // pred_check_branch
      %86 = sbr.rel (%p83) target = $region24
    $region23: #{resblock_down.3} parent=5 // pred_region
      %s87 = ssub.s32 %s7, 1
      %p88 = scmp.lt.s32.totalorder %s12, 1
      %s89 = scalar_select %p88, %s12, 1
      %s90 = smul.addr %s89, 32
      %s91 = smul.addr %s90, 8
      %s92 = scalar_lea.vmem %s0, %s91
      %p93 = pneg %p33
      %p94 = pneg %p30
      %p95 = pneg %p54
      %p96 = pneg %p51
      %p97 = scmp.lt.s32.totalorder %s12, 1
      %s98 = scalar_select %p97, %s12, 1
      %s99 = smul.addr %s98, 32
      %s100 = smul.addr %s99, 8
      %s101 = scalar_lea.vmem %s0, %s100
      %p102 = scmp.eq.s32.totalorder %s12, 0
      // Predicated region
      $region25: #{resblock_down.3} parent=23 // pred_check
        %p103 = pneg %p102
      $region26: #{resblock_down.3} parent=23 // pred_check_branch
        %105 = sbr.rel (%p103) target = $region28
      $region27: #{resblock_down.3} parent=23 // pred_region
        %vm106 = vcmask 25600
        %107 = vst.msk [vmem:[%s1] sm:$0x3] %vm106, 0.0
      $region28: #{resblock_down.3} parent=23 // pred_fallthru
        _
      %v108 = vld [vmem:[%s101] sm:$0xff]
      %v109 = vld [vmem:[%s101 + $0x8] sm:$0xff]
      %v110 = vld [vmem:[%s101 + $0x10] sm:$0xff]
      %v111 = vld [vmem:[%s101 + $0x18] sm:$0xff]
      %v112 = vld [vmem:[%s101 + $0x20] sm:$0xff]
      %v113 = vld [vmem:[%s101 + $0x28] sm:$0xff]
      %v114 = vld [vmem:[%s101 + $0x30] sm:$0xff]
      %v115 = vld [vmem:[%s101 + $0x38] sm:$0xff]
      %v116 = vld [vmem:[%s101 + $0x40] sm:$0xff]
      %v117 = vld [vmem:[%s101 + $0x48] sm:$0xff]
      %v118 = vld [vmem:[%s101 + $0x50] sm:$0xff]
      %v119 = vld [vmem:[%s101 + $0x58] sm:$0xff]
      %v120 = vld [vmem:[%s101 + $0x60] sm:$0xff]
      %v121 = vld [vmem:[%s101 + $0x68] sm:$0xff]
      %v122 = vld [vmem:[%s101 + $0x70] sm:$0xff]
      %v123 = vld [vmem:[%s101 + $0x78] sm:$0xff]
      %v124 = vld [vmem:[%s101 + $0x80] sm:$0xff]
      %v125 = vld [vmem:[%s101 + $0x88] sm:$0xff]
      %v126 = vld [vmem:[%s101 + $0x90] sm:$0xff]
      %v127 = vld [vmem:[%s101 + $0x98] sm:$0xff]
      %v128 = vld [vmem:[%s101 + $0xa0] sm:$0xff]
      %v129 = vld [vmem:[%s101 + $0xa8] sm:$0xff]
      %v130 = vld [vmem:[%s101 + $0xb0] sm:$0xff]
      %v131 = vld [vmem:[%s101 + $0xb8] sm:$0xff]
      %v132 = vld [vmem:[%s101 + $0xc0] sm:$0xff]
      %v133 = vld [vmem:[%s101 + $0xc8] sm:$0xff]
      %v134 = vld [vmem:[%s101 + $0xd0] sm:$0xff]
      %v135 = vld [vmem:[%s101 + $0xd8] sm:$0xff]
      %v136 = vld [vmem:[%s101 + $0xe0] sm:$0xff]
      %v137 = vld [vmem:[%s101 + $0xe8] sm:$0xff]
      %v138 = vld [vmem:[%s101 + $0xf0] sm:$0xff]
      %v139 = vld [vmem:[%s101 + $0xf8] sm:$0xff]
      %vm140 = vcmask 31744
      %v141 = vsel %vm140, %v108, 0.0
      %v142 = vsel %vm140, %v109, 0.0
      %v143 = vadd.f32 %v141, %v142
      %v144 = vsel %vm140, %v110, 0.0
      %v145 = vadd.f32 %v143, %v144
      %v146 = vsel %vm140, %v111, 0.0
      %v147 = vadd.f32 %v145, %v146
      %v148 = vsel %vm140, %v112, 0.0
      %v149 = vadd.f32 %v147, %v148
      %v150 = vsel %vm140, %v113, 0.0
      %v151 = vadd.f32 %v149, %v150
      %v152 = vsel %vm140, %v114, 0.0
      %v153 = vadd.f32 %v151, %v152
      %v154 = vsel %vm140, %v115, 0.0
      %v155 = vadd.f32 %v153, %v154
      %v156 = vsel %vm140, %v116, 0.0
      %v157 = vadd.f32 %v155, %v156
      %v158 = vsel %vm140, %v117, 0.0
      %v159 = vadd.f32 %v157, %v158
      %v160 = vsel %vm140, %v118, 0.0
      %v161 = vadd.f32 %v159, %v160
      %v162 = vsel %vm140, %v119, 0.0
      %v163 = vadd.f32 %v161, %v162
      %v164 = vsel %vm140, %v120, 0.0
      %v165 = vadd.f32 %v163, %v164
      %v166 = vsel %vm140, %v121, 0.0
      %v167 = vadd.f32 %v165, %v166
      %v168 = vsel %vm140, %v122, 0.0
      %v169 = vadd.f32 %v167, %v168
      %v170 = vsel %vm140, %v123, 0.0
      %v171 = vadd.f32 %v169, %v170
      %v172 = vsel %vm140, %v124, 0.0
      %v173 = vadd.f32 %v171, %v172
      %v174 = vsel %vm140, %v125, 0.0
      %v175 = vadd.f32 %v173, %v174
      %v176 = vsel %vm140, %v126, 0.0
      %v177 = vadd.f32 %v175, %v176
      %v178 = vsel %vm140, %v127, 0.0
      %v179 = vadd.f32 %v177, %v178
      %v180 = vsel %vm140, %v128, 0.0
      %v181 = vadd.f32 %v179, %v180
      %v182 = vsel %vm140, %v129, 0.0
      %v183 = vadd.f32 %v181, %v182
      %v184 = vsel %vm140, %v130, 0.0
      %v185 = vadd.f32 %v183, %v184
      %v186 = vsel %vm140, %v131, 0.0
      %v187 = vadd.f32 %v185, %v186
      %v188 = vsel %vm140, %v132, 0.0
      %v189 = vadd.f32 %v187, %v188
      %v190 = vsel %vm140, %v133, 0.0
      %v191 = vadd.f32 %v189, %v190
      %v192 = vsel %vm140, %v134, 0.0
      %v193 = vadd.f32 %v191, %v192
      %v194 = vsel %vm140, %v135, 0.0
      %v195 = vadd.f32 %v193, %v194
      %v196 = vsel %vm140, %v136, 0.0
      %v197 = vadd.f32 %v195, %v196
      %v198 = vsel %vm140, %v137, 0.0
      %v199 = vadd.f32 %v197, %v198
      %v200 = vsel %vm140, %v138, 0.0
      %v201 = vadd.f32 %v199, %v200
      %v202 = vsel %vm140, %v139, 0.0
      %v203 = vadd.f32 %v201, %v202
      %v204 = vrot.slane %v203, 4
      %v205 = vadd.f32 %v203, %v204
      %v206 = vrot.slane %v205, 2
      %v207 = vadd.f32 %v205, %v206
      %v208 = vrot.slane %v207, 1
      %v209 = vadd.f32 %v207, %v208
      %v210 = vmul.f32 %v108, %v108
      %v211 = vmul.f32 %v109, %v109
      %v212 = vmul.f32 %v110, %v110
      %v213 = vmul.f32 %v111, %v111
      %v214 = vmul.f32 %v112, %v112
      %v215 = vmul.f32 %v113, %v113
      %v216 = vmul.f32 %v114, %v114
      %v217 = vmul.f32 %v115, %v115
      %v218 = vmul.f32 %v116, %v116
      %v219 = vmul.f32 %v117, %v117
      %v220 = vmul.f32 %v118, %v118
      %v221 = vmul.f32 %v119, %v119
      %v222 = vmul.f32 %v120, %v120
      %v223 = vmul.f32 %v121, %v121
      %v224 = vmul.f32 %v122, %v122
      %v225 = vmul.f32 %v123, %v123
      %v226 = vmul.f32 %v124, %v124
      %v227 = vmul.f32 %v125, %v125
      %v228 = vmul.f32 %v126, %v126
      %v229 = vmul.f32 %v127, %v127
      %v230 = vmul.f32 %v128, %v128
      %v231 = vmul.f32 %v129, %v129
      %v232 = vmul.f32 %v130, %v130
      %v233 = vmul.f32 %v131, %v131
      %v234 = vmul.f32 %v132, %v132
      %v235 = vmul.f32 %v133, %v133
      %v236 = vmul.f32 %v134, %v134
      %v237 = vmul.f32 %v135, %v135
      %v238 = vmul.f32 %v136, %v136
      %v239 = vmul.f32 %v137, %v137
      %v240 = vmul.f32 %v138, %v138
      %v241 = vmul.f32 %v139, %v139
      %v242 = vsel %vm140, %v210, 0.0
      %v243 = vsel %vm140, %v211, 0.0
      %v244 = vadd.f32 %v242, %v243
      %v245 = vsel %vm140, %v212, 0.0
      %v246 = vadd.f32 %v244, %v245
      %v247 = vsel %vm140, %v213, 0.0
      %v248 = vadd.f32 %v246, %v247
      %v249 = vsel %vm140, %v214, 0.0
      %v250 = vadd.f32 %v248, %v249
      %v251 = vsel %vm140, %v215, 0.0
      %v252 = vadd.f32 %v250, %v251
      %v253 = vsel %vm140, %v216, 0.0
      %v254 = vadd.f32 %v252, %v253
      %v255 = vsel %vm140, %v217, 0.0
      %v256 = vadd.f32 %v254, %v255
      %v257 = vsel %vm140, %v218, 0.0
      %v258 = vadd.f32 %v256, %v257
      %v259 = vsel %vm140, %v219, 0.0
      %v260 = vadd.f32 %v258, %v259
      %v261 = vsel %vm140, %v220, 0.0
      %v262 = vadd.f32 %v260, %v261
      %v263 = vsel %vm140, %v221, 0.0
      %v264 = vadd.f32 %v262, %v263
      %v265 = vsel %vm140, %v222, 0.0
      %v266 = vadd.f32 %v264, %v265
      %v267 = vsel %vm140, %v223, 0.0
      %v268 = vadd.f32 %v266, %v267
      %v269 = vsel %vm140, %v224, 0.0
      %v270 = vadd.f32 %v268, %v269
      %v271 = vsel %vm140, %v225, 0.0
      %v272 = vadd.f32 %v270, %v271
      %v273 = vsel %vm140, %v226, 0.0
      %v274 = vadd.f32 %v272, %v273
      %v275 = vsel %vm140, %v227, 0.0
      %v276 = vadd.f32 %v274, %v275
      %v277 = vsel %vm140, %v228, 0.0
      %v278 = vadd.f32 %v276, %v277
      %v279 = vsel %vm140, %v229, 0.0
      %v280 = vadd.f32 %v278, %v279
      %v281 = vsel %vm140, %v230, 0.0
      %v282 = vadd.f32 %v280, %v281
      %v283 = vsel %vm140, %v231, 0.0
      %v284 = vadd.f32 %v282, %v283
      %v285 = vsel %vm140, %v232, 0.0
      %v286 = vadd.f32 %v284, %v285
      %v287 = vsel %vm140, %v233, 0.0
      %v288 = vadd.f32 %v286, %v287
      %v289 = vsel %vm140, %v234, 0.0
      %v290 = vadd.f32 %v288, %v289
      %v291 = vsel %vm140, %v235, 0.0
      %v292 = vadd.f32 %v290, %v291
      %v293 = vsel %vm140, %v236, 0.0
      %v294 = vadd.f32 %v292, %v293
      %v295 = vsel %vm140, %v237, 0.0
      %v296 = vadd.f32 %v294, %v295
      %v297 = vsel %vm140, %v238, 0.0
      %v298 = vadd.f32 %v296, %v297
      %v299 = vsel %vm140, %v239, 0.0
      %v300 = vadd.f32 %v298, %v299
      %v301 = vsel %vm140, %v240, 0.0
      %v302 = vadd.f32 %v300, %v301
      %v303 = vsel %vm140, %v241, 0.0
      %v304 = vadd.f32 %v302, %v303
      %v305 = vrot.slane %v304, 4
      %v306 = vadd.f32 %v304, %v305
      %v307 = vrot.slane %v306, 2
      %v308 = vadd.f32 %v306, %v307
      %v309 = vrot.slane %v308, 1
      %v310 = vadd.f32 %v308, %v309
      %v311 = vld [vmem:[%s1] sm:$0x3]
      %vm312 = vcmask 1040384
      %v313 = vsel %vm312, %v209, %v310
      %v314 = vadd.f32 %v311, %v313
      %vm315 = vcmask 25600
      %316 = vst.msk [vmem:[%s1] sm:$0x3] %vm315, %v314
      // Predicated region
      $region29: #{resblock_down.3} parent=23 // pred_check
        %p317 = pneg %p51
      $region30: #{resblock_down.3} parent=23 // pred_check_branch
        %319 = sbr.rel (%p317) target = $region32
      $region31: #{resblock_down.3} parent=23 // pred_region
        _
      $region32: #{resblock_down.3} parent=23 // pred_fallthru
        _
      // Predicated region
      $region33: #{resblock_down.3} parent=23 // pred_check
        %p320 = pneg %p51
      $region34: #{resblock_down.3} parent=23 // pred_check_branch
        %322 = sbr.rel (%p320) target = $region36
      $region35: #{resblock_down.3} parent=23 // pred_region
        _
      $region36: #{resblock_down.3} parent=23 // pred_fallthru
        _
    $region24: #{resblock_down.3} parent=5 // pred_fallthru
      _
    %p323 = scmp.le.s32.totalorder 2, %s7
    // Predicated region
    $region37: #{resblock_down.3} parent=5 // pred_check
      %p324 = pneg %p323
    $region38: #{resblock_down.3} parent=5 // pred_check_branch
      %326 = sbr.rel (%p324) target = $region40
    $region39: #{resblock_down.3} parent=5 // pred_region
      %s327 = ssub.s32 %s7, 2
    $region40: #{resblock_down.3} parent=5 // pred_fallthru
      _
  $region6: #{resblock_down.3} parent=0 // loop_footer
    %s11 = sadd.s32 1, %s7
  $region7: #{resblock_down.3} parent=0 // loop_footer_branch
    %6 = sbr.rel target = $region3
  $region8: #{resblock_down.3} parent=0 // loop_exit
    _

// kernel: resblock_down.4
$region0: #{resblock_down.4}
  #allocation0 [shape = 'u32[]', space=smem, size = 0x4, offset = 0x4, fixed_abs, tag = 'smem constant byte address 0x4 - core index']
  #allocation1 [shape = 'u32[144,128]{1,0:T(1,128)}', space=vmem, size = 0x12000, scoped, tag = 'internal scratch']
  %s0 = inlined_call_operand.vmem [shape: bf16[2,4,9,9,128], index: 0, kind: input, shape index: {}]
  %s1 = inlined_call_operand.vmem [shape: f32[2,128], index: 1, kind: input, shape index: {}]
  %s2 = inlined_call_operand.vmem [shape: bf16[9,128,128], index: 2, kind: input, shape index: {}]
  %s3 = inlined_call_operand.vmem [shape: bf16[2,8,8,128], index: 3, kind: output, shape index: {0}]
  %s4 = inlined_call_operand.vmem [shape: f32[2,1,2,128], index: 4, kind: output, shape index: {1}]
  %5 = xla_tuple %s3, %s4
  %s6 = sld [smem:[#allocation0]]
  $region53: #{resblock_down.4} parent=0
    _
  %s8 = ssub.s32 1, %s6
  %s9 = scalar_select 0, %s8, %s6
  loop: start=0, step=1, limit=4
  $region2: #{resblock_down.4} parent=0 // loop_pre_header
    _
  $region3: #{resblock_down.4} parent=0 // loop_header
    %s11 = sphi 0, %s15
    %p12 = scmp.ge.s32.totalorder %s11, 4
    %s18 = sphi 0, %s30
    %s19 = sphi 0, %s26
    %s20 = sphi 0, %s18
    %s21 = sphi 0, %s19
    %s22 = sphi 0, %s20
    %s23 = sphi 0, %s21
    %s35 = sphi 0, %s37
    %s38 = sphi 0, %s35
    %s39 = sphi 0, %s38
    %s55 = sphi 0, %s39
    %s59 = sphi 0, %s59
    %s61 = sphi 0, %s59
    %s62 = sphi 0, %s61
    %s76 = sphi 0, %s62
    %s80 = sphi 0, %s80
    %s82 = sphi 0, %s80
    %s83 = sphi 0, %s82
    %s97 = sphi 0, %s83
    %s105 = sphi 0, %s107
    %s108 = sphi 0, %s105
    %s109 = sphi 0, %s108
    %s125 = sphi 0, %s109
    %s133 = sphi 0, %s135
    %s136 = sphi 0, %s133
    %s137 = sphi 0, %s136
    %s153 = sphi 0, %s137
  $region4: #{resblock_down.4} parent=0 // loop_header_branch
    %14 = sbr.rel (%p12) target = $region8
  $region5: #{resblock_down.4} parent=0 // loop_body
    %s16 = ssub.s32 %s11, 1
    %s17 = ssub.s32 %s11, 2
    %s24 = sadd.s32 1, %s19
    %p25 = scmp.ge.s32.totalorder %s24, 1
    %s26 = scalar_select %p25, 0, %s24
    %s27 = sadd.s32 1, %s18
    %s28 = scalar_select %p25, %s27, %s18
    %p29 = scmp.ge.s32.totalorder %s28, 2
    %s30 = scalar_select %p29, 0, %s28
    %s31 = sadd.s32 %s18, %s19
    %s32 = sadd.s32 %s30, %s26
    %s33 = ssub.s32 %s31, %s32
    %p34 = scmp.eq.s32.totalorder %s33, 0
    %s36 = sadd.s32 %s35, 1
    %s37 = scalar_select %p34, %s35, %s36
    %p40 = pneg %p34
    %p41 = scmp.eq.s32.totalorder %s11, 1
    %p42 = por %p40, %p41
    %p43 = scmp.ne.s32.totalorder %s35, %s38
    %p44 = scmp.eq.s32.totalorder %s11, 0
    %p45 = por %p43, %p44
    %p46 = scmp.ne.s32.totalorder %s35, %s38
    %p47 = scmp.eq.s32.totalorder %s16, 1
    %p48 = por %p46, %p47
    %p49 = scmp.ne.s32.totalorder %s38, %s39
    %p50 = scmp.eq.s32.totalorder %s16, 0
    %p51 = por %p49, %p50
    %p52 = scmp.ne.s32.totalorder %s38, %s39
    %p53 = scmp.eq.s32.totalorder %s17, 1
    %p54 = por %p52, %p53
    %p56 = scmp.ne.s32.totalorder %s39, %s55
    %p57 = scmp.eq.s32.totalorder %s17, 0
    %p58 = por %p56, %p57
    %s60 = sadd.s32 %s59, 1
    %p63 = scmp.eq.s32.totalorder %s11, 1
    %p64 = scmp.ne.s32.totalorder %s59, %s61
    %p65 = scmp.eq.s32.totalorder %s11, 0
    %p66 = por %p64, %p65
    %p67 = scmp.ne.s32.totalorder %s59, %s61
    %p68 = scmp.eq.s32.totalorder %s16, 1
    %p69 = por %p67, %p68
    %p70 = scmp.ne.s32.totalorder %s61, %s62
    %p71 = scmp.eq.s32.totalorder %s16, 0
    %p72 = por %p70, %p71
    %p73 = scmp.ne.s32.totalorder %s61, %s62
    %p74 = scmp.eq.s32.totalorder %s17, 1
    %p75 = por %p73, %p74
    %p77 = scmp.ne.s32.totalorder %s62, %s76
    %p78 = scmp.eq.s32.totalorder %s17, 0
    %p79 = por %p77, %p78
    %s81 = sadd.s32 %s80, 1
    %p84 = scmp.eq.s32.totalorder %s11, 1
    %p85 = scmp.ne.s32.totalorder %s80, %s82
    %p86 = scmp.eq.s32.totalorder %s11, 0
    %p87 = por %p85, %p86
    %p88 = scmp.ne.s32.totalorder %s80, %s82
    %p89 = scmp.eq.s32.totalorder %s16, 1
    %p90 = por %p88, %p89
    %p91 = scmp.ne.s32.totalorder %s82, %s83
    %p92 = scmp.eq.s32.totalorder %s16, 0
    %p93 = por %p91, %p92
    %p94 = scmp.ne.s32.totalorder %s82, %s83
    %p95 = scmp.eq.s32.totalorder %s17, 1
    %p96 = por %p94, %p95
    %p98 = scmp.ne.s32.totalorder %s83, %s97
    %p99 = scmp.eq.s32.totalorder %s17, 0
    %p100 = por %p98, %p99
    %s101 = ssub.s32 %s18, %s30
    %s102 = ssub.s32 %s19, %s26
    %s103 = sor.u32 %s101, %s102
    %p104 = scmp.eq.s32.totalorder %s103, 0
    %s106 = sadd.s32 %s105, 1
    %s107 = scalar_select %p104, %s105, %s106
    %p110 = pneg %p104
    %p111 = scmp.eq.s32.totalorder %s11, 1
    %p112 = por %p110, %p111
    %p113 = scmp.ne.s32.totalorder %s105, %s108
    %p114 = scmp.eq.s32.totalorder %s11, 0
    %p115 = por %p113, %p114
    %p116 = scmp.ne.s32.totalorder %s105, %s108
    %p117 = scmp.eq.s32.totalorder %s16, 1
    %p118 = por %p116, %p117
    %p119 = scmp.ne.s32.totalorder %s108, %s109
    %p120 = scmp.eq.s32.totalorder %s16, 0
    %p121 = por %p119, %p120
    %p122 = scmp.ne.s32.totalorder %s108, %s109
    %p123 = scmp.eq.s32.totalorder %s17, 1
    %p124 = por %p122, %p123
    %p126 = scmp.ne.s32.totalorder %s109, %s125
    %p127 = scmp.eq.s32.totalorder %s17, 0
    %p128 = por %p126, %p127
    %s129 = ssub.s32 %s18, %s30
    %s130 = ssub.s32 %s19, %s26
    %s131 = sor.u32 %s129, %s130
    %p132 = scmp.eq.s32.totalorder %s131, 0
    %s134 = sadd.s32 %s133, 1
    %s135 = scalar_select %p132, %s133, %s134
    %p138 = pneg %p132
    %p139 = scmp.eq.s32.totalorder %s11, 1
    %p140 = por %p138, %p139
    %p141 = scmp.ne.s32.totalorder %s133, %s136
    %p142 = scmp.eq.s32.totalorder %s11, 0
    %p143 = por %p141, %p142
    %p144 = scmp.ne.s32.totalorder %s133, %s136
    %p145 = scmp.eq.s32.totalorder %s16, 1
    %p146 = por %p144, %p145
    %p147 = scmp.ne.s32.totalorder %s136, %s137
    %p148 = scmp.eq.s32.totalorder %s16, 0
    %p149 = por %p147, %p148
    %p150 = scmp.ne.s32.totalorder %s136, %s137
    %p151 = scmp.eq.s32.totalorder %s17, 1
    %p152 = por %p150, %p151
    %p154 = scmp.ne.s32.totalorder %s137, %s153
    %p155 = scmp.eq.s32.totalorder %s17, 0
    %p156 = por %p154, %p155
    %p157 = scmp.le.s32.totalorder 1, %s11
    %p158 = scmp.lt.s32.totalorder %s11, 3
    %p159 = pnand %p157, %p158
    %p160 = pneg %p159
    // Predicated region
    $region9: #{resblock_down.4} parent=5 // pred_check
      _
    $region10: #{resblock_down.4} parent=5 // pred_check_branch
      %162 = sbr.rel (%p159) target = $region12
    $region11: #{resblock_down.4} parent=5 // pred_region
      %s163 = ssub.s32 %s11, 1
      // Predicated region
      $region13: #{resblock_down.4} parent=11 // pred_check
        %p164 = pneg %p72
      $region14: #{resblock_down.4} parent=11 // pred_check_branch
        %166 = sbr.rel (%p164) target = $region16
      $region15: #{resblock_down.4} parent=11 // pred_region
        _
      $region16: #{resblock_down.4} parent=11 // pred_fallthru
        _
      // Predicated region
      $region17: #{resblock_down.4} parent=11 // pred_check
        %p167 = pneg %p93
      $region18: #{resblock_down.4} parent=11 // pred_check_branch
        %169 = sbr.rel (%p167) target = $region20
      $region19: #{resblock_down.4} parent=11 // pred_region
        _
      $region20: #{resblock_down.4} parent=11 // pred_fallthru
        _
    $region12: #{resblock_down.4} parent=5 // pred_fallthru
      _
    %p170 = scmp.lt.s32.totalorder %s11, 2
    // Predicated region
    $region21: #{resblock_down.4} parent=5 // pred_check
      %p171 = pneg %p170
    $region22: #{resblock_down.4} parent=5 // pred_check_branch
      %173 = sbr.rel (%p171) target = $region24
    $region23: #{resblock_down.4} parent=5 // pred_region
      // Predicated region
      $region25: #{resblock_down.4} parent=23 // pred_check
        %p174 = pneg %p45
      $region26: #{resblock_down.4} parent=23 // pred_check_branch
        %176 = sbr.rel (%p174) target = $region28
      $region27: #{resblock_down.4} parent=23 // pred_region
        %s177 = sadd.s32 %s18, %s19
        %p178 = scmp.lt.s32.totalorder %s177, 1
        %s179 = scalar_select %p178, %s177, 1
        %s180 = smul.addr %s179, 72
        %s181 = smul.addr %s180, 4
        %s182 = scalar_lea.vmem %s0, %s181
        %s183 = sadd.s32 %s18, %s19
      $region28: #{resblock_down.4} parent=23 // pred_fallthru
        _
    $region24: #{resblock_down.4} parent=5 // pred_fallthru
      _
    %p184 = scmp.le.s32.totalorder 1, %s11
    %p185 = scmp.lt.s32.totalorder %s11, 3
    %p186 = pnand %p184, %p185
    %p187 = pneg %p186
    // Predicated region
    $region29: #{resblock_down.4} parent=5 // pred_check
      _
    $region30: #{resblock_down.4} parent=5 // pred_check_branch
      %189 = sbr.rel (%p186) target = $region32
    $region31: #{resblock_down.4} parent=5 // pred_region
      %s190 = ssub.s32 %s11, 1
      %s191 = sadd.s32 %s20, %s21
      %p192 = scmp.lt.s32.totalorder %s191, 1
      %s193 = scalar_select %p192, %s191, 1
      %s194 = smul.addr %s193, 72
      %s195 = smul.addr %s194, 4
      %s196 = scalar_lea.vmem %s0, %s195
      %p197 = pneg %p51
      %p198 = pneg %p48
      %p199 = pneg %p72
      %p200 = pneg %p69
      %p201 = pneg %p93
      %p202 = pneg %p90
      %p203 = pneg %p121
      %p204 = pneg %p118
      %s205 = smul.u32 8, %s21
      %p206 = scmp.lt.s32.totalorder %s20, 1
      %s207 = scalar_select %p206, %s20, 1
      %p208 = scmp.lt.s32.totalorder %s205, 7
      %s209 = scalar_select %p208, %s205, 7
      %s210 = smul.addr %s207, 8
      %s211 = sadd.s32 %s209, %s210
      %s212 = smul.addr %s211, 4
      %s213 = scalar_lea.vmem %s3, %s212
      %p214 = pneg %p149
      %p215 = pneg %p146
      %p216 = scmp.lt.s32.totalorder %s20, 1
      %s217 = scalar_select %p216, %s20, 1
      %p218 = scmp.lt.s32.totalorder %s21, 0
      %s219 = scalar_select %p218, %s21, 0
      %s220 = sadd.s32 %s219, %s217
      %s221 = smul.addr %s220, 2
      %s222 = scalar_lea.vmem %s4, %s221
      %s223 = sadd.s32 %s20, %s21
      %p224 = scmp.lt.s32.totalorder %s223, 1
      %s225 = scalar_select %p224, %s223, 1
      %s226 = smul.addr %s225, 72
      %s227 = smul.addr %s226, 4
      %s228 = scalar_lea.vmem %s0, %s227
      %s229 = sadd.s32 %s20, %s21
      %s230 = smul.u32 8, %s21
      %p231 = scmp.lt.s32.totalorder %s20, 1
      %s232 = scalar_select %p231, %s20, 1
      %p233 = scmp.lt.s32.totalorder %s230, 7
      %s234 = scalar_select %p233, %s230, 7
      %s235 = smul.addr %s232, 8
      %s236 = sadd.s32 %s234, %s235
      %s237 = smul.addr %s236, 4
      %s238 = scalar_lea.vmem %s3, %s237
      %s239 = smul.u32 8, %s21
      %p240 = scmp.lt.s32.totalorder %s20, 1
      %s241 = scalar_select %p240, %s20, 1
      %p242 = scmp.lt.s32.totalorder %s21, 0
      %s243 = scalar_select %p242, %s21, 0
      %s244 = sadd.s32 %s243, %s241
      %s245 = smul.addr %s244, 2
      %s246 = scalar_lea.vmem %s4, %s245
      %v248 = vld [vmem:[%s1] sm:$0x3]
      %s249 = smul.u32 %s21, 8
      %v250 = vstv %s249
      %v251 = vadd.s32 %v250, 1
      %v252 = vadd.s32 %v250, 2
      %v253 = vadd.s32 %v250, 3
      %v254 = vadd.s32 %v250, 4
      %v255 = vadd.s32 %v250, 5
      %v256 = vadd.s32 %v250, 6
      %v257 = vadd.s32 %v250, 7
      %v258 = vadd.s32 %v250, 8
      %v259 = vlaneseq
      %v260 = vshrl.u32 %v259, 7
      %v261 = vadd.s32 %v260, 8
      %v262 = vld [vmem:[%s228] sm:$0xf]
      %v263 = vld [vmem:[%s228 + $0x4] sm:$0x1]
      %v264 = vld [vmem:[%s228 + $0x8] sm:$0xf]
      %v265 = vld [vmem:[%s228 + $0xc] sm:$0x1]
      %v266 = vld [vmem:[%s228 + $0x10] sm:$0xf]
      %v267 = vld [vmem:[%s228 + $0x14] sm:$0x1]
      %v268 = vld [vmem:[%s228 + $0x18] sm:$0xf]
      %v269 = vld [vmem:[%s228 + $0x1c] sm:$0x1]
      %v270 = vld [vmem:[%s228 + $0x20] sm:$0xf]
      %v271 = vld [vmem:[%s228 + $0x24] sm:$0x1]
      %v272 = vld [vmem:[%s228 + $0x28] sm:$0xf]
      %v273 = vld [vmem:[%s228 + $0x2c] sm:$0x1]
      %v274 = vld [vmem:[%s228 + $0x30] sm:$0xf]
      %v275 = vld [vmem:[%s228 + $0x34] sm:$0x1]
      %v276 = vld [vmem:[%s228 + $0x38] sm:$0xf]
      %v277 = vld [vmem:[%s228 + $0x3c] sm:$0x1]
      %v278 = vld [vmem:[%s228 + $0x40] sm:$0xf]
      %v279 = vld [vmem:[%s228 + $0x44] sm:$0x1]
      %v280 = vunpack.c.l.bf16 %v262
      %v281 = vunpack.c.l.bf16 %v263
      %v282 = vunpack.c.l.bf16 %v264
      %v283 = vunpack.c.l.bf16 %v265
      %v284 = vunpack.c.l.bf16 %v266
      %v285 = vunpack.c.l.bf16 %v267
      %v286 = vunpack.c.l.bf16 %v268
      %v287 = vunpack.c.l.bf16 %v269
      %v288 = vunpack.c.l.bf16 %v270
      %v289 = vunpack.c.l.bf16 %v271
      %v290 = vunpack.c.l.bf16 %v272
      %v291 = vunpack.c.l.bf16 %v273
      %v292 = vunpack.c.l.bf16 %v274
      %v293 = vunpack.c.l.bf16 %v275
      %v294 = vunpack.c.l.bf16 %v276
      %v295 = vunpack.c.l.bf16 %v277
      %v296 = vunpack.c.l.bf16 %v278
      %v297 = vunpack.c.l.bf16 %v279
      %v298 = vlaneseq
      %v299 = vshrl.u32 %v298, 7
      %v300 = vsub.s32 0, %v299
      %v301 = vrot.slane %v248, %v300
      %v302 = vmul.f32 %v280, %v301
      %v303 = vmul.f32 %v281, %v301
      %v304 = vmul.f32 %v282, %v301
      %v305 = vmul.f32 %v283, %v301
      %v306 = vmul.f32 %v284, %v301
      %v307 = vmul.f32 %v285, %v301
      %v308 = vmul.f32 %v286, %v301
      %v309 = vmul.f32 %v287, %v301
      %v310 = vmul.f32 %v288, %v301
      %v311 = vmul.f32 %v289, %v301
      %v312 = vmul.f32 %v290, %v301
      %v313 = vmul.f32 %v291, %v301
      %v314 = vmul.f32 %v292, %v301
      %v315 = vmul.f32 %v293, %v301
      %v316 = vmul.f32 %v294, %v301
      %v317 = vmul.f32 %v295, %v301
      %v318 = vmul.f32 %v296, %v301
      %v319 = vmul.f32 %v297, %v301
      %v320 = vlaneseq
      %v321 = vshrl.u32 %v320, 7
      %v322 = vsub.s32 1, %v321
      %v323 = vrot.slane %v248, %v322
      %v324 = vadd.f32 %v302, %v323
      %v325 = vadd.f32 %v303, %v323
      %v326 = vadd.f32 %v304, %v323
      %v327 = vadd.f32 %v305, %v323
      %v328 = vadd.f32 %v306, %v323
      %v329 = vadd.f32 %v307, %v323
      %v330 = vadd.f32 %v308, %v323
      %v331 = vadd.f32 %v309, %v323
      %v332 = vadd.f32 %v310, %v323
      %v333 = vadd.f32 %v311, %v323
      %v334 = vadd.f32 %v312, %v323
      %v335 = vadd.f32 %v313, %v323
      %v336 = vadd.f32 %v314, %v323
      %v337 = vadd.f32 %v315, %v323
      %v338 = vadd.f32 %v316, %v323
      %v339 = vadd.f32 %v317, %v323
      %v340 = vadd.f32 %v318, %v323
      %v341 = vadd.f32 %v319, %v323
      %v342 = vmax.f32 %v324, 0.0
      %v343 = vmax.f32 %v325, 0.0
      %v344 = vmax.f32 %v326, 0.0
      %v345 = vmax.f32 %v327, 0.0
      %v346 = vmax.f32 %v328, 0.0
      %v347 = vmax.f32 %v329, 0.0
      %v348 = vmax.f32 %v330, 0.0
      %v349 = vmax.f32 %v331, 0.0
      %v350 = vmax.f32 %v332, 0.0
      %v351 = vmax.f32 %v333, 0.0
      %v352 = vmax.f32 %v334, 0.0
      %v353 = vmax.f32 %v335, 0.0
      %v354 = vmax.f32 %v336, 0.0
      %v355 = vmax.f32 %v337, 0.0
      %v356 = vmax.f32 %v338, 0.0
      %v357 = vmax.f32 %v339, 0.0
      %v358 = vmax.f32 %v340, 0.0
      %v359 = vmax.f32 %v341, 0.0
      %vm360 = vcmp.ne.s32.totalorder %v250, 0
      %vm361 = vcmp.ne.s32.totalorder %v251, 0
      %vm362 = vcmp.ne.s32.totalorder %v252, 0
      %vm363 = vcmp.ne.s32.totalorder %v253, 0
      %vm364 = vcmp.ne.s32.totalorder %v254, 0
      %vm365 = vcmp.ne.s32.totalorder %v255, 0
      %vm366 = vcmp.ne.s32.totalorder %v256, 0
      %vm367 = vcmp.ne.s32.totalorder %v257, 0
      %vm368 = vcmp.ne.s32.totalorder %v258, 0
      %vm369 = vcmp.ne.s32.totalorder %v260, 0
      %vm370 = vcmp.ne.s32.totalorder %v261, 0
      %vm371 = vmand %vm360, %vm369
      %vm372 = vmand %vm360, %vm370
      %vm373 = vmand %vm361, %vm369
      %vm374 = vmand %vm361, %vm370
      %vm375 = vmand %vm362, %vm369
      %vm376 = vmand %vm362, %vm370
      %vm377 = vmand %vm363, %vm369
      %vm378 = vmand %vm363, %vm370
      %vm379 = vmand %vm364, %vm369
      %vm380 = vmand %vm364, %vm370
      %vm381 = vmand %vm365, %vm369
      %vm382 = vmand %vm365, %vm370
      %vm383 = vmand %vm366, %vm369
      %vm384 = vmand %vm366, %vm370
      %vm385 = vmand %vm367, %vm369
      %vm386 = vmand %vm367, %vm370
      %vm387 = vmand %vm368, %vm369
      %vm388 = vmand %vm368, %vm370
      %v389 = vsel %vm371, 1, 0
      %v390 = vsel %vm372, 1, 0
      %v391 = vsel %vm373, 1, 0
      %v392 = vsel %vm374, 1, 0
      %v393 = vsel %vm375, 1, 0
      %v394 = vsel %vm376, 1, 0
      %v395 = vsel %vm377, 1, 0
      %v396 = vsel %vm378, 1, 0
      %v397 = vsel %vm379, 1, 0
      %v398 = vsel %vm380, 1, 0
      %v399 = vsel %vm381, 1, 0
      %v400 = vsel %vm382, 1, 0
      %v401 = vsel %vm383, 1, 0
      %v402 = vsel %vm384, 1, 0
      %v403 = vsel %vm385, 1, 0
      %v404 = vsel %vm386, 1, 0
      %v405 = vsel %vm387, 1, 0
      %v406 = vsel %vm388, 1, 0
      %vm407 = vcmp.eq.s32.totalorder %v389, 1
      %vm408 = vcmp.eq.s32.totalorder %v390, 1
      %vm409 = vcmp.eq.s32.totalorder %v391, 1
      %vm410 = vcmp.eq.s32.totalorder %v392, 1
      %vm411 = vcmp.eq.s32.totalorder %v393, 1
      %vm412 = vcmp.eq.s32.totalorder %v394, 1
      %vm413 = vcmp.eq.s32.totalorder %v395, 1
      %vm414 = vcmp.eq.s32.totalorder %v396, 1
      %vm415 = vcmp.eq.s32.totalorder %v397, 1
      %vm416 = vcmp.eq.s32.totalorder %v398, 1
      %vm417 = vcmp.eq.s32.totalorder %v399, 1
      %vm418 = vcmp.eq.s32.totalorder %v400, 1
      %vm419 = vcmp.eq.s32.totalorder %v401, 1
      %vm420 = vcmp.eq.s32.totalorder %v402, 1
      %vm421 = vcmp.eq.s32.totalorder %v403, 1
      %vm422 = vcmp.eq.s32.totalorder %v404, 1
      %vm423 = vcmp.eq.s32.totalorder %v405, 1
      %vm424 = vcmp.eq.s32.totalorder %v406, 1
      %v425 = vsel %vm407, %v342, 0.0
      %v426 = vsel %vm408, %v343, 0.0
      %v427 = vsel %vm409, %v344, 0.0
      %v428 = vsel %vm410, %v345, 0.0
      %v429 = vsel %vm411, %v346, 0.0
      %v430 = vsel %vm412, %v347, 0.0
      %v431 = vsel %vm413, %v348, 0.0
      %v432 = vsel %vm414, %v349, 0.0
      %v433 = vsel %vm415, %v350, 0.0
      %v434 = vsel %vm416, %v351, 0.0
      %v435 = vsel %vm417, %v352, 0.0
      %v436 = vsel %vm418, %v353, 0.0
      %v437 = vsel %vm419, %v354, 0.0
      %v438 = vsel %vm420, %v355, 0.0
      %v439 = vsel %vm421, %v356, 0.0
      %v440 = vsel %vm422, %v357, 0.0
      %v441 = vsel %vm423, %v358, 0.0
      %v442 = vsel %vm424, %v359, 0.0
      %v443 = vpack.c.bf16 %v426, %v425
      %v444 = vpack.c.bf16 %v428, %v427
      %v445 = vpack.c.bf16 %v430, %v429
      %v446 = vpack.c.bf16 %v432, %v431
      %v447 = vpack.c.bf16 %v434, %v433
      %v448 = vpack.c.bf16 %v436, %v435
      %v449 = vpack.c.bf16 %v438, %v437
      %v450 = vpack.c.bf16 %v440, %v439
      %v451 = vpack.c.bf16 %v442, %v441
      %s452 = scalar_lea.vmem %s228, 72
      %v453 = vld [vmem:[%s452] sm:$0xf]
      %v454 = vld [vmem:[%s452 + $0x4] sm:$0x1]
      %v455 = vld [vmem:[%s452 + $0x8] sm:$0xf]
      %v456 = vld [vmem:[%s452 + $0xc] sm:$0x1]
      %v457 = vld [vmem:[%s452 + $0x10] sm:$0xf]
      %v458 = vld [vmem:[%s452 + $0x14] sm:$0x1]
      %v459 = vld [vmem:[%s452 + $0x18] sm:$0xf]
      %v460 = vld [vmem:[%s452 + $0x1c] sm:$0x1]
      %v461 = vld [vmem:[%s452 + $0x20] sm:$0xf]
      %v462 = vld [vmem:[%s452 + $0x24] sm:$0x1]
      %v463 = vld [vmem:[%s452 + $0x28] sm:$0xf]
      %v464 = vld [vmem:[%s452 + $0x2c] sm:$0x1]
      %v465 = vld [vmem:[%s452 + $0x30] sm:$0xf]
      %v466 = vld [vmem:[%s452 + $0x34] sm:$0x1]
      %v467 = vld [vmem:[%s452 + $0x38] sm:$0xf]
      %v468 = vld [vmem:[%s452 + $0x3c] sm:$0x1]
      %v469 = vld [vmem:[%s452 + $0x40] sm:$0xf]
      %v470 = vld [vmem:[%s452 + $0x44] sm:$0x1]
      %v471 = vunpack.c.l.bf16 %v453
      %v472 = vunpack.c.l.bf16 %v454
      %v473 = vunpack.c.l.bf16 %v455
      %v474 = vunpack.c.l.bf16 %v456
      %v475 = vunpack.c.l.bf16 %v457
      %v476 = vunpack.c.l.bf16 %v458
      %v477 = vunpack.c.l.bf16 %v459
      %v478 = vunpack.c.l.bf16 %v460
      %v479 = vunpack.c.l.bf16 %v461
      %v480 = vunpack.c.l.bf16 %v462
      %v481 = vunpack.c.l.bf16 %v463
      %v482 = vunpack.c.l.bf16 %v464
      %v483 = vunpack.c.l.bf16 %v465
      %v484 = vunpack.c.l.bf16 %v466
      %v485 = vunpack.c.l.bf16 %v467
      %v486 = vunpack.c.l.bf16 %v468
      %v487 = vunpack.c.l.bf16 %v469
      %v488 = vunpack.c.l.bf16 %v470
      %v489 = vmul.f32 %v471, %v301
      %v490 = vmul.f32 %v472, %v301
      %v491 = vmul.f32 %v473, %v301
      %v492 = vmul.f32 %v474, %v301
      %v493 = vmul.f32 %v475, %v301
      %v494 = vmul.f32 %v476, %v301
      %v495 = vmul.f32 %v477, %v301
      %v496 = vmul.f32 %v478, %v301
      %v497 = vmul.f32 %v479, %v301
      %v498 = vmul.f32 %v480, %v301
      %v499 = vmul.f32 %v481, %v301
      %v500 = vmul.f32 %v482, %v301
      %v501 = vmul.f32 %v483, %v301
      %v502 = vmul.f32 %v484, %v301
      %v503 = vmul.f32 %v485, %v301
      %v504 = vmul.f32 %v486, %v301
      %v505 = vmul.f32 %v487, %v301
      %v506 = vmul.f32 %v488, %v301
      %v507 = vadd.f32 %v489, %v323
      %v508 = vadd.f32 %v490, %v323
      %v509 = vadd.f32 %v491, %v323
      %v510 = vadd.f32 %v492, %v323
      %v511 = vadd.f32 %v493, %v323
      %v512 = vadd.f32 %v494, %v323
      %v513 = vadd.f32 %v495, %v323
      %v514 = vadd.f32 %v496, %v323
      %v515 = vadd.f32 %v497, %v323
      %v516 = vadd.f32 %v498, %v323
      %v517 = vadd.f32 %v499, %v323
      %v518 = vadd.f32 %v500, %v323
      %v519 = vadd.f32 %v501, %v323
      %v520 = vadd.f32 %v502, %v323
      %v521 = vadd.f32 %v503, %v323
      %v522 = vadd.f32 %v504, %v323
      %v523 = vadd.f32 %v505, %v323
      %v524 = vadd.f32 %v506, %v323
      %v525 = vmax.f32 %v507, 0.0
      %v526 = vmax.f32 %v508, 0.0
      %v527 = vmax.f32 %v509, 0.0
      %v528 = vmax.f32 %v510, 0.0
      %v529 = vmax.f32 %v511, 0.0
      %v530 = vmax.f32 %v512, 0.0
      %v531 = vmax.f32 %v513, 0.0
      %v532 = vmax.f32 %v514, 0.0
      %v533 = vmax.f32 %v515, 0.0
      %v534 = vmax.f32 %v516, 0.0
      %v535 = vmax.f32 %v517, 0.0
      %v536 = vmax.f32 %v518, 0.0
      %v537 = vmax.f32 %v519, 0.0
      %v538 = vmax.f32 %v520, 0.0
      %v539 = vmax.f32 %v521, 0.0
      %v540 = vmax.f32 %v522, 0.0
      %v541 = vmax.f32 %v523, 0.0
      %v542 = vmax.f32 %v524, 0.0
      %vm543 = vcmp.ne.s32.totalorder %v260, 8
      %vm544 = vcmp.ne.s32.totalorder %v261, 8
      %vm545 = vmand %vm360, %vm543
      %vm546 = vmand %vm360, %vm544
      %vm547 = vmand %vm361, %vm543
      %vm548 = vmand %vm361, %vm544
      %vm549 = vmand %vm362, %vm543
      %vm550 = vmand %vm362, %vm544
      %vm551 = vmand %vm363, %vm543
      %vm552 = vmand %vm363, %vm544
      %vm553 = vmand %vm364, %vm543
      %vm554 = vmand %vm364, %vm544
      %vm555 = vmand %vm365, %vm543
      %vm556 = vmand %vm365, %vm544
      %vm557 = vmand %vm366, %vm543
      %vm558 = vmand %vm366, %vm544
      %vm559 = vmand %vm367, %vm543
      %vm560 = vmand %vm367, %vm544
      %vm561 = vmand %vm368, %vm543
      %vm562 = vmand %vm368, %vm544
      %v563 = vsel %vm545, 1, 0
      %v564 = vsel %vm546, 1, 0
      %v565 = vsel %vm547, 1, 0
      %v566 = vsel %vm548, 1, 0
      %v567 = vsel %vm549, 1, 0
      %v568 = vsel %vm550, 1, 0
      %v569 = vsel %vm551, 1, 0
      %v570 = vsel %vm552, 1, 0
      %v571 = vsel %vm553, 1, 0
      %v572 = vsel %vm554, 1, 0
      %v573 = vsel %vm555, 1, 0
      %v574 = vsel %vm556, 1, 0
      %v575 = vsel %vm557, 1, 0
      %v576 = vsel %vm558, 1, 0
      %v577 = vsel %vm559, 1, 0
      %v578 = vsel %vm560, 1, 0
      %v579 = vsel %vm561, 1, 0
      %v580 = vsel %vm562, 1, 0
      %vm581 = vcmp.eq.s32.totalorder %v563, 1
      %vm582 = vcmp.eq.s32.totalorder %v564, 1
      %vm583 = vcmp.eq.s32.totalorder %v565, 1
      %vm584 = vcmp.eq.s32.totalorder %v566, 1
      %vm585 = vcmp.eq.s32.totalorder %v567, 1
      %vm586 = vcmp.eq.s32.totalorder %v568, 1
      %vm587 = vcmp.eq.s32.totalorder %v569, 1
      %vm588 = vcmp.eq.s32.totalorder %v570, 1
      %vm589 = vcmp.eq.s32.totalorder %v571, 1
      %vm590 = vcmp.eq.s32.totalorder %v572, 1
      %vm591 = vcmp.eq.s32.totalorder %v573, 1
      %vm592 = vcmp.eq.s32.totalorder %v574, 1
      %vm593 = vcmp.eq.s32.totalorder %v575, 1
      %vm594 = vcmp.eq.s32.totalorder %v576, 1
      %vm595 = vcmp.eq.s32.totalorder %v577, 1
      %vm596 = vcmp.eq.s32.totalorder %v578, 1
      %vm597 = vcmp.eq.s32.totalorder %v579, 1
      %vm598 = vcmp.eq.s32.totalorder %v580, 1
      %v599 = vsel %vm581, %v525, 0.0
      %v600 = vsel %vm582, %v526, 0.0
      %v601 = vsel %vm583, %v527, 0.0
      %v602 = vsel %vm584, %v528, 0.0
      %v603 = vsel %vm585, %v529, 0.0
      %v604 = vsel %vm586, %v530, 0.0
      %v605 = vsel %vm587, %v531, 0.0
      %v606 = vsel %vm588, %v532, 0.0
      %v607 = vsel %vm589, %v533, 0.0
      %v608 = vsel %vm590, %v534, 0.0
      %v609 = vsel %vm591, %v535, 0.0
      %v610 = vsel %vm592, %v536, 0.0
      %v611 = vsel %vm593, %v537, 0.0
      %v612 = vsel %vm594, %v538, 0.0
      %v613 = vsel %vm595, %v539, 0.0
      %v614 = vsel %vm596, %v540, 0.0
      %v615 = vsel %vm597, %v541, 0.0
      %v616 = vsel %vm598, %v542, 0.0
      %v617 = vpack.c.bf16 %v600, %v599
      %v618 = vpack.c.bf16 %v602, %v601
      %v619 = vpack.c.bf16 %v604, %v603
      %v620 = vpack.c.bf16 %v606, %v605
      %v621 = vpack.c.bf16 %v608, %v607
      %v622 = vpack.c.bf16 %v610, %v609
      %v623 = vpack.c.bf16 %v612, %v611
      %v624 = vpack.c.bf16 %v614, %v613
      %v625 = vpack.c.bf16 %v616, %v615
      %s626 = scalar_lea.vmem %s228, 144
      %v627 = vld [vmem:[%s626] sm:$0xf]
      %v628 = vld [vmem:[%s626 + $0x4] sm:$0x1]
      %v629 = vld [vmem:[%s626 + $0x8] sm:$0xf]
      %v630 = vld [vmem:[%s626 + $0xc] sm:$0x1]
      %v631 = vld [vmem:[%s626 + $0x10] sm:$0xf]
      %v632 = vld [vmem:[%s626 + $0x14] sm:$0x1]
      %v633 = vld [vmem:[%s626 + $0x18] sm:$0xf]
      %v634 = vld [vmem:[%s626 + $0x1c] sm:$0x1]
      %v635 = vld [vmem:[%s626 + $0x20] sm:$0xf]
      %v636 = vld [vmem:[%s626 + $0x24] sm:$0x1]
      %v637 = vld [vmem:[%s626 + $0x28] sm:$0xf]
      %v638 = vld [vmem:[%s626 + $0x2c] sm:$0x1]
      %v639 = vld [vmem:[%s626 + $0x30] sm:$0xf]
      %v640 = vld [vmem:[%s626 + $0x34] sm:$0x1]
      %v641 = vld [vmem:[%s626 + $0x38] sm:$0xf]
      %v642 = vld [vmem:[%s626 + $0x3c] sm:$0x1]
      %v643 = vunpack.c.l.bf16 %v627
      %v644 = vunpack.c.l.bf16 %v628
      %v645 = vunpack.c.l.bf16 %v629
      %v646 = vunpack.c.l.bf16 %v630
      %v647 = vunpack.c.l.bf16 %v631
      %v648 = vunpack.c.l.bf16 %v632
      %v649 = vunpack.c.l.bf16 %v633
      %v650 = vunpack.c.l.bf16 %v634
      %v651 = vunpack.c.l.bf16 %v635
      %v652 = vunpack.c.l.bf16 %v636
      %v653 = vunpack.c.l.bf16 %v637
      %v654 = vunpack.c.l.bf16 %v638
      %v655 = vunpack.c.l.bf16 %v639
      %v656 = vunpack.c.l.bf16 %v640
      %v657 = vunpack.c.l.bf16 %v641
      %v658 = vunpack.c.l.bf16 %v642
      %v659 = vmul.f32 %v643, %v301
      %v660 = vmul.f32 %v644, %v301
      %v661 = vmul.f32 %v645, %v301
      %v662 = vmul.f32 %v646, %v301
      %v663 = vmul.f32 %v647, %v301
      %v664 = vmul.f32 %v648, %v301
      %v665 = vmul.f32 %v649, %v301
      %v666 = vmul.f32 %v650, %v301
      %v667 = vmul.f32 %v651, %v301
      %v668 = vmul.f32 %v652, %v301
      %v669 = vmul.f32 %v653, %v301
      %v670 = vmul.f32 %v654, %v301
      %v671 = vmul.f32 %v655, %v301
      %v672 = vmul.f32 %v656, %v301
      %v673 = vmul.f32 %v657, %v301
      %v674 = vmul.f32 %v658, %v301
      %v675 = vadd.f32 %v659, %v323
      %v676 = vadd.f32 %v660, %v323
      %v677 = vadd.f32 %v661, %v323
      %v678 = vadd.f32 %v662, %v323
      %v679 = vadd.f32 %v663, %v323
      %v680 = vadd.f32 %v664, %v323
      %v681 = vadd.f32 %v665, %v323
      %v682 = vadd.f32 %v666, %v323
      %v683 = vadd.f32 %v667, %v323
      %v684 = vadd.f32 %v668, %v323
      %v685 = vadd.f32 %v669, %v323
      %v686 = vadd.f32 %v670, %v323
      %v687 = vadd.f32 %v671, %v323
      %v688 = vadd.f32 %v672, %v323
      %v689 = vadd.f32 %v673, %v323
      %v690 = vadd.f32 %v674, %v323
      %v691 = vmax.f32 %v675, 0.0
      %v692 = vmax.f32 %v676, 0.0
      %v693 = vmax.f32 %v677, 0.0
      %v694 = vmax.f32 %v678, 0.0
      %v695 = vmax.f32 %v679, 0.0
      %v696 = vmax.f32 %v680, 0.0
      %v697 = vmax.f32 %v681, 0.0
      %v698 = vmax.f32 %v682, 0.0
      %v699 = vmax.f32 %v683, 0.0
      %v700 = vmax.f32 %v684, 0.0
      %v701 = vmax.f32 %v685, 0.0
      %v702 = vmax.f32 %v686, 0.0
      %v703 = vmax.f32 %v687, 0.0
      %v704 = vmax.f32 %v688, 0.0
      %v705 = vmax.f32 %v689, 0.0
      %v706 = vmax.f32 %v690, 0.0
      %vm707 = vcmp.ne.s32.totalorder %v250, 8
      %vm708 = vcmp.ne.s32.totalorder %v251, 8
      %vm709 = vcmp.ne.s32.totalorder %v252, 8
      %vm710 = vcmp.ne.s32.totalorder %v253, 8
      %vm711 = vcmp.ne.s32.totalorder %v254, 8
      %vm712 = vcmp.ne.s32.totalorder %v255, 8
      %vm713 = vcmp.ne.s32.totalorder %v256, 8
      %vm714 = vcmp.ne.s32.totalorder %v257, 8
      %vm715 = vmand %vm707, %vm369
      %vm716 = vmand %vm707, %vm370
      %vm717 = vmand %vm708, %vm369
      %vm718 = vmand %vm708, %vm370
      %vm719 = vmand %vm709, %vm369
      %vm720 = vmand %vm709, %vm370
      %vm721 = vmand %vm710, %vm369
      %vm722 = vmand %vm710, %vm370
      %vm723 = vmand %vm711, %vm369
      %vm724 = vmand %vm711, %vm370
      %vm725 = vmand %vm712, %vm369
      %vm726 = vmand %vm712, %vm370
      %vm727 = vmand %vm713, %vm369
      %vm728 = vmand %vm713, %vm370
      %vm729 = vmand %vm714, %vm369
      %vm730 = vmand %vm714, %vm370
      %v731 = vsel %vm715, 1, 0
      %v732 = vsel %vm716, 1, 0
      %v733 = vsel %vm717, 1, 0
      %v734 = vsel %vm718, 1, 0
      %v735 = vsel %vm719, 1, 0
      %v736 = vsel %vm720, 1, 0
      %v737 = vsel %vm721, 1, 0
      %v738 = vsel %vm722, 1, 0
      %v739 = vsel %vm723, 1, 0
      %v740 = vsel %vm724, 1, 0
      %v741 = vsel %vm725, 1, 0
      %v742 = vsel %vm726, 1, 0
      %v743 = vsel %vm727, 1, 0
      %v744 = vsel %vm728, 1, 0
      %v745 = vsel %vm729, 1, 0
      %v746 = vsel %vm730, 1, 0
      %vm747 = vcmp.eq.s32.totalorder %v731, 1
      %vm748 = vcmp.eq.s32.totalorder %v732, 1
      %vm749 = vcmp.eq.s32.totalorder %v733, 1
      %vm750 = vcmp.eq.s32.totalorder %v734, 1
      %vm751 = vcmp.eq.s32.totalorder %v735, 1
      %vm752 = vcmp.eq.s32.totalorder %v736, 1
      %vm753 = vcmp.eq.s32.totalorder %v737, 1
      %vm754 = vcmp.eq.s32.totalorder %v738, 1
      %vm755 = vcmp.eq.s32.totalorder %v739, 1
      %vm756 = vcmp.eq.s32.totalorder %v740, 1
      %vm757 = vcmp.eq.s32.totalorder %v741, 1
      %vm758 = vcmp.eq.s32.totalorder %v742, 1
      %vm759 = vcmp.eq.s32.totalorder %v743, 1
      %vm760 = vcmp.eq.s32.totalorder %v744, 1
      %vm761 = vcmp.eq.s32.totalorder %v745, 1
      %vm762 = vcmp.eq.s32.totalorder %v746, 1
      %v763 = vsel %vm747, %v691, 0.0
      %v764 = vsel %vm748, %v692, 0.0
      %v765 = vsel %vm749, %v693, 0.0
      %v766 = vsel %vm750, %v694, 0.0
      %v767 = vsel %vm751, %v695, 0.0
      %v768 = vsel %vm752, %v696, 0.0
      %v769 = vsel %vm753, %v697, 0.0
      %v770 = vsel %vm754, %v698, 0.0
      %v771 = vsel %vm755, %v699, 0.0
      %v772 = vsel %vm756, %v700, 0.0
      %v773 = vsel %vm757, %v701, 0.0
      %v774 = vsel %vm758, %v702, 0.0
      %v775 = vsel %vm759, %v703, 0.0
      %v776 = vsel %vm760, %v704, 0.0
      %v777 = vsel %vm761, %v705, 0.0
      %v778 = vsel %vm762, %v706, 0.0
      %v779 = vpack.c.bf16 %v764, %v763
      %v780 = vpack.c.bf16 %v766, %v765
      %v781 = vpack.c.bf16 %v768, %v767
      %v782 = vpack.c.bf16 %v770, %v769
      %v783 = vpack.c.bf16 %v772, %v771
      %v784 = vpack.c.bf16 %v774, %v773
      %v785 = vpack.c.bf16 %v776, %v775
      %v786 = vpack.c.bf16 %v778, %v777
      %s787 = scalar_lea.vmem %s228, 216
      %v788 = vld [vmem:[%s787] sm:$0xf]
      %v789 = vld [vmem:[%s787 + $0x4] sm:$0x1]
      %v790 = vld [vmem:[%s787 + $0x8] sm:$0xf]
      %v791 = vld [vmem:[%s787 + $0xc] sm:$0x1]
      %v792 = vld [vmem:[%s787 + $0x10] sm:$0xf]
      %v793 = vld [vmem:[%s787 + $0x14] sm:$0x1]
      %v794 = vld [vmem:[%s787 + $0x18] sm:$0xf]
      %v795 = vld [vmem:[%s787 + $0x1c] sm:$0x1]
      %v796 = vld [vmem:[%s787 + $0x20] sm:$0xf]
      %v797 = vld [vmem:[%s787 + $0x24] sm:$0x1]
      %v798 = vld [vmem:[%s787 + $0x28] sm:$0xf]
      %v799 = vld [vmem:[%s787 + $0x2c] sm:$0x1]
      %v800 = vld [vmem:[%s787 + $0x30] sm:$0xf]
      %v801 = vld [vmem:[%s787 + $0x34] sm:$0x1]
      %v802 = vld [vmem:[%s787 + $0x38] sm:$0xf]
      %v803 = vld [vmem:[%s787 + $0x3c] sm:$0x1]
      %v804 = vunpack.c.l.bf16 %v788
      %v805 = vunpack.c.l.bf16 %v789
      %v806 = vunpack.c.l.bf16 %v790
      %v807 = vunpack.c.l.bf16 %v791
      %v808 = vunpack.c.l.bf16 %v792
      %v809 = vunpack.c.l.bf16 %v793
      %v810 = vunpack.c.l.bf16 %v794
      %v811 = vunpack.c.l.bf16 %v795
      %v812 = vunpack.c.l.bf16 %v796
      %v813 = vunpack.c.l.bf16 %v797
      %v814 = vunpack.c.l.bf16 %v798
      %v815 = vunpack.c.l.bf16 %v799
      %v816 = vunpack.c.l.bf16 %v800
      %v817 = vunpack.c.l.bf16 %v801
      %v818 = vunpack.c.l.bf16 %v802
      %v819 = vunpack.c.l.bf16 %v803
      %v820 = vmul.f32 %v804, %v301
      %v821 = vmul.f32 %v805, %v301
      %v822 = vmul.f32 %v806, %v301
      %v823 = vmul.f32 %v807, %v301
      %v824 = vmul.f32 %v808, %v301
      %v825 = vmul.f32 %v809, %v301
      %v826 = vmul.f32 %v810, %v301
      %v827 = vmul.f32 %v811, %v301
      %v828 = vmul.f32 %v812, %v301
      %v829 = vmul.f32 %v813, %v301
      %v830 = vmul.f32 %v814, %v301
      %v831 = vmul.f32 %v815, %v301
      %v832 = vmul.f32 %v816, %v301
      %v833 = vmul.f32 %v817, %v301
      %v834 = vmul.f32 %v818, %v301
      %v835 = vmul.f32 %v819, %v301
      %v836 = vadd.f32 %v820, %v323
      %v837 = vadd.f32 %v821, %v323
      %v838 = vadd.f32 %v822, %v323
      %v839 = vadd.f32 %v823, %v323
      %v840 = vadd.f32 %v824, %v323
      %v841 = vadd.f32 %v825, %v323
      %v842 = vadd.f32 %v826, %v323
      %v843 = vadd.f32 %v827, %v323
      %v844 = vadd.f32 %v828, %v323
      %v845 = vadd.f32 %v829, %v323
      %v846 = vadd.f32 %v830, %v323
      %v847 = vadd.f32 %v831, %v323
      %v848 = vadd.f32 %v832, %v323
      %v849 = vadd.f32 %v833, %v323
      %v850 = vadd.f32 %v834, %v323
      %v851 = vadd.f32 %v835, %v323
      %v852 = vmax.f32 %v836, 0.0
      %v853 = vmax.f32 %v837, 0.0
      %v854 = vmax.f32 %v838, 0.0
      %v855 = vmax.f32 %v839, 0.0
      %v856 = vmax.f32 %v840, 0.0
      %v857 = vmax.f32 %v841, 0.0
      %v858 = vmax.f32 %v842, 0.0
      %v859 = vmax.f32 %v843, 0.0
      %v860 = vmax.f32 %v844, 0.0
      %v861 = vmax.f32 %v845, 0.0
      %v862 = vmax.f32 %v846, 0.0
      %v863 = vmax.f32 %v847, 0.0
      %v864 = vmax.f32 %v848, 0.0
      %v865 = vmax.f32 %v849, 0.0
      %v866 = vmax.f32 %v850, 0.0
      %v867 = vmax.f32 %v851, 0.0
      %vm868 = vmand %vm707, %vm543
      %vm869 = vmand %vm707, %vm544
      %vm870 = vmand %vm708, %vm543
      %vm871 = vmand %vm708, %vm544
      %vm872 = vmand %vm709, %vm543
      %vm873 = vmand %vm709, %vm544
      %vm874 = vmand %vm710, %vm543
      %vm875 = vmand %vm710, %vm544
      %vm876 = vmand %vm711, %vm543
      %vm877 = vmand %vm711, %vm544
      %vm878 = vmand %vm712, %vm543
      %vm879 = vmand %vm712, %vm544
      %vm880 = vmand %vm713, %vm543
      %vm881 = vmand %vm713, %vm544
      %vm882 = vmand %vm714, %vm543
      %vm883 = vmand %vm714, %vm544
      %v884 = vsel %vm868, 1, 0
      %v885 = vsel %vm869, 1, 0
      %v886 = vsel %vm870, 1, 0
      %v887 = vsel %vm871, 1, 0
      %v888 = vsel %vm872, 1, 0
      %v889 = vsel %vm873, 1, 0
      %v890 = vsel %vm874, 1, 0
      %v891 = vsel %vm875, 1, 0
      %v892 = vsel %vm876, 1, 0
      %v893 = vsel %vm877, 1, 0
      %v894 = vsel %vm878, 1, 0
      %v895 = vsel %vm879, 1, 0
      %v896 = vsel %vm880, 1, 0
      %v897 = vsel %vm881, 1, 0
      %v898 = vsel %vm882, 1, 0
      %v899 = vsel %vm883, 1, 0
      %vm900 = vcmp.eq.s32.totalorder %v884, 1
      %vm901 = vcmp.eq.s32.totalorder %v885, 1
      %vm902 = vcmp.eq.s32.totalorder %v886, 1
      %vm903 = vcmp.eq.s32.totalorder %v887, 1
      %vm904 = vcmp.eq.s32.totalorder %v888, 1
      %vm905 = vcmp.eq.s32.totalorder %v889, 1
      %vm906 = vcmp.eq.s32.totalorder %v890, 1
      %vm907 = vcmp.eq.s32.totalorder %v891, 1
      %vm908 = vcmp.eq.s32.totalorder %v892, 1
      %vm909 = vcmp.eq.s32.totalorder %v893, 1
      %vm910 = vcmp.eq.s32.totalorder %v894, 1
      %vm911 = vcmp.eq.s32.totalorder %v895, 1
      %vm912 = vcmp.eq.s32.totalorder %v896, 1
      %vm913 = vcmp.eq.s32.totalorder %v897, 1
      %vm914 = vcmp.eq.s32.totalorder %v898, 1
      %vm915 = vcmp.eq.s32.totalorder %v899, 1
      %v916 = vsel %vm900, %v852, 0.0
      %v917 = vsel %vm901, %v853, 0.0
      %v918 = vsel %vm902, %v854, 0.0
      %v919 = vsel %vm903, %v855, 0.0
      %v920 = vsel %vm904, %v856, 0.0
      %v921 = vsel %vm905, %v857, 0.0
      %v922 = vsel %vm906, %v858, 0.0
      %v923 = vsel %vm907, %v859, 0.0
      %v924 = vsel %vm908, %v860, 0.0
      %v925 = vsel %vm909, %v861, 0.0
      %v926 = vsel %vm910, %v862, 0.0
      %v927 = vsel %vm911, %v863, 0.0
      %v928 = vsel %vm912, %v864, 0.0
      %v929 = vsel %vm913, %v865, 0.0
      %v930 = vsel %vm914, %v866, 0.0
      %v931 = vsel %vm915, %v867, 0.0
      %v932 = vpack.c.bf16 %v917, %v916
      %v933 = vpack.c.bf16 %v919, %v918
      %v934 = vpack.c.bf16 %v921, %v920
      %v935 = vpack.c.bf16 %v923, %v922
      %v936 = vpack.c.bf16 %v925, %v924
      %v937 = vpack.c.bf16 %v927, %v926
      %v938 = vpack.c.bf16 %v929, %v928
      %v939 = vpack.c.bf16 %v931, %v930
      %v940 = vld [vmem:[%s2] sm:$0xf]
      %v941 = vld [vmem:[%s2 + $0x4] sm:$0xf]
      %v942 = vld [vmem:[%s2 + $0x8] sm:$0xf]
      %v943 = vld [vmem:[%s2 + $0xc] sm:$0xf]
      %v944 = vld [vmem:[%s2 + $0x10] sm:$0xf]
      %v945 = vld [vmem:[%s2 + $0x14] sm:$0xf]
      %v946 = vld [vmem:[%s2 + $0x18] sm:$0xf]
      %v947 = vld [vmem:[%s2 + $0x1c] sm:$0xf]
      %v948 = vld [vmem:[%s2 + $0x20] sm:$0xf]
      %v949 = vld [vmem:[%s2 + $0x24] sm:$0xf]
      %v950 = vld [vmem:[%s2 + $0x28] sm:$0xf]
      %v951 = vld [vmem:[%s2 + $0x2c] sm:$0xf]
      %v952 = vld [vmem:[%s2 + $0x30] sm:$0xf]
      %v953 = vld [vmem:[%s2 + $0x34] sm:$0xf]
      %v954 = vld [vmem:[%s2 + $0x38] sm:$0xf]
      %v955 = vld [vmem:[%s2 + $0x3c] sm:$0xf]
      %s956 = scalar_lea.vmem %s2, 64
      %v957 = vld [vmem:[%s956] sm:$0xf]
      %v958 = vld [vmem:[%s956 + $0x4] sm:$0xf]
      %v959 = vld [vmem:[%s956 + $0x8] sm:$0xf]
      %v960 = vld [vmem:[%s956 + $0xc] sm:$0xf]
      %v961 = vld [vmem:[%s956 + $0x10] sm:$0xf]
      %v962 = vld [vmem:[%s956 + $0x14] sm:$0xf]
      %v963 = vld [vmem:[%s956 + $0x18] sm:$0xf]
      %v964 = vld [vmem:[%s956 + $0x1c] sm:$0xf]
      %v965 = vld [vmem:[%s956 + $0x20] sm:$0xf]
      %v966 = vld [vmem:[%s956 + $0x24] sm:$0xf]
      %v967 = vld [vmem:[%s956 + $0x28] sm:$0xf]
      %v968 = vld [vmem:[%s956 + $0x2c] sm:$0xf]
      %v969 = vld [vmem:[%s956 + $0x30] sm:$0xf]
      %v970 = vld [vmem:[%s956 + $0x34] sm:$0xf]
      %v971 = vld [vmem:[%s956 + $0x38] sm:$0xf]
      %v972 = vld [vmem:[%s956 + $0x3c] sm:$0xf]
      %v981 = vunpack.c.l.b16 %v617
      %v982 = vunpack.c.l.b16 %v618
      %v983 = vunpack.c.l.b16 %v619
      %v984 = vunpack.c.l.b16 %v620
      %v985 = vunpack.c.l.b16 %v621
      %v986 = vunpack.c.l.b16 %v622
      %v987 = vunpack.c.l.b16 %v623
      %v988 = vunpack.c.l.b16 %v624
      %v989 = vpack.c.b16 %v982, %v981
      %v990 = vpack.c.b16 %v984, %v983
      %v991 = vpack.c.b16 %v986, %v985
      %v992 = vpack.c.b16 %v988, %v987
      %v1013 = vunpack.c.l.b16 %v957
      %v1014 = vunpack.c.l.b16 %v958
      %v1015 = vunpack.c.l.b16 %v959
      %v1016 = vunpack.c.l.b16 %v960
      %v1017 = vunpack.c.l.b16 %v961
      %v1018 = vunpack.c.l.b16 %v962
      %v1019 = vunpack.c.l.b16 %v963
      %v1020 = vunpack.c.l.b16 %v964
      %v1021 = vunpack.c.l.b16 %v965
      %v1022 = vunpack.c.l.b16 %v966
      %v1023 = vunpack.c.l.b16 %v967
      %v1024 = vunpack.c.l.b16 %v968
      %v1025 = vunpack.c.l.b16 %v969
      %v1026 = vunpack.c.l.b16 %v970
      %v1027 = vunpack.c.l.b16 %v971
      %v1028 = vunpack.c.l.b16 %v972
      %v1029 = vpack.c.b16 %v1014, %v1013
      %v1030 = vpack.c.b16 %v1016, %v1015
      %v1031 = vpack.c.b16 %v1018, %v1017
      %v1032 = vpack.c.b16 %v1020, %v1019
      %v1033 = vpack.c.b16 %v1022, %v1021
      %v1034 = vpack.c.b16 %v1024, %v1023
      %v1035 = vpack.c.b16 %v1026, %v1025
      %v1036 = vpack.c.b16 %v1028, %v1027
      %1045 = vmatprep.subr.bf16.mxu0 0
      %1046 = vmatpush1.bf16.msra.mxu0 %v1029
      %1047 = vmatprep.subr.bf16.mxu0 0
      %1048 = vmatpush1.bf16.msra.mxu0 %v1030
      %1049 = vmatprep.subr.bf16.mxu0 0
      %1050 = vmatpush1.bf16.msra.mxu0 %v1031
      %1051 = vmatprep.subr.bf16.mxu0 0
      %1052 = vmatpush1.bf16.msra.mxu0 %v1032
      %1053 = vmatprep.subr.bf16.mxu0 0
      %1054 = vmatpush1.bf16.msra.mxu0 %v1033
      %1055 = vmatprep.subr.bf16.mxu0 0
      %1056 = vmatpush1.bf16.msra.mxu0 %v1034
      %1057 = vmatprep.subr.bf16.mxu0 0
      %1058 = vmatpush1.bf16.msra.mxu0 %v1035
      %1059 = vmatprep.subr.bf16.mxu0 0
      %1060 = vmatpush1.bf16.msra.mxu0 %v1036
      %1061 = vmatprep.subr.bf16.mxu0 0
      %1062 = vmatpush1.bf16.msra.mxu0 0
      %1063 = vmatprep.subr.bf16.mxu0 0
      %1064 = vmatpush1.bf16.msra.mxu0 0
      %1065 = vmatprep.subr.bf16.mxu0 0
      %1066 = vmatpush1.bf16.msra.mxu0 0
      %1067 = vmatprep.subr.bf16.mxu0 0
      %1068 = vmatpush1.bf16.msra.mxu0 0
      %1069 = vmatprep.subr.bf16.mxu0 0
      %1070 = vmatpush1.bf16.msra.mxu0 0
      %1071 = vmatprep.subr.bf16.mxu0 0
      %1072 = vmatpush1.bf16.msra.mxu0 0
      %1073 = vmatprep.subr.bf16.mxu0 0
      %1074 = vmatpush1.bf16.msra.mxu0 0
      %1075 = vmatprep.subr.bf16.mxu0 0
      %1076 = vmatpush1.bf16.msra.mxu0 0
      %1077 = vmatprep.mubr.bf16.mxu0 0
      %1078 = vmatmul.mubr.bf16.gmra.mrb[0].mxu0 %v989
      %v1079 = vpop.f32.mrb[0].mxu0
      %v1080 = vadd.f32 0.0, %v1079
      %v1081 = vpop.f32.mrb[0].mxu0
      %v1082 = vpop.f32.mrb[0].mxu0
      %v1083 = vadd.f32 0.0, %v1082
      %v1084 = vpop.f32.mrb[0].mxu0
      %1085 = vmatprep.mubr.bf16.mxu0 0
      %1086 = vmatmul.mubr.bf16.gmra.mrb[0].mxu0 %v990
      %v1087 = vpop.f32.mrb[0].mxu0
      %v1088 = vadd.f32 0.0, %v1087
      %v1089 = vpop.f32.mrb[0].mxu0
      %v1090 = vpop.f32.mrb[0].mxu0
      %v1091 = vadd.f32 0.0, %v1090
      %v1092 = vpop.f32.mrb[0].mxu0
      %1093 = vmatprep.mubr.bf16.mxu0 0
      %1094 = vmatmul.mubr.bf16.gmra.mrb[0].mxu0 %v991
      %v1095 = vpop.f32.mrb[0].mxu0
      %v1096 = vadd.f32 0.0, %v1095
      %v1097 = vpop.f32.mrb[0].mxu0
      %v1098 = vpop.f32.mrb[0].mxu0
      %v1099 = vadd.f32 0.0, %v1098
      %v1100 = vpop.f32.mrb[0].mxu0
      %1101 = vmatprep.mubr.bf16.mxu0 0
      %1102 = vmatmul.mubr.bf16.gmra.mrb[0].mxu0 %v992
      %v1103 = vpop.f32.mrb[0].mxu0
      %v1104 = vadd.f32 0.0, %v1103
      %v1105 = vpop.f32.mrb[0].mxu0
      %v1106 = vpop.f32.mrb[0].mxu0
      %v1107 = vadd.f32 0.0, %v1106
      %v1108 = vpop.f32.mrb[0].mxu0
      %1109 = vdwg.mxu0
      %v1118 = vunpack.c.l.b16 %v443
      %v1119 = vunpack.c.l.b16 %v444
      %v1120 = vunpack.c.l.b16 %v445
      %v1121 = vunpack.c.l.b16 %v446
      %v1122 = vunpack.c.l.b16 %v447
      %v1123 = vunpack.c.l.b16 %v448
      %v1124 = vunpack.c.l.b16 %v449
      %v1125 = vunpack.c.l.b16 %v450
      %v1126 = vpack.c.b16 %v1119, %v1118
      %v1127 = vpack.c.b16 %v1121, %v1120
      %v1128 = vpack.c.b16 %v1123, %v1122
      %v1129 = vpack.c.b16 %v1125, %v1124
      %v1150 = vunpack.c.l.b16 %v940
      %v1151 = vunpack.c.l.b16 %v941
      %v1152 = vunpack.c.l.b16 %v942
      %v1153 = vunpack.c.l.b16 %v943
      %v1154 = vunpack.c.l.b16 %v944
      %v1155 = vunpack.c.l.b16 %v945
      %v1156 = vunpack.c.l.b16 %v946
      %v1157 = vunpack.c.l.b16 %v947
      %v1158 = vunpack.c.l.b16 %v948
      %v1159 = vunpack.c.l.b16 %v949
      %v1160 = vunpack.c.l.b16 %v950
      %v1161 = vunpack.c.l.b16 %v951
      %v1162 = vunpack.c.l.b16 %v952
      %v1163 = vunpack.c.l.b16 %v953
      %v1164 = vunpack.c.l.b16 %v954
      %v1165 = vunpack.c.l.b16 %v955
      %v1166 = vpack.c.b16 %v1151, %v1150
      %v1167 = vpack.c.b16 %v1153, %v1152
      %v1168 = vpack.c.b16 %v1155, %v1154
      %v1169 = vpack.c.b16 %v1157, %v1156
      %v1170 = vpack.c.b16 %v1159, %v1158
      %v1171 = vpack.c.b16 %v1161, %v1160
      %v1172 = vpack.c.b16 %v1163, %v1162
      %v1173 = vpack.c.b16 %v1165, %v1164
      %1182 = vmatprep.subr.bf16.mxu0 0
      %1183 = vmatpush1.bf16.msra.mxu0 %v1166
      %1184 = vmatprep.subr.bf16.mxu0 0
      %1185 = vmatpush1.bf16.msra.mxu0 %v1167
      %1186 = vmatprep.subr.bf16.mxu0 0
      %1187 = vmatpush1.bf16.msra.mxu0 %v1168
      %1188 = vmatprep.subr.bf16.mxu0 0
      %1189 = vmatpush1.bf16.msra.mxu0 %v1169
      %1190 = vmatprep.subr.bf16.mxu0 0
      %1191 = vmatpush1.bf16.msra.mxu0 %v1170
      %1192 = vmatprep.subr.bf16.mxu0 0
      %1193 = vmatpush1.bf16.msra.mxu0 %v1171
      %1194 = vmatprep.subr.bf16.mxu0 0
      %1195 = vmatpush1.bf16.msra.mxu0 %v1172
      %1196 = vmatprep.subr.bf16.mxu0 0
      %1197 = vmatpush1.bf16.msra.mxu0 %v1173
      %1198 = vmatprep.subr.bf16.mxu0 0
      %1199 = vmatpush1.bf16.msra.mxu0 0
      %1200 = vmatprep.subr.bf16.mxu0 0
      %1201 = vmatpush1.bf16.msra.mxu0 0
      %1202 = vmatprep.subr.bf16.mxu0 0
      %1203 = vmatpush1.bf16.msra.mxu0 0
      %1204 = vmatprep.subr.bf16.mxu0 0
      %1205 = vmatpush1.bf16.msra.mxu0 0
      %1206 = vmatprep.subr.bf16.mxu0 0
      %1207 = vmatpush1.bf16.msra.mxu0 0
      %1208 = vmatprep.subr.bf16.mxu0 0
      %1209 = vmatpush1.bf16.msra.mxu0 0
      %1210 = vmatprep.subr.bf16.mxu0 0
      %1211 = vmatpush1.bf16.msra.mxu0 0
      %1212 = vmatprep.subr.bf16.mxu0 0
      %1213 = vmatpush1.bf16.msra.mxu0 0
      %1214 = vmatprep.mubr.bf16.mxu0 0
      %1215 = vmatmul.mubr.bf16.gmra.mrb[0].mxu0 %v1126
      %v1216 = vpop.f32.mrb[0].mxu0
      %v1217 = vadd.f32 %v1080, %v1216
      %v1218 = vpop.f32.mrb[0].mxu0
      %v1219 = vpop.f32.mrb[0].mxu0
      %v1220 = vadd.f32 %v1083, %v1219
      %v1221 = vpop.f32.mrb[0].mxu0
      %1222 = vmatprep.mubr.bf16.mxu0 0
      %1223 = vmatmul.mubr.bf16.gmra.mrb[0].mxu0 %v1127
      %v1224 = vpop.f32.mrb[0].mxu0
      %v1225 = vadd.f32 %v1088, %v1224
      %v1226 = vpop.f32.mrb[0].mxu0
      %v1227 = vpop.f32.mrb[0].mxu0
      %v1228 = vadd.f32 %v1091, %v1227
      %v1229 = vpop.f32.mrb[0].mxu0
      %1230 = vmatprep.mubr.bf16.mxu0 0
      %1231 = vmatmul.mubr.bf16.gmra.mrb[0].mxu0 %v1128
      %v1232 = vpop.f32.mrb[0].mxu0
      %v1233 = vadd.f32 %v1096, %v1232
      %v1234 = vpop.f32.mrb[0].mxu0
      %v1235 = vpop.f32.mrb[0].mxu0
      %v1236 = vadd.f32 %v1099, %v1235
      %v1237 = vpop.f32.mrb[0].mxu0
      %1238 = vmatprep.mubr.bf16.mxu0 0
      %1239 = vmatmul.mubr.bf16.gmra.mrb[0].mxu0 %v1129
      %v1240 = vpop.f32.mrb[0].mxu0
      %v1241 = vadd.f32 %v1104, %v1240
      %v1242 = vpop.f32.mrb[0].mxu0
      %v1243 = vpop.f32.mrb[0].mxu0
      %v1244 = vadd.f32 %v1107, %v1243
      %v1245 = vpop.f32.mrb[0].mxu0
      %1246 = vdwg.mxu0
      %v1247 = vunpack.c.h.b16 %v443
      %v1248 = vunpack.c.h.b16 %v444
      %v1249 = vunpack.c.h.b16 %v445
      %v1250 = vunpack.c.h.b16 %v446
      %v1251 = vunpack.c.h.b16 %v447
      %v1252 = vunpack.c.h.b16 %v448
      %v1253 = vunpack.c.h.b16 %v449
      %v1254 = vunpack.c.h.b16 %v450
      %v1255 = vpack.c.b16 %v1118, %v1118
      %v1256 = vpack.c.b16 %v1247, %v1247
      %v1257 = vpack.c.b16 %v1119, %v1119
      %v1258 = vpack.c.b16 %v1248, %v1248
      %v1259 = vpack.c.b16 %v1120, %v1120
      %v1260 = vpack.c.b16 %v1249, %v1249
      %v1261 = vpack.c.b16 %v1121, %v1121
      %v1262 = vpack.c.b16 %v1250, %v1250
      %v1263 = vpack.c.b16 %v1122, %v1122
      %v1264 = vpack.c.b16 %v1251, %v1251
      %v1265 = vpack.c.b16 %v1123, %v1123
      %v1266 = vpack.c.b16 %v1252, %v1252
      %v1267 = vpack.c.b16 %v1124, %v1124
      %v1268 = vpack.c.b16 %v1253, %v1253
      %v1269 = vpack.c.b16 %v1125, %v1125
      %v1270 = vpack.c.b16 %v1254, %v1254
      %vm1271 = vsmask.f32 3328
      %vm1272 = vsmask.f32 7440
      %vm1273 = vmor %vm1271, %vm1272
      %v1275 = vshrl.u32 %v1255, 16
      %v1277 = vrot.slane %v1275, 4
      %v1278 = vshll.u32 %v1255, 16
      %v1280 = vrot.slane %v1278, 5
      %v1281 = vor.u32 %v1277, %v1280
      %v1282 = vrot.slane %v1281, 4
      %v1284 = vshll.u32 %v1256, 16
      %v1286 = vrot.slane %v1284, 5
      %v1287 = vsel %vm1273, %v1282, %v1286
      %v1289 = vshrl.u32 %v1257, 16
      %v1291 = vrot.slane %v1289, 4
      %v1292 = vshll.u32 %v1257, 16
      %v1294 = vrot.slane %v1292, 5
      %v1295 = vor.u32 %v1291, %v1294
      %v1296 = vrot.slane %v1295, 4
      %v1298 = vshll.u32 %v1258, 16
      %v1300 = vrot.slane %v1298, 5
      %v1301 = vsel %vm1273, %v1296, %v1300
      %v1303 = vshrl.u32 %v1259, 16
      %v1305 = vrot.slane %v1303, 4
      %v1306 = vshll.u32 %v1259, 16
      %v1308 = vrot.slane %v1306, 5
      %v1309 = vor.u32 %v1305, %v1308
      %v1310 = vrot.slane %v1309, 4
      %v1312 = vshll.u32 %v1260, 16
      %v1314 = vrot.slane %v1312, 5
      %v1315 = vsel %vm1273, %v1310, %v1314
      %v1317 = vshrl.u32 %v1261, 16
      %v1319 = vrot.slane %v1317, 4
      %v1320 = vshll.u32 %v1261, 16
      %v1322 = vrot.slane %v1320, 5
      %v1323 = vor.u32 %v1319, %v1322
      %v1324 = vrot.slane %v1323, 4
      %v1326 = vshll.u32 %v1262, 16
      %v1328 = vrot.slane %v1326, 5
      %v1329 = vsel %vm1273, %v1324, %v1328
      %v1331 = vshrl.u32 %v1263, 16
      %v1333 = vrot.slane %v1331, 4
      %v1334 = vshll.u32 %v1263, 16
      %v1336 = vrot.slane %v1334, 5
      %v1337 = vor.u32 %v1333, %v1336
      %v1338 = vrot.slane %v1337, 4
      %v1340 = vshll.u32 %v1264, 16
      %v1342 = vrot.slane %v1340, 5
      %v1343 = vsel %vm1273, %v1338, %v1342
      %v1345 = vshrl.u32 %v1265, 16
      %v1347 = vrot.slane %v1345, 4
      %v1348 = vshll.u32 %v1265, 16
      %v1350 = vrot.slane %v1348, 5
      %v1351 = vor.u32 %v1347, %v1350
      %v1352 = vrot.slane %v1351, 4
      %v1354 = vshll.u32 %v1266, 16
      %v1356 = vrot.slane %v1354, 5
      %v1357 = vsel %vm1273, %v1352, %v1356
      %v1359 = vshrl.u32 %v1267, 16
      %v1361 = vrot.slane %v1359, 4
      %v1362 = vshll.u32 %v1267, 16
      %v1364 = vrot.slane %v1362, 5
      %v1365 = vor.u32 %v1361, %v1364
      %v1366 = vrot.slane %v1365, 4
      %v1368 = vshll.u32 %v1268, 16
      %v1370 = vrot.slane %v1368, 5
      %v1371 = vsel %vm1273, %v1366, %v1370
      %v1373 = vshrl.u32 %v1269, 16
      %v1375 = vrot.slane %v1373, 4
      %v1376 = vshll.u32 %v1269, 16
      %v1378 = vrot.slane %v1376, 5
      %v1379 = vor.u32 %v1375, %v1378
      %v1380 = vrot.slane %v1379, 4
      %v1382 = vshll.u32 %v1270, 16
      %v1384 = vrot.slane %v1382, 5
      %v1385 = vsel %vm1273, %v1380, %v1384
      %s1386 = scalar_lea.vmem %s2, 128
      %v1387 = vld [vmem:[%s1386] sm:$0xf]
      %v1388 = vld [vmem:[%s1386 + $0x4] sm:$0xf]
      %v1389 = vld [vmem:[%s1386 + $0x8] sm:$0xf]
      %v1390 = vld [vmem:[%s1386 + $0xc] sm:$0xf]
      %v1391 = vld [vmem:[%s1386 + $0x10] sm:$0xf]
      %v1392 = vld [vmem:[%s1386 + $0x14] sm:$0xf]
      %v1393 = vld [vmem:[%s1386 + $0x18] sm:$0xf]
      %v1394 = vld [vmem:[%s1386 + $0x1c] sm:$0xf]
      %v1395 = vld [vmem:[%s1386 + $0x20] sm:$0xf]
      %v1396 = vld [vmem:[%s1386 + $0x24] sm:$0xf]
      %v1397 = vld [vmem:[%s1386 + $0x28] sm:$0xf]
      %v1398 = vld [vmem:[%s1386 + $0x2c] sm:$0xf]
      %v1399 = vld [vmem:[%s1386 + $0x30] sm:$0xf]
      %v1400 = vld [vmem:[%s1386 + $0x34] sm:$0xf]
      %v1401 = vld [vmem:[%s1386 + $0x38] sm:$0xf]
      %v1402 = vld [vmem:[%s1386 + $0x3c] sm:$0xf]
      %v1403 = vunpack.c.l.b16 %v1287
      %v1404 = vunpack.c.l.b16 %v1301
      %v1405 = vunpack.c.l.b16 %v1315
      %v1406 = vunpack.c.l.b16 %v1329
      %v1407 = vunpack.c.l.b16 %v1343
      %v1408 = vunpack.c.l.b16 %v1357
      %v1409 = vunpack.c.l.b16 %v1371
      %v1410 = vunpack.c.l.b16 %v1385
      %v1411 = vpack.c.b16 %v1404, %v1403
      %v1412 = vpack.c.b16 %v1406, %v1405
      %v1413 = vpack.c.b16 %v1408, %v1407
      %v1414 = vpack.c.b16 %v1410, %v1409
      %v1435 = vunpack.c.l.b16 %v1387
      %v1436 = vunpack.c.l.b16 %v1388
      %v1437 = vunpack.c.l.b16 %v1389
      %v1438 = vunpack.c.l.b16 %v1390
      %v1439 = vunpack.c.l.b16 %v1391
      %v1440 = vunpack.c.l.b16 %v1392
      %v1441 = vunpack.c.l.b16 %v1393
      %v1442 = vunpack.c.l.b16 %v1394
      %v1443 = vunpack.c.l.b16 %v1395
      %v1444 = vunpack.c.l.b16 %v1396
      %v1445 = vunpack.c.l.b16 %v1397
      %v1446 = vunpack.c.l.b16 %v1398
      %v1447 = vunpack.c.l.b16 %v1399
      %v1448 = vunpack.c.l.b16 %v1400
      %v1449 = vunpack.c.l.b16 %v1401
      %v1450 = vunpack.c.l.b16 %v1402
      %v1451 = vpack.c.b16 %v1436, %v1435
      %v1452 = vpack.c.b16 %v1438, %v1437
      %v1453 = vpack.c.b16 %v1440, %v1439
      %v1454 = vpack.c.b16 %v1442, %v1441
      %v1455 = vpack.c.b16 %v1444, %v1443
      %v1456 = vpack.c.b16 %v1446, %v1445
      %v1457 = vpack.c.b16 %v1448, %v1447
      %v1458 = vpack.c.b16 %v1450, %v1449
      %1467 = vmatprep.subr.bf16.mxu0 0
      %1468 = vmatpush1.bf16.msra.mxu0 %v1451
      %1469 = vmatprep.subr.bf16.mxu0 0
      %1470 = vmatpush1.bf16.msra.mxu0 %v1452
      %1471 = vmatprep.subr.bf16.mxu0 0
      %1472 = vmatpush1.bf16.msra.mxu0 %v1453
      %1473 = vmatprep.subr.bf16.mxu0 0
      %1474 = vmatpush1.bf16.msra.mxu0 %v1454
      %1475 = vmatprep.subr.bf16.mxu0 0
      %1476 = vmatpush1.bf16.msra.mxu0 %v1455
      %1477 = vmatprep.subr.bf16.mxu0 0
      %1478 = vmatpush1.bf16.msra.mxu0 %v1456
      %1479 = vmatprep.subr.bf16.mxu0 0
      %1480 = vmatpush1.bf16.msra.mxu0 %v1457
      %1481 = vmatprep.subr.bf16.mxu0 0
      %1482 = vmatpush1.bf16.msra.mxu0 %v1458
      %1483 = vmatprep.subr.bf16.mxu0 0
      %1484 = vmatpush1.bf16.msra.mxu0 0
      %1485 = vmatprep.subr.bf16.mxu0 0
      %1486 = vmatpush1.bf16.msra.mxu0 0
      %1487 = vmatprep.subr.bf16.mxu0 0
      %1488 = vmatpush1.bf16.msra.mxu0 0
      %1489 = vmatprep.subr.bf16.mxu0 0
      %1490 = vmatpush1.bf16.msra.mxu0 0
      %1491 = vmatprep.subr.bf16.mxu0 0
      %1492 = vmatpush1.bf16.msra.mxu0 0
      %1493 = vmatprep.subr.bf16.mxu0 0
      %1494 = vmatpush1.bf16.msra.mxu0 0
      %1495 = vmatprep.subr.bf16.mxu0 0
      %1496 = vmatpush1.bf16.msra.mxu0 0
      %1497 = vmatprep.subr.bf16.mxu0 0
      %1498 = vmatpush1.bf16.msra.mxu0 0
      %1499 = vmatprep.mubr.bf16.mxu0 0
      %1500 = vmatmul.mubr.bf16.gmra.mrb[0].mxu0 %v1411
      %v1501 = vpop.f32.mrb[0].mxu0
      %v1502 = vadd.f32 0.0, %v1501
      %v1503 = vpop.f32.mrb[0].mxu0
      %v1504 = vpop.f32.mrb[0].mxu0
      %v1505 = vadd.f32 0.0, %v1504
      %v1506 = vpop.f32.mrb[0].mxu0
      %1507 = vmatprep.mubr.bf16.mxu0 0
      %1508 = vmatmul.mubr.bf16.gmra.mrb[0].mxu0 %v1412
      %v1509 = vpop.f32.mrb[0].mxu0
      %v1510 = vadd.f32 0.0, %v1509
      %v1511 = vpop.f32.mrb[0].mxu0
      %v1512 = vpop.f32.mrb[0].mxu0
      %v1513 = vadd.f32 0.0, %v1512
      %v1514 = vpop.f32.mrb[0].mxu0
      %1515 = vmatprep.mubr.bf16.mxu0 0
      %1516 = vmatmul.mubr.bf16.gmra.mrb[0].mxu0 %v1413
      %v1517 = vpop.f32.mrb[0].mxu0
      %v1518 = vadd.f32 0.0, %v1517
      %v1519 = vpop.f32.mrb[0].mxu0
      %v1520 = vpop.f32.mrb[0].mxu0
      %v1521 = vadd.f32 0.0, %v1520
      %v1522 = vpop.f32.mrb[0].mxu0
      %1523 = vmatprep.mubr.bf16.mxu0 0
      %1524 = vmatmul.mubr.bf16.gmra.mrb[0].mxu0 %v1414
      %v1525 = vpop.f32.mrb[0].mxu0
      %v1526 = vadd.f32 0.0, %v1525
      %v1527 = vpop.f32.mrb[0].mxu0
      %v1528 = vpop.f32.mrb[0].mxu0
      %v1529 = vadd.f32 0.0, %v1528
      %v1530 = vpop.f32.mrb[0].mxu0
      %1531 = vdwg.mxu0
      %v1532 = vadd.f32 %v1217, %v1502
      %v1533 = vadd.f32 %v1220, %v1505
      %v1534 = vadd.f32 %v1225, %v1510
      %v1535 = vadd.f32 %v1228, %v1513
      %v1536 = vadd.f32 %v1233, %v1518
      %v1537 = vadd.f32 %v1236, %v1521
      %v1538 = vadd.f32 %v1241, %v1526
      %v1539 = vadd.f32 %v1244, %v1529
      %s1540 = scalar_lea.vmem %s2, 192
      %v1541 = vld [vmem:[%s1540] sm:$0xf]
      %v1542 = vld [vmem:[%s1540 + $0x4] sm:$0xf]
      %v1543 = vld [vmem:[%s1540 + $0x8] sm:$0xf]
      %v1544 = vld [vmem:[%s1540 + $0xc] sm:$0xf]
      %v1545 = vld [vmem:[%s1540 + $0x10] sm:$0xf]
      %v1546 = vld [vmem:[%s1540 + $0x14] sm:$0xf]
      %v1547 = vld [vmem:[%s1540 + $0x18] sm:$0xf]
      %v1548 = vld [vmem:[%s1540 + $0x1c] sm:$0xf]
      %v1549 = vld [vmem:[%s1540 + $0x20] sm:$0xf]
      %v1550 = vld [vmem:[%s1540 + $0x24] sm:$0xf]
      %v1551 = vld [vmem:[%s1540 + $0x28] sm:$0xf]
      %v1552 = vld [vmem:[%s1540 + $0x2c] sm:$0xf]
      %v1553 = vld [vmem:[%s1540 + $0x30] sm:$0xf]
      %v1554 = vld [vmem:[%s1540 + $0x34] sm:$0xf]
      %v1555 = vld [vmem:[%s1540 + $0x38] sm:$0xf]
      %v1556 = vld [vmem:[%s1540 + $0x3c] sm:$0xf]
      %v1565 = vunpack.c.l.b16 %v779
      %v1566 = vunpack.c.l.b16 %v780
      %v1567 = vunpack.c.l.b16 %v781
      %v1568 = vunpack.c.l.b16 %v782
      %v1569 = vunpack.c.l.b16 %v783
      %v1570 = vunpack.c.l.b16 %v784
      %v1571 = vunpack.c.l.b16 %v785
      %v1572 = vunpack.c.l.b16 %v786
      %v1573 = vpack.c.b16 %v1566, %v1565
      %v1574 = vpack.c.b16 %v1568, %v1567
      %v1575 = vpack.c.b16 %v1570, %v1569
      %v1576 = vpack.c.b16 %v1572, %v1571
      %v1597 = vunpack.c.l.b16 %v1541
      %v1598 = vunpack.c.l.b16 %v1542
      %v1599 = vunpack.c.l.b16 %v1543
      %v1600 = vunpack.c.l.b16 %v1544
      %v1601 = vunpack.c.l.b16 %v1545
      %v1602 = vunpack.c.l.b16 %v1546
      %v1603 = vunpack.c.l.b16 %v1547
      %v1604 = vunpack.c.l.b16 %v1548
      %v1605 = vunpack.c.l.b16 %v1549
      %v1606 = vunpack.c.l.b16 %v1550
      %v1607 = vunpack.c.l.b16 %v1551
      %v1608 = vunpack.c.l.b16 %v1552
      %v1609 = vunpack.c.l.b16 %v1553
      %v1610 = vunpack.c.l.b16 %v1554
      %v1611 = vunpack.c.l.b16 %v1555
      %v1612 = vunpack.c.l.b16 %v1556
      %v1613 = vpack.c.b16 %v1598, %v1597
      %v1614 = vpack.c.b16 %v1600, %v1599
      %v1615 = vpack.c.b16 %v1602, %v1601
      %v1616 = vpack.c.b16 %v1604, %v1603
      %v1617 = vpack.c.b16 %v1606, %v1605
      %v1618 = vpack.c.b16 %v1608, %v1607
      %v1619 = vpack.c.b16 %v1610, %v1609
      %v1620 = vpack.c.b16 %v1612, %v1611
      %1629 = vmatprep.subr.bf16.mxu0 0
      %1630 = vmatpush1.bf16.msra.mxu0 %v1613
      %1631 = vmatprep.subr.bf16.mxu0 0
      %1632 = vmatpush1.bf16.msra.mxu0 %v1614
      %1633 = vmatprep.subr.bf16.mxu0 0
      %1634 = vmatpush1.bf16.msra.mxu0 %v1615
      %1635 = vmatprep.subr.bf16.mxu0 0
      %1636 = vmatpush1.bf16.msra.mxu0 %v1616
      %1637 = vmatprep.subr.bf16.mxu0 0
      %1638 = vmatpush1.bf16.msra.mxu0 %v1617
      %1639 = vmatprep.subr.bf16.mxu0 0
      %1640 = vmatpush1.bf16.msra.mxu0 %v1618
      %1641 = vmatprep.subr.bf16.mxu0 0
      %1642 = vmatpush1.bf16.msra.mxu0 %v1619
      %1643 = vmatprep.subr.bf16.mxu0 0
      %1644 = vmatpush1.bf16.msra.mxu0 %v1620
      %1645 = vmatprep.subr.bf16.mxu0 0
      %1646 = vmatpush1.bf16.msra.mxu0 0
      %1647 = vmatprep.subr.bf16.mxu0 0
      %1648 = vmatpush1.bf16.msra.mxu0 0
      %1649 = vmatprep.subr.bf16.mxu0 0
      %1650 = vmatpush1.bf16.msra.mxu0 0
      %1651 = vmatprep.subr.bf16.mxu0 0
      %1652 = vmatpush1.bf16.msra.mxu0 0
      %1653 = vmatprep.subr.bf16.mxu0 0
      %1654 = vmatpush1.bf16.msra.mxu0 0
      %1655 = vmatprep.subr.bf16.mxu0 0
      %1656 = vmatpush1.bf16.msra.mxu0 0
      %1657 = vmatprep.subr.bf16.mxu0 0
      %1658 = vmatpush1.bf16.msra.mxu0 0
      %1659 = vmatprep.subr.bf16.mxu0 0
      %1660 = vmatpush1.bf16.msra.mxu0 0
      %1661 = vmatprep.mubr.bf16.mxu0 0
      %1662 = vmatmul.mubr.bf16.gmra.mrb[0].mxu0 %v1573
      %v1663 = vpop.f32.mrb[0].mxu0
      %v1664 = vadd.f32 0.0, %v1663
      %v1665 = vpop.f32.mrb[0].mxu0
      %v1666 = vpop.f32.mrb[0].mxu0
      %v1667 = vadd.f32 0.0, %v1666
      %v1668 = vpop.f32.mrb[0].mxu0
      %1669 = vmatprep.mubr.bf16.mxu0 0
      %1670 = vmatmul.mubr.bf16.gmra.mrb[0].mxu0 %v1574
      %v1671 = vpop.f32.mrb[0].mxu0
      %v1672 = vadd.f32 0.0, %v1671
      %v1673 = vpop.f32.mrb[0].mxu0
      %v1674 = vpop.f32.mrb[0].mxu0
      %v1675 = vadd.f32 0.0, %v1674
      %v1676 = vpop.f32.mrb[0].mxu0
      %1677 = vmatprep.mubr.bf16.mxu0 0
      %1678 = vmatmul.mubr.bf16.gmra.mrb[0].mxu0 %v1575
      %v1679 = vpop.f32.mrb[0].mxu0
      %v1680 = vadd.f32 0.0, %v1679
      %v1681 = vpop.f32.mrb[0].mxu0
      %v1682 = vpop.f32.mrb[0].mxu0
      %v1683 = vadd.f32 0.0, %v1682
      %v1684 = vpop.f32.mrb[0].mxu0
      %1685 = vmatprep.mubr.bf16.mxu0 0
      %1686 = vmatmul.mubr.bf16.gmra.mrb[0].mxu0 %v1576
      %v1687 = vpop.f32.mrb[0].mxu0
      %v1688 = vadd.f32 0.0, %v1687
      %v1689 = vpop.f32.mrb[0].mxu0
      %v1690 = vpop.f32.mrb[0].mxu0
      %v1691 = vadd.f32 0.0, %v1690
      %v1692 = vpop.f32.mrb[0].mxu0
      %1693 = vdwg.mxu0
      %v1694 = vadd.f32 %v1532, %v1664
      %v1695 = vadd.f32 %v1533, %v1667
      %v1696 = vadd.f32 %v1534, %v1672
      %v1697 = vadd.f32 %v1535, %v1675
      %v1698 = vadd.f32 %v1536, %v1680
      %v1699 = vadd.f32 %v1537, %v1683
      %v1700 = vadd.f32 %v1538, %v1688
      %v1701 = vadd.f32 %v1539, %v1691
      %s1702 = scalar_lea.vmem %s2, 256
      %v1703 = vld [vmem:[%s1702] sm:$0xf]
      %v1704 = vld [vmem:[%s1702 + $0x4] sm:$0xf]
      %v1705 = vld [vmem:[%s1702 + $0x8] sm:$0xf]
      %v1706 = vld [vmem:[%s1702 + $0xc] sm:$0xf]
      %v1707 = vld [vmem:[%s1702 + $0x10] sm:$0xf]
      %v1708 = vld [vmem:[%s1702 + $0x14] sm:$0xf]
      %v1709 = vld [vmem:[%s1702 + $0x18] sm:$0xf]
      %v1710 = vld [vmem:[%s1702 + $0x1c] sm:$0xf]
      %v1711 = vld [vmem:[%s1702 + $0x20] sm:$0xf]
      %v1712 = vld [vmem:[%s1702 + $0x24] sm:$0xf]
      %v1713 = vld [vmem:[%s1702 + $0x28] sm:$0xf]
      %v1714 = vld [vmem:[%s1702 + $0x2c] sm:$0xf]
      %v1715 = vld [vmem:[%s1702 + $0x30] sm:$0xf]
      %v1716 = vld [vmem:[%s1702 + $0x34] sm:$0xf]
      %v1717 = vld [vmem:[%s1702 + $0x38] sm:$0xf]
      %v1718 = vld [vmem:[%s1702 + $0x3c] sm:$0xf]
      %v1727 = vunpack.c.l.b16 %v932
      %v1728 = vunpack.c.l.b16 %v933
      %v1729 = vunpack.c.l.b16 %v934
      %v1730 = vunpack.c.l.b16 %v935
      %v1731 = vunpack.c.l.b16 %v936
      %v1732 = vunpack.c.l.b16 %v937
      %v1733 = vunpack.c.l.b16 %v938
      %v1734 = vunpack.c.l.b16 %v939
      %v1735 = vpack.c.b16 %v1728, %v1727
      %v1736 = vpack.c.b16 %v1730, %v1729
      %v1737 = vpack.c.b16 %v1732, %v1731
      %v1738 = vpack.c.b16 %v1734, %v1733
      %v1759 = vunpack.c.l.b16 %v1703
      %v1760 = vunpack.c.l.b16 %v1704
      %v1761 = vunpack.c.l.b16 %v1705
      %v1762 = vunpack.c.l.b16 %v1706
      %v1763 = vunpack.c.l.b16 %v1707
      %v1764 = vunpack.c.l.b16 %v1708
      %v1765 = vunpack.c.l.b16 %v1709
      %v1766 = vunpack.c.l.b16 %v1710
      %v1767 = vunpack.c.l.b16 %v1711
      %v1768 = vunpack.c.l.b16 %v1712
      %v1769 = vunpack.c.l.b16 %v1713
      %v1770 = vunpack.c.l.b16 %v1714
      %v1771 = vunpack.c.l.b16 %v1715
      %v1772 = vunpack.c.l.b16 %v1716
      %v1773 = vunpack.c.l.b16 %v1717
      %v1774 = vunpack.c.l.b16 %v1718
      %v1775 = vpack.c.b16 %v1760, %v1759
      %v1776 = vpack.c.b16 %v1762, %v1761
      %v1777 = vpack.c.b16 %v1764, %v1763
      %v1778 = vpack.c.b16 %v1766, %v1765
      %v1779 = vpack.c.b16 %v1768, %v1767
      %v1780 = vpack.c.b16 %v1770, %v1769
      %v1781 = vpack.c.b16 %v1772, %v1771
      %v1782 = vpack.c.b16 %v1774, %v1773
      %1791 = vmatprep.subr.bf16.mxu0 0
      %1792 = vmatpush1.bf16.msra.mxu0 %v1775
      %1793 = vmatprep.subr.bf16.mxu0 0
      %1794 = vmatpush1.bf16.msra.mxu0 %v1776
      %1795 = vmatprep.subr.bf16.mxu0 0
      %1796 = vmatpush1.bf16.msra.mxu0 %v1777
      %1797 = vmatprep.subr.bf16.mxu0 0
      %1798 = vmatpush1.bf16.msra.mxu0 %v1778
      %1799 = vmatprep.subr.bf16.mxu0 0
      %1800 = vmatpush1.bf16.msra.mxu0 %v1779
      %1801 = vmatprep.subr.bf16.mxu0 0
      %1802 = vmatpush1.bf16.msra.mxu0 %v1780
      %1803 = vmatprep.subr.bf16.mxu0 0
      %1804 = vmatpush1.bf16.msra.mxu0 %v1781
      %1805 = vmatprep.subr.bf16.mxu0 0
      %1806 = vmatpush1.bf16.msra.mxu0 %v1782
      %1807 = vmatprep.subr.bf16.mxu0 0
      %1808 = vmatpush1.bf16.msra.mxu0 0
      %1809 = vmatprep.subr.bf16.mxu0 0
      %1810 = vmatpush1.bf16.msra.mxu0 0
      %1811 = vmatprep.subr.bf16.mxu0 0
      %1812 = vmatpush1.bf16.msra.mxu0 0
      %1813 = vmatprep.subr.bf16.mxu0 0
      %1814 = vmatpush1.bf16.msra.mxu0 0
      %1815 = vmatprep.subr.bf16.mxu0 0
      %1816 = vmatpush1.bf16.msra.mxu0 0
      %1817 = vmatprep.subr.bf16.mxu0 0
      %1818 = vmatpush1.bf16.msra.mxu0 0
      %1819 = vmatprep.subr.bf16.mxu0 0
      %1820 = vmatpush1.bf16.msra.mxu0 0
      %1821 = vmatprep.subr.bf16.mxu0 0
      %1822 = vmatpush1.bf16.msra.mxu0 0
      %1823 = vmatprep.mubr.bf16.mxu0 0
      %1824 = vmatmul.mubr.bf16.gmra.mrb[0].mxu0 %v1735
      %v1825 = vpop.f32.mrb[0].mxu0
      %v1826 = vadd.f32 0.0, %v1825
      %v1827 = vpop.f32.mrb[0].mxu0
      %v1828 = vpop.f32.mrb[0].mxu0
      %v1829 = vadd.f32 0.0, %v1828
      %v1830 = vpop.f32.mrb[0].mxu0
      %1831 = vmatprep.mubr.bf16.mxu0 0
      %1832 = vmatmul.mubr.bf16.gmra.mrb[0].mxu0 %v1736
      %v1833 = vpop.f32.mrb[0].mxu0
      %v1834 = vadd.f32 0.0, %v1833
      %v1835 = vpop.f32.mrb[0].mxu0
      %v1836 = vpop.f32.mrb[0].mxu0
      %v1837 = vadd.f32 0.0, %v1836
      %v1838 = vpop.f32.mrb[0].mxu0
      %1839 = vmatprep.mubr.bf16.mxu0 0
      %1840 = vmatmul.mubr.bf16.gmra.mrb[0].mxu0 %v1737
      %v1841 = vpop.f32.mrb[0].mxu0
      %v1842 = vadd.f32 0.0, %v1841
      %v1843 = vpop.f32.mrb[0].mxu0
      %v1844 = vpop.f32.mrb[0].mxu0
      %v1845 = vadd.f32 0.0, %v1844
      %v1846 = vpop.f32.mrb[0].mxu0
      %1847 = vmatprep.mubr.bf16.mxu0 0
      %1848 = vmatmul.mubr.bf16.gmra.mrb[0].mxu0 %v1738
      %v1849 = vpop.f32.mrb[0].mxu0
      %v1850 = vadd.f32 0.0, %v1849
      %v1851 = vpop.f32.mrb[0].mxu0
      %v1852 = vpop.f32.mrb[0].mxu0
      %v1853 = vadd.f32 0.0, %v1852
      %v1854 = vpop.f32.mrb[0].mxu0
      %1855 = vdwg.mxu0
      %v1856 = vadd.f32 %v1694, %v1826
      %v1857 = vadd.f32 %v1695, %v1829
      %v1858 = vadd.f32 %v1696, %v1834
      %v1859 = vadd.f32 %v1697, %v1837
      %v1860 = vadd.f32 %v1698, %v1842
      %v1861 = vadd.f32 %v1699, %v1845
      %v1862 = vadd.f32 %v1700, %v1850
      %v1863 = vadd.f32 %v1701, %v1853
      %v1864 = vunpack.c.h.b16 %v779
      %v1865 = vunpack.c.h.b16 %v780
      %v1866 = vunpack.c.h.b16 %v781
      %v1867 = vunpack.c.h.b16 %v782
      %v1868 = vunpack.c.h.b16 %v783
      %v1869 = vunpack.c.h.b16 %v784
      %v1870 = vunpack.c.h.b16 %v785
      %v1871 = vunpack.c.h.b16 %v786
      %v1872 = vpack.c.b16 %v1565, %v1565
      %v1873 = vpack.c.b16 %v1864, %v1864
      %v1874 = vpack.c.b16 %v1566, %v1566
      %v1875 = vpack.c.b16 %v1865, %v1865
      %v1876 = vpack.c.b16 %v1567, %v1567
      %v1877 = vpack.c.b16 %v1866, %v1866
      %v1878 = vpack.c.b16 %v1568, %v1568
      %v1879 = vpack.c.b16 %v1867, %v1867
      %v1880 = vpack.c.b16 %v1569, %v1569
      %v1881 = vpack.c.b16 %v1868, %v1868
      %v1882 = vpack.c.b16 %v1570, %v1570
      %v1883 = vpack.c.b16 %v1869, %v1869
      %v1884 = vpack.c.b16 %v1571, %v1571
      %v1885 = vpack.c.b16 %v1870, %v1870
      %v1886 = vpack.c.b16 %v1572, %v1572
      %v1887 = vpack.c.b16 %v1871, %v1871
      %v1889 = vshrl.u32 %v1872, 16
      %v1891 = vrot.slane %v1889, 4
      %v1892 = vshll.u32 %v1872, 16
      %v1894 = vrot.slane %v1892, 5
      %v1895 = vor.u32 %v1891, %v1894
      %v1896 = vrot.slane %v1895, 4
      %v1898 = vshll.u32 %v1873, 16
      %v1900 = vrot.slane %v1898, 5
      %v1901 = vsel %vm1273, %v1896, %v1900
      %v1903 = vshrl.u32 %v1874, 16
      %v1905 = vrot.slane %v1903, 4
      %v1906 = vshll.u32 %v1874, 16
      %v1908 = vrot.slane %v1906, 5
      %v1909 = vor.u32 %v1905, %v1908
      %v1910 = vrot.slane %v1909, 4
      %v1912 = vshll.u32 %v1875, 16
      %v1914 = vrot.slane %v1912, 5
      %v1915 = vsel %vm1273, %v1910, %v1914
      %v1917 = vshrl.u32 %v1876, 16
      %v1919 = vrot.slane %v1917, 4
      %v1920 = vshll.u32 %v1876, 16
      %v1922 = vrot.slane %v1920, 5
      %v1923 = vor.u32 %v1919, %v1922
      %v1924 = vrot.slane %v1923, 4
      %v1926 = vshll.u32 %v1877, 16
      %v1928 = vrot.slane %v1926, 5
      %v1929 = vsel %vm1273, %v1924, %v1928
      %v1931 = vshrl.u32 %v1878, 16
      %v1933 = vrot.slane %v1931, 4
      %v1934 = vshll.u32 %v1878, 16
      %v1936 = vrot.slane %v1934, 5
      %v1937 = vor.u32 %v1933, %v1936
      %v1938 = vrot.slane %v1937, 4
      %v1940 = vshll.u32 %v1879, 16
      %v1942 = vrot.slane %v1940, 5
      %v1943 = vsel %vm1273, %v1938, %v1942
      %v1945 = vshrl.u32 %v1880, 16
      %v1947 = vrot.slane %v1945, 4
      %v1948 = vshll.u32 %v1880, 16
      %v1950 = vrot.slane %v1948, 5
      %v1951 = vor.u32 %v1947, %v1950
      %v1952 = vrot.slane %v1951, 4
      %v1954 = vshll.u32 %v1881, 16
      %v1956 = vrot.slane %v1954, 5
      %v1957 = vsel %vm1273, %v1952, %v1956
      %v1959 = vshrl.u32 %v1882, 16
      %v1961 = vrot.slane %v1959, 4
      %v1962 = vshll.u32 %v1882, 16
      %v1964 = vrot.slane %v1962, 5
      %v1965 = vor.u32 %v1961, %v1964
      %v1966 = vrot.slane %v1965, 4
      %v1968 = vshll.u32 %v1883, 16
      %v1970 = vrot.slane %v1968, 5
      %v1971 = vsel %vm1273, %v1966, %v1970
      %v1973 = vshrl.u32 %v1884, 16
      %v1975 = vrot.slane %v1973, 4
      %v1976 = vshll.u32 %v1884, 16
      %v1978 = vrot.slane %v1976, 5
      %v1979 = vor.u32 %v1975, %v1978
      %v1980 = vrot.slane %v1979, 4
      %v1982 = vshll.u32 %v1885, 16
      %v1984 = vrot.slane %v1982, 5
      %v1985 = vsel %vm1273, %v1980, %v1984
      %v1987 = vshrl.u32 %v1886, 16
      %v1989 = vrot.slane %v1987, 4
      %v1990 = vshll.u32 %v1886, 16
      %v1992 = vrot.slane %v1990, 5
      %v1993 = vor.u32 %v1989, %v1992
      %v1994 = vrot.slane %v1993, 4
      %v1996 = vshll.u32 %v1887, 16
      %v1998 = vrot.slane %v1996, 5
      %v1999 = vsel %vm1273, %v1994, %v1998
      %s2000 = scalar_lea.vmem %s2, 320
      %v2001 = vld [vmem:[%s2000] sm:$0xf]
      %v2002 = vld [vmem:[%s2000 + $0x4] sm:$0xf]
      %v2003 = vld [vmem:[%s2000 + $0x8] sm:$0xf]
      %v2004 = vld [vmem:[%s2000 + $0xc] sm:$0xf]
      %v2005 = vld [vmem:[%s2000 + $0x10] sm:$0xf]
      %v2006 = vld [vmem:[%s2000 + $0x14] sm:$0xf]
      %v2007 = vld [vmem:[%s2000 + $0x18] sm:$0xf]
      %v2008 = vld [vmem:[%s2000 + $0x1c] sm:$0xf]
      %v2009 = vld [vmem:[%s2000 + $0x20] sm:$0xf]
      %v2010 = vld [vmem:[%s2000 + $0x24] sm:$0xf]
      %v2011 = vld [vmem:[%s2000 + $0x28] sm:$0xf]
      %v2012 = vld [vmem:[%s2000 + $0x2c] sm:$0xf]
      %v2013 = vld [vmem:[%s2000 + $0x30] sm:$0xf]
      %v2014 = vld [vmem:[%s2000 + $0x34] sm:$0xf]
      %v2015 = vld [vmem:[%s2000 + $0x38] sm:$0xf]
      %v2016 = vld [vmem:[%s2000 + $0x3c] sm:$0xf]
      %v2017 = vunpack.c.l.b16 %v1901
      %v2018 = vunpack.c.l.b16 %v1915
      %v2019 = vunpack.c.l.b16 %v1929
      %v2020 = vunpack.c.l.b16 %v1943
      %v2021 = vunpack.c.l.b16 %v1957
      %v2022 = vunpack.c.l.b16 %v1971
      %v2023 = vunpack.c.l.b16 %v1985
      %v2024 = vunpack.c.l.b16 %v1999
      %v2025 = vpack.c.b16 %v2018, %v2017
      %v2026 = vpack.c.b16 %v2020, %v2019
      %v2027 = vpack.c.b16 %v2022, %v2021
      %v2028 = vpack.c.b16 %v2024, %v2023
      %v2049 = vunpack.c.l.b16 %v2001
      %v2050 = vunpack.c.l.b16 %v2002
      %v2051 = vunpack.c.l.b16 %v2003
      %v2052 = vunpack.c.l.b16 %v2004
      %v2053 = vunpack.c.l.b16 %v2005
      %v2054 = vunpack.c.l.b16 %v2006
      %v2055 = vunpack.c.l.b16 %v2007
      %v2056 = vunpack.c.l.b16 %v2008
      %v2057 = vunpack.c.l.b16 %v2009
      %v2058 = vunpack.c.l.b16 %v2010
      %v2059 = vunpack.c.l.b16 %v2011
      %v2060 = vunpack.c.l.b16 %v2012
      %v2061 = vunpack.c.l.b16 %v2013
      %v2062 = vunpack.c.l.b16 %v2014
      %v2063 = vunpack.c.l.b16 %v2015
      %v2064 = vunpack.c.l.b16 %v2016
      %v2065 = vpack.c.b16 %v2050, %v2049
      %v2066 = vpack.c.b16 %v2052, %v2051
      %v2067 = vpack.c.b16 %v2054, %v2053
      %v2068 = vpack.c.b16 %v2056, %v2055
      %v2069 = vpack.c.b16 %v2058, %v2057
      %v2070 = vpack.c.b16 %v2060, %v2059
      %v2071 = vpack.c.b16 %v2062, %v2061
      %v2072 = vpack.c.b16 %v2064, %v2063
      %2081 = vmatprep.subr.bf16.mxu0 0
      %2082 = vmatpush1.bf16.msra.mxu0 %v2065
      %2083 = vmatprep.subr.bf16.mxu0 0
      %2084 = vmatpush1.bf16.msra.mxu0 %v2066
      %2085 = vmatprep.subr.bf16.mxu0 0
      %2086 = vmatpush1.bf16.msra.mxu0 %v2067
      %2087 = vmatprep.subr.bf16.mxu0 0
      %2088 = vmatpush1.bf16.msra.mxu0 %v2068
      %2089 = vmatprep.subr.bf16.mxu0 0
      %2090 = vmatpush1.bf16.msra.mxu0 %v2069
      %2091 = vmatprep.subr.bf16.mxu0 0
      %2092 = vmatpush1.bf16.msra.mxu0 %v2070
      %2093 = vmatprep.subr.bf16.mxu0 0
      %2094 = vmatpush1.bf16.msra.mxu0 %v2071
      %2095 = vmatprep.subr.bf16.mxu0 0
      %2096 = vmatpush1.bf16.msra.mxu0 %v2072
      %2097 = vmatprep.subr.bf16.mxu0 0
      %2098 = vmatpush1.bf16.msra.mxu0 0
      %2099 = vmatprep.subr.bf16.mxu0 0
      %2100 = vmatpush1.bf16.msra.mxu0 0
      %2101 = vmatprep.subr.bf16.mxu0 0
      %2102 = vmatpush1.bf16.msra.mxu0 0
      %2103 = vmatprep.subr.bf16.mxu0 0
      %2104 = vmatpush1.bf16.msra.mxu0 0
      %2105 = vmatprep.subr.bf16.mxu0 0
      %2106 = vmatpush1.bf16.msra.mxu0 0
      %2107 = vmatprep.subr.bf16.mxu0 0
      %2108 = vmatpush1.bf16.msra.mxu0 0
      %2109 = vmatprep.subr.bf16.mxu0 0
      %2110 = vmatpush1.bf16.msra.mxu0 0
      %2111 = vmatprep.subr.bf16.mxu0 0
      %2112 = vmatpush1.bf16.msra.mxu0 0
      %2113 = vmatprep.mubr.bf16.mxu0 0
      %2114 = vmatmul.mubr.bf16.gmra.mrb[0].mxu0 %v2025
      %v2115 = vpop.f32.mrb[0].mxu0
      %v2116 = vadd.f32 0.0, %v2115
      %v2117 = vpop.f32.mrb[0].mxu0
      %v2118 = vpop.f32.mrb[0].mxu0
      %v2119 = vadd.f32 0.0, %v2118
      %v2120 = vpop.f32.mrb[0].mxu0
      %2121 = vmatprep.mubr.bf16.mxu0 0
      %2122 = vmatmul.mubr.bf16.gmra.mrb[0].mxu0 %v2026
      %v2123 = vpop.f32.mrb[0].mxu0
      %v2124 = vadd.f32 0.0, %v2123
      %v2125 = vpop.f32.mrb[0].mxu0
      %v2126 = vpop.f32.mrb[0].mxu0
      %v2127 = vadd.f32 0.0, %v2126
      %v2128 = vpop.f32.mrb[0].mxu0
      %2129 = vmatprep.mubr.bf16.mxu0 0
      %2130 = vmatmul.mubr.bf16.gmra.mrb[0].mxu0 %v2027
      %v2131 = vpop.f32.mrb[0].mxu0
      %v2132 = vadd.f32 0.0, %v2131
      %v2133 = vpop.f32.mrb[0].mxu0
      %v2134 = vpop.f32.mrb[0].mxu0
      %v2135 = vadd.f32 0.0, %v2134
      %v2136 = vpop.f32.mrb[0].mxu0
      %2137 = vmatprep.mubr.bf16.mxu0 0
      %2138 = vmatmul.mubr.bf16.gmra.mrb[0].mxu0 %v2028
      %v2139 = vpop.f32.mrb[0].mxu0
      %v2140 = vadd.f32 0.0, %v2139
      %v2141 = vpop.f32.mrb[0].mxu0
      %v2142 = vpop.f32.mrb[0].mxu0
      %v2143 = vadd.f32 0.0, %v2142
      %v2144 = vpop.f32.mrb[0].mxu0
      %2145 = vdwg.mxu0
      %v2146 = vadd.f32 %v1856, %v2116
      %v2147 = vadd.f32 %v1857, %v2119
      %v2148 = vadd.f32 %v1858, %v2124
      %v2149 = vadd.f32 %v1859, %v2127
      %v2150 = vadd.f32 %v1860, %v2132
      %v2151 = vadd.f32 %v1861, %v2135
      %v2152 = vadd.f32 %v1862, %v2140
      %v2153 = vadd.f32 %v1863, %v2143
      %s2154 = scalar_lea.vmem %s2, 384
      %v2155 = vld [vmem:[%s2154] sm:$0xf]
      %v2156 = vld [vmem:[%s2154 + $0x4] sm:$0xf]
      %v2157 = vld [vmem:[%s2154 + $0x8] sm:$0xf]
      %v2158 = vld [vmem:[%s2154 + $0xc] sm:$0xf]
      %v2159 = vld [vmem:[%s2154 + $0x10] sm:$0xf]
      %v2160 = vld [vmem:[%s2154 + $0x14] sm:$0xf]
      %v2161 = vld [vmem:[%s2154 + $0x18] sm:$0xf]
      %v2162 = vld [vmem:[%s2154 + $0x1c] sm:$0xf]
      %v2163 = vld [vmem:[%s2154 + $0x20] sm:$0xf]
      %v2164 = vld [vmem:[%s2154 + $0x24] sm:$0xf]
      %v2165 = vld [vmem:[%s2154 + $0x28] sm:$0xf]
      %v2166 = vld [vmem:[%s2154 + $0x2c] sm:$0xf]
      %v2167 = vld [vmem:[%s2154 + $0x30] sm:$0xf]
      %v2168 = vld [vmem:[%s2154 + $0x34] sm:$0xf]
      %v2169 = vld [vmem:[%s2154 + $0x38] sm:$0xf]
      %v2170 = vld [vmem:[%s2154 + $0x3c] sm:$0xf]
      %v2172 = vunpack.c.l.b16 %v451
      %v2173 = vpack.c.b16 %v1120, %v1119
      %v2174 = vpack.c.b16 %v1122, %v1121
      %v2175 = vpack.c.b16 %v1124, %v1123
      %v2176 = vpack.c.b16 %v2172, %v1125
      %v2197 = vunpack.c.l.b16 %v2155
      %v2198 = vunpack.c.l.b16 %v2156
      %v2199 = vunpack.c.l.b16 %v2157
      %v2200 = vunpack.c.l.b16 %v2158
      %v2201 = vunpack.c.l.b16 %v2159
      %v2202 = vunpack.c.l.b16 %v2160
      %v2203 = vunpack.c.l.b16 %v2161
      %v2204 = vunpack.c.l.b16 %v2162
      %v2205 = vunpack.c.l.b16 %v2163
      %v2206 = vunpack.c.l.b16 %v2164
      %v2207 = vunpack.c.l.b16 %v2165
      %v2208 = vunpack.c.l.b16 %v2166
      %v2209 = vunpack.c.l.b16 %v2167
      %v2210 = vunpack.c.l.b16 %v2168
      %v2211 = vunpack.c.l.b16 %v2169
      %v2212 = vunpack.c.l.b16 %v2170
      %v2213 = vpack.c.b16 %v2198, %v2197
      %v2214 = vpack.c.b16 %v2200, %v2199
      %v2215 = vpack.c.b16 %v2202, %v2201
      %v2216 = vpack.c.b16 %v2204, %v2203
      %v2217 = vpack.c.b16 %v2206, %v2205
      %v2218 = vpack.c.b16 %v2208, %v2207
      %v2219 = vpack.c.b16 %v2210, %v2209
      %v2220 = vpack.c.b16 %v2212, %v2211
      %2229 = vmatprep.subr.bf16.mxu0 0
      %2230 = vmatpush1.bf16.msra.mxu0 %v2213
      %2231 = vmatprep.subr.bf16.mxu0 0
      %2232 = vmatpush1.bf16.msra.mxu0 %v2214
      %2233 = vmatprep.subr.bf16.mxu0 0
      %2234 = vmatpush1.bf16.msra.mxu0 %v2215
      %2235 = vmatprep.subr.bf16.mxu0 0
      %2236 = vmatpush1.bf16.msra.mxu0 %v2216
      %2237 = vmatprep.subr.bf16.mxu0 0
      %2238 = vmatpush1.bf16.msra.mxu0 %v2217
      %2239 = vmatprep.subr.bf16.mxu0 0
      %2240 = vmatpush1.bf16.msra.mxu0 %v2218
      %2241 = vmatprep.subr.bf16.mxu0 0
      %2242 = vmatpush1.bf16.msra.mxu0 %v2219
      %2243 = vmatprep.subr.bf16.mxu0 0
      %2244 = vmatpush1.bf16.msra.mxu0 %v2220
      %2245 = vmatprep.subr.bf16.mxu0 0
      %2246 = vmatpush1.bf16.msra.mxu0 0
      %2247 = vmatprep.subr.bf16.mxu0 0
      %2248 = vmatpush1.bf16.msra.mxu0 0
      %2249 = vmatprep.subr.bf16.mxu0 0
      %2250 = vmatpush1.bf16.msra.mxu0 0
      %2251 = vmatprep.subr.bf16.mxu0 0
      %2252 = vmatpush1.bf16.msra.mxu0 0
      %2253 = vmatprep.subr.bf16.mxu0 0
      %2254 = vmatpush1.bf16.msra.mxu0 0
      %2255 = vmatprep.subr.bf16.mxu0 0
      %2256 = vmatpush1.bf16.msra.mxu0 0
      %2257 = vmatprep.subr.bf16.mxu0 0
      %2258 = vmatpush1.bf16.msra.mxu0 0
      %2259 = vmatprep.subr.bf16.mxu0 0
      %2260 = vmatpush1.bf16.msra.mxu0 0
      %2261 = vmatprep.mubr.bf16.mxu0 0
      %2262 = vmatmul.mubr.bf16.gmra.mrb[0].mxu0 %v2173
      %v2263 = vpop.f32.mrb[0].mxu0
      %v2264 = vadd.f32 0.0, %v2263
      %v2265 = vpop.f32.mrb[0].mxu0
      %v2266 = vpop.f32.mrb[0].mxu0
      %v2267 = vadd.f32 0.0, %v2266
      %v2268 = vpop.f32.mrb[0].mxu0
      %2269 = vmatprep.mubr.bf16.mxu0 0
      %2270 = vmatmul.mubr.bf16.gmra.mrb[0].mxu0 %v2174
      %v2271 = vpop.f32.mrb[0].mxu0
      %v2272 = vadd.f32 0.0, %v2271
      %v2273 = vpop.f32.mrb[0].mxu0
      %v2274 = vpop.f32.mrb[0].mxu0
      %v2275 = vadd.f32 0.0, %v2274
      %v2276 = vpop.f32.mrb[0].mxu0
      %2277 = vmatprep.mubr.bf16.mxu0 0
      %2278 = vmatmul.mubr.bf16.gmra.mrb[0].mxu0 %v2175
      %v2279 = vpop.f32.mrb[0].mxu0
      %v2280 = vadd.f32 0.0, %v2279
      %v2281 = vpop.f32.mrb[0].mxu0
      %v2282 = vpop.f32.mrb[0].mxu0
      %v2283 = vadd.f32 0.0, %v2282
      %v2284 = vpop.f32.mrb[0].mxu0
      %2285 = vmatprep.mubr.bf16.mxu0 0
      %2286 = vmatmul.mubr.bf16.gmra.mrb[0].mxu0 %v2176
      %v2287 = vpop.f32.mrb[0].mxu0
      %v2288 = vadd.f32 0.0, %v2287
      %v2289 = vpop.f32.mrb[0].mxu0
      %v2290 = vpop.f32.mrb[0].mxu0
      %v2291 = vadd.f32 0.0, %v2290
      %v2292 = vpop.f32.mrb[0].mxu0
      %2293 = vdwg.mxu0
      %v2294 = vadd.f32 %v2146, %v2264
      %v2295 = vadd.f32 %v2147, %v2267
      %v2296 = vadd.f32 %v2148, %v2272
      %v2297 = vadd.f32 %v2149, %v2275
      %v2298 = vadd.f32 %v2150, %v2280
      %v2299 = vadd.f32 %v2151, %v2283
      %v2300 = vadd.f32 %v2152, %v2288
      %v2301 = vadd.f32 %v2153, %v2291
      %s2302 = scalar_lea.vmem %s2, 448
      %v2303 = vld [vmem:[%s2302] sm:$0xf]
      %v2304 = vld [vmem:[%s2302 + $0x4] sm:$0xf]
      %v2305 = vld [vmem:[%s2302 + $0x8] sm:$0xf]
      %v2306 = vld [vmem:[%s2302 + $0xc] sm:$0xf]
      %v2307 = vld [vmem:[%s2302 + $0x10] sm:$0xf]
      %v2308 = vld [vmem:[%s2302 + $0x14] sm:$0xf]
      %v2309 = vld [vmem:[%s2302 + $0x18] sm:$0xf]
      %v2310 = vld [vmem:[%s2302 + $0x1c] sm:$0xf]
      %v2311 = vld [vmem:[%s2302 + $0x20] sm:$0xf]
      %v2312 = vld [vmem:[%s2302 + $0x24] sm:$0xf]
      %v2313 = vld [vmem:[%s2302 + $0x28] sm:$0xf]
      %v2314 = vld [vmem:[%s2302 + $0x2c] sm:$0xf]
      %v2315 = vld [vmem:[%s2302 + $0x30] sm:$0xf]
      %v2316 = vld [vmem:[%s2302 + $0x34] sm:$0xf]
      %v2317 = vld [vmem:[%s2302 + $0x38] sm:$0xf]
      %v2318 = vld [vmem:[%s2302 + $0x3c] sm:$0xf]
      %v2320 = vunpack.c.l.b16 %v625
      %v2321 = vpack.c.b16 %v983, %v982
      %v2322 = vpack.c.b16 %v985, %v984
      %v2323 = vpack.c.b16 %v987, %v986
      %v2324 = vpack.c.b16 %v2320, %v988
      %v2345 = vunpack.c.l.b16 %v2303
      %v2346 = vunpack.c.l.b16 %v2304
      %v2347 = vunpack.c.l.b16 %v2305
      %v2348 = vunpack.c.l.b16 %v2306
      %v2349 = vunpack.c.l.b16 %v2307
      %v2350 = vunpack.c.l.b16 %v2308
      %v2351 = vunpack.c.l.b16 %v2309
      %v2352 = vunpack.c.l.b16 %v2310
      %v2353 = vunpack.c.l.b16 %v2311
      %v2354 = vunpack.c.l.b16 %v2312
      %v2355 = vunpack.c.l.b16 %v2313
      %v2356 = vunpack.c.l.b16 %v2314
      %v2357 = vunpack.c.l.b16 %v2315
      %v2358 = vunpack.c.l.b16 %v2316
      %v2359 = vunpack.c.l.b16 %v2317
      %v2360 = vunpack.c.l.b16 %v2318
      %v2361 = vpack.c.b16 %v2346, %v2345
      %v2362 = vpack.c.b16 %v2348, %v2347
      %v2363 = vpack.c.b16 %v2350, %v2349
      %v2364 = vpack.c.b16 %v2352, %v2351
      %v2365 = vpack.c.b16 %v2354, %v2353
      %v2366 = vpack.c.b16 %v2356, %v2355
      %v2367 = vpack.c.b16 %v2358, %v2357
      %v2368 = vpack.c.b16 %v2360, %v2359
      %2377 = vmatprep.subr.bf16.mxu0 0
      %2378 = vmatpush1.bf16.msra.mxu0 %v2361
      %2379 = vmatprep.subr.bf16.mxu0 0
      %2380 = vmatpush1.bf16.msra.mxu0 %v2362
      %2381 = vmatprep.subr.bf16.mxu0 0
      %2382 = vmatpush1.bf16.msra.mxu0 %v2363
      %2383 = vmatprep.subr.bf16.mxu0 0
      %2384 = vmatpush1.bf16.msra.mxu0 %v2364
      %2385 = vmatprep.subr.bf16.mxu0 0
      %2386 = vmatpush1.bf16.msra.mxu0 %v2365
      %2387 = vmatprep.subr.bf16.mxu0 0
      %2388 = vmatpush1.bf16.msra.mxu0 %v2366
      %2389 = vmatprep.subr.bf16.mxu0 0
      %2390 = vmatpush1.bf16.msra.mxu0 %v2367
      %2391 = vmatprep.subr.bf16.mxu0 0
      %2392 = vmatpush1.bf16.msra.mxu0 %v2368
      %2393 = vmatprep.subr.bf16.mxu0 0
      %2394 = vmatpush1.bf16.msra.mxu0 0
      %2395 = vmatprep.subr.bf16.mxu0 0
      %2396 = vmatpush1.bf16.msra.mxu0 0
      %2397 = vmatprep.subr.bf16.mxu0 0
      %2398 = vmatpush1.bf16.msra.mxu0 0
      %2399 = vmatprep.subr.bf16.mxu0 0
      %2400 = vmatpush1.bf16.msra.mxu0 0
      %2401 = vmatprep.subr.bf16.mxu0 0
      %2402 = vmatpush1.bf16.msra.mxu0 0
      %2403 = vmatprep.subr.bf16.mxu0 0
      %2404 = vmatpush1.bf16.msra.mxu0 0
      %2405 = vmatprep.subr.bf16.mxu0 0
      %2406 = vmatpush1.bf16.msra.mxu0 0
      %2407 = vmatprep.subr.bf16.mxu0 0
      %2408 = vmatpush1.bf16.msra.mxu0 0
      %2409 = vmatprep.mubr.bf16.mxu0 0
      %2410 = vmatmul.mubr.bf16.gmra.mrb[0].mxu0 %v2321
      %v2411 = vpop.f32.mrb[0].mxu0
      %v2412 = vadd.f32 0.0, %v2411
      %v2413 = vpop.f32.mrb[0].mxu0
      %v2414 = vpop.f32.mrb[0].mxu0
      %v2415 = vadd.f32 0.0, %v2414
      %v2416 = vpop.f32.mrb[0].mxu0
      %2417 = vmatprep.mubr.bf16.mxu0 0
      %2418 = vmatmul.mubr.bf16.gmra.mrb[0].mxu0 %v2322
      %v2419 = vpop.f32.mrb[0].mxu0
      %v2420 = vadd.f32 0.0, %v2419
      %v2421 = vpop.f32.mrb[0].mxu0
      %v2422 = vpop.f32.mrb[0].mxu0
      %v2423 = vadd.f32 0.0, %v2422
      %v2424 = vpop.f32.mrb[0].mxu0
      %2425 = vmatprep.mubr.bf16.mxu0 0
      %2426 = vmatmul.mubr.bf16.gmra.mrb[0].mxu0 %v2323
      %v2427 = vpop.f32.mrb[0].mxu0
      %v2428 = vadd.f32 0.0, %v2427
      %v2429 = vpop.f32.mrb[0].mxu0
      %v2430 = vpop.f32.mrb[0].mxu0
      %v2431 = vadd.f32 0.0, %v2430
      %v2432 = vpop.f32.mrb[0].mxu0
      %2433 = vmatprep.mubr.bf16.mxu0 0
      %2434 = vmatmul.mubr.bf16.gmra.mrb[0].mxu0 %v2324
      %v2435 = vpop.f32.mrb[0].mxu0
      %v2436 = vadd.f32 0.0, %v2435
      %v2437 = vpop.f32.mrb[0].mxu0
      %v2438 = vpop.f32.mrb[0].mxu0
      %v2439 = vadd.f32 0.0, %v2438
      %v2440 = vpop.f32.mrb[0].mxu0
      %2441 = vdwg.mxu0
      %v2442 = vadd.f32 %v2294, %v2412
      %v2443 = vadd.f32 %v2295, %v2415
      %v2444 = vadd.f32 %v2296, %v2420
      %v2445 = vadd.f32 %v2297, %v2423
      %v2446 = vadd.f32 %v2298, %v2428
      %v2447 = vadd.f32 %v2299, %v2431
      %v2448 = vadd.f32 %v2300, %v2436
      %v2449 = vadd.f32 %v2301, %v2439
      %v2450 = vunpack.c.h.b16 %v451
      %v2451 = vpack.c.b16 %v2172, %v2172
      %v2452 = vpack.c.b16 %v2450, %v2450
      %v2454 = vshrl.u32 %v2451, 16
      %v2456 = vrot.slane %v2454, 4
      %v2457 = vshll.u32 %v2451, 16
      %v2459 = vrot.slane %v2457, 5
      %v2460 = vor.u32 %v2456, %v2459
      %v2461 = vrot.slane %v2460, 4
      %v2463 = vshll.u32 %v2452, 16
      %v2465 = vrot.slane %v2463, 5
      %v2466 = vsel %vm1273, %v2461, %v2465
      %s2467 = scalar_lea.vmem %s2, 512
      %v2468 = vld [vmem:[%s2467] sm:$0xf]
      %v2469 = vld [vmem:[%s2467 + $0x4] sm:$0xf]
      %v2470 = vld [vmem:[%s2467 + $0x8] sm:$0xf]
      %v2471 = vld [vmem:[%s2467 + $0xc] sm:$0xf]
      %v2472 = vld [vmem:[%s2467 + $0x10] sm:$0xf]
      %v2473 = vld [vmem:[%s2467 + $0x14] sm:$0xf]
      %v2474 = vld [vmem:[%s2467 + $0x18] sm:$0xf]
      %v2475 = vld [vmem:[%s2467 + $0x1c] sm:$0xf]
      %v2476 = vld [vmem:[%s2467 + $0x20] sm:$0xf]
      %v2477 = vld [vmem:[%s2467 + $0x24] sm:$0xf]
      %v2478 = vld [vmem:[%s2467 + $0x28] sm:$0xf]
      %v2479 = vld [vmem:[%s2467 + $0x2c] sm:$0xf]
      %v2480 = vld [vmem:[%s2467 + $0x30] sm:$0xf]
      %v2481 = vld [vmem:[%s2467 + $0x34] sm:$0xf]
      %v2482 = vld [vmem:[%s2467 + $0x38] sm:$0xf]
      %v2483 = vld [vmem:[%s2467 + $0x3c] sm:$0xf]
      %v2484 = vunpack.c.l.b16 %v2466
      %v2485 = vpack.c.b16 %v1405, %v1404
      %v2486 = vpack.c.b16 %v1407, %v1406
      %v2487 = vpack.c.b16 %v1409, %v1408
      %v2488 = vpack.c.b16 %v2484, %v1410
      %v2509 = vunpack.c.l.b16 %v2468
      %v2510 = vunpack.c.l.b16 %v2469
      %v2511 = vunpack.c.l.b16 %v2470
      %v2512 = vunpack.c.l.b16 %v2471
      %v2513 = vunpack.c.l.b16 %v2472
      %v2514 = vunpack.c.l.b16 %v2473
      %v2515 = vunpack.c.l.b16 %v2474
      %v2516 = vunpack.c.l.b16 %v2475
      %v2517 = vunpack.c.l.b16 %v2476
      %v2518 = vunpack.c.l.b16 %v2477
      %v2519 = vunpack.c.l.b16 %v2478
      %v2520 = vunpack.c.l.b16 %v2479
      %v2521 = vunpack.c.l.b16 %v2480
      %v2522 = vunpack.c.l.b16 %v2481
      %v2523 = vunpack.c.l.b16 %v2482
      %v2524 = vunpack.c.l.b16 %v2483
      %v2525 = vpack.c.b16 %v2510, %v2509
      %v2526 = vpack.c.b16 %v2512, %v2511
      %v2527 = vpack.c.b16 %v2514, %v2513
      %v2528 = vpack.c.b16 %v2516, %v2515
      %v2529 = vpack.c.b16 %v2518, %v2517
      %v2530 = vpack.c.b16 %v2520, %v2519
      %v2531 = vpack.c.b16 %v2522, %v2521
      %v2532 = vpack.c.b16 %v2524, %v2523
      %2541 = vmatprep.subr.bf16.mxu0 0
      %2542 = vmatpush1.bf16.msra.mxu0 %v2525
      %2543 = vmatprep.subr.bf16.mxu0 0
      %2544 = vmatpush1.bf16.msra.mxu0 %v2526
      %2545 = vmatprep.subr.bf16.mxu0 0
      %2546 = vmatpush1.bf16.msra.mxu0 %v2527
      %2547 = vmatprep.subr.bf16.mxu0 0
      %2548 = vmatpush1.bf16.msra.mxu0 %v2528
      %2549 = vmatprep.subr.bf16.mxu0 0
      %2550 = vmatpush1.bf16.msra.mxu0 %v2529
      %2551 = vmatprep.subr.bf16.mxu0 0
      %2552 = vmatpush1.bf16.msra.mxu0 %v2530
      %2553 = vmatprep.subr.bf16.mxu0 0
      %2554 = vmatpush1.bf16.msra.mxu0 %v2531
      %2555 = vmatprep.subr.bf16.mxu0 0
      %2556 = vmatpush1.bf16.msra.mxu0 %v2532
      %2557 = vmatprep.subr.bf16.mxu0 0
      %2558 = vmatpush1.bf16.msra.mxu0 0
      %2559 = vmatprep.subr.bf16.mxu0 0
      %2560 = vmatpush1.bf16.msra.mxu0 0
      %2561 = vmatprep.subr.bf16.mxu0 0
      %2562 = vmatpush1.bf16.msra.mxu0 0
      %2563 = vmatprep.subr.bf16.mxu0 0
      %2564 = vmatpush1.bf16.msra.mxu0 0
      %2565 = vmatprep.subr.bf16.mxu0 0
      %2566 = vmatpush1.bf16.msra.mxu0 0
      %2567 = vmatprep.subr.bf16.mxu0 0
      %2568 = vmatpush1.bf16.msra.mxu0 0
      %2569 = vmatprep.subr.bf16.mxu0 0
      %2570 = vmatpush1.bf16.msra.mxu0 0
      %2571 = vmatprep.subr.bf16.mxu0 0
      %2572 = vmatpush1.bf16.msra.mxu0 0
      %2573 = vmatprep.mubr.bf16.mxu0 0
      %2574 = vmatmul.mubr.bf16.gmra.mrb[0].mxu0 %v2485
      %v2575 = vpop.f32.mrb[0].mxu0
      %v2576 = vadd.f32 0.0, %v2575
      %v2577 = vpop.f32.mrb[0].mxu0
      %v2578 = vpop.f32.mrb[0].mxu0
      %v2579 = vadd.f32 0.0, %v2578
      %v2580 = vpop.f32.mrb[0].mxu0
      %2581 = vmatprep.mubr.bf16.mxu0 0
      %2582 = vmatmul.mubr.bf16.gmra.mrb[0].mxu0 %v2486
      %v2583 = vpop.f32.mrb[0].mxu0
      %v2584 = vadd.f32 0.0, %v2583
      %v2585 = vpop.f32.mrb[0].mxu0
      %v2586 = vpop.f32.mrb[0].mxu0
      %v2587 = vadd.f32 0.0, %v2586
      %v2588 = vpop.f32.mrb[0].mxu0
      %2589 = vmatprep.mubr.bf16.mxu0 0
      %2590 = vmatmul.mubr.bf16.gmra.mrb[0].mxu0 %v2487
      %v2591 = vpop.f32.mrb[0].mxu0
      %v2592 = vadd.f32 0.0, %v2591
      %v2593 = vpop.f32.mrb[0].mxu0
      %v2594 = vpop.f32.mrb[0].mxu0
      %v2595 = vadd.f32 0.0, %v2594
      %v2596 = vpop.f32.mrb[0].mxu0
      %2597 = vmatprep.mubr.bf16.mxu0 0
      %2598 = vmatmul.mubr.bf16.gmra.mrb[0].mxu0 %v2488
      %v2599 = vpop.f32.mrb[0].mxu0
      %v2600 = vadd.f32 0.0, %v2599
      %v2601 = vpop.f32.mrb[0].mxu0
      %v2602 = vpop.f32.mrb[0].mxu0
      %v2603 = vadd.f32 0.0, %v2602
      %v2604 = vpop.f32.mrb[0].mxu0
      %2605 = vdwg.mxu0
      %v2606 = vadd.f32 %v2442, %v2576
      %v2607 = vadd.f32 %v2443, %v2579
      %v2608 = vadd.f32 %v2444, %v2584
      %v2609 = vadd.f32 %v2445, %v2587
      %v2610 = vadd.f32 %v2446, %v2592
      %v2611 = vadd.f32 %v2447, %v2595
      %v2612 = vadd.f32 %v2448, %v2600
      %v2613 = vadd.f32 %v2449, %v2603
      %v2614 = vadd.f32 %v2606, %v2607
      %v2615 = vadd.f32 %v2614, %v2608
      %v2616 = vadd.f32 %v2615, %v2609
      %v2617 = vadd.f32 %v2616, %v2610
      %v2618 = vadd.f32 %v2617, %v2611
      %v2619 = vadd.f32 %v2618, %v2612
      %v2620 = vadd.f32 %v2619, %v2613
      %v2621 = vrot.slane %v2620, 4
      %v2622 = vadd.f32 %v2620, %v2621
      %v2623 = vrot.slane %v2622, 2
      %v2624 = vadd.f32 %v2622, %v2623
      %v2625 = vrot.slane %v2624, 1
      %v2626 = vadd.f32 %v2624, %v2625
      %v2627 = vmul.f32 %v2606, %v2606
      %v2628 = vmul.f32 %v2607, %v2607
      %v2629 = vmul.f32 %v2608, %v2608
      %v2630 = vmul.f32 %v2609, %v2609
      %v2631 = vmul.f32 %v2610, %v2610
      %v2632 = vmul.f32 %v2611, %v2611
      %v2633 = vmul.f32 %v2612, %v2612
      %v2634 = vmul.f32 %v2613, %v2613
      %v2635 = vadd.f32 %v2627, %v2628
      %v2636 = vadd.f32 %v2635, %v2629
      %v2637 = vadd.f32 %v2636, %v2630
      %v2638 = vadd.f32 %v2637, %v2631
      %v2639 = vadd.f32 %v2638, %v2632
      %v2640 = vadd.f32 %v2639, %v2633
      %v2641 = vadd.f32 %v2640, %v2634
      %v2642 = vrot.slane %v2641, 4
      %v2643 = vadd.f32 %v2641, %v2642
      %v2644 = vrot.slane %v2643, 2
      %v2645 = vadd.f32 %v2643, %v2644
      %v2646 = vrot.slane %v2645, 1
      %v2647 = vadd.f32 %v2645, %v2646
      %vm2648 = vcmask 1040384
      %v2649 = vsel %vm2648, %v2626, %v2647
      %2650 = vst [vmem:[%s246] sm:$0x3] %v2649
      %v2651 = vpack.c.bf16 %v2606, %v2606
      %v2652 = vpack.c.bf16 %v2607, %v2607
      %v2653 = vpack.c.bf16 %v2608, %v2608
      %v2654 = vpack.c.bf16 %v2609, %v2609
      %v2655 = vpack.c.bf16 %v2610, %v2610
      %v2656 = vpack.c.bf16 %v2611, %v2611
      %v2657 = vpack.c.bf16 %v2612, %v2612
      %v2658 = vpack.c.bf16 %v2613, %v2613
      %2659 = vst [vmem:[%s238] sm:$0xf] %v2651
      %2660 = vst [vmem:[%s238 + $0x4] sm:$0xf] %v2652
      %2661 = vst [vmem:[%s238 + $0x8] sm:$0xf] %v2653
      %2662 = vst [vmem:[%s238 + $0xc] sm:$0xf] %v2654
      %2663 = vst [vmem:[%s238 + $0x10] sm:$0xf] %v2655
      %2664 = vst [vmem:[%s238 + $0x14] sm:$0xf] %v2656
      %2665 = vst [vmem:[%s238 + $0x18] sm:$0xf] %v2657
      %2666 = vst [vmem:[%s238 + $0x1c] sm:$0xf] %v2658
      %s2667 = smul.u32 8, %s21
      %p2668 = scmp.lt.s32.totalorder %s20, 1
      %s2669 = scalar_select %p2668, %s20, 1
      %p2670 = scmp.lt.s32.totalorder %s2667, 7
      %s2671 = scalar_select %p2670, %s2667, 7
      %s2672 = smul.addr %s2669, 8
      %s2673 = sadd.s32 %s2671, %s2672
      %s2674 = smul.addr %s2673, 4
      %s2675 = scalar_lea.vmem %s3, %s2674
      %p2676 = scmp.lt.s32.totalorder %s20, 1
      %s2677 = scalar_select %p2676, %s20, 1
      %p2678 = scmp.lt.s32.totalorder %s21, 0
      %s2679 = scalar_select %p2678, %s21, 0
      %s2680 = sadd.s32 %s2679, %s2677
      %s2681 = smul.addr %s2680, 2
      %s2682 = scalar_lea.vmem %s4, %s2681
      // Predicated region
      $region33: #{resblock_down.4} parent=31 // pred_check
        %p2683 = pneg %p118
      $region34: #{resblock_down.4} parent=31 // pred_check_branch
        %2685 = sbr.rel (%p2683) target = $region36
      $region35: #{resblock_down.4} parent=31 // pred_region
        %s2686 = smul.u32 8, %s21
      $region36: #{resblock_down.4} parent=31 // pred_fallthru
        _
      // Predicated region
      $region37: #{resblock_down.4} parent=31 // pred_check
        %p2687 = pneg %p146
      $region38: #{resblock_down.4} parent=31 // pred_check_branch
        %2689 = sbr.rel (%p2687) target = $region40
      $region39: #{resblock_down.4} parent=31 // pred_region
        _
      $region40: #{resblock_down.4} parent=31 // pred_fallthru
        _
    $region32: #{resblock_down.4} parent=5 // pred_fallthru
      _
    %p2690 = scmp.le.s32.totalorder 2, %s11
    // Predicated region
    $region41: #{resblock_down.4} parent=5 // pred_check
      %p2691 = pneg %p2690
    $region42: #{resblock_down.4} parent=5 // pred_check_branch
      %2693 = sbr.rel (%p2691) target = $region44
    $region43: #{resblock_down.4} parent=5 // pred_region
      %s2694 = ssub.s32 %s11, 2
      // Predicated region
      $region45: #{resblock_down.4} parent=43 // pred_check
        %p2695 = pneg %p124
      $region46: #{resblock_down.4} parent=43 // pred_check_branch
        %2697 = sbr.rel (%p2695) target = $region48
      $region47: #{resblock_down.4} parent=43 // pred_region
        %s2698 = smul.u32 8, %s23
        %p2699 = scmp.lt.s32.totalorder %s22, 1
        %s2700 = scalar_select %p2699, %s22, 1
        %p2701 = scmp.lt.s32.totalorder %s2698, 7
        %s2702 = scalar_select %p2701, %s2698, 7
        %s2703 = smul.addr %s2700, 8
        %s2704 = sadd.s32 %s2702, %s2703
        %s2705 = smul.addr %s2704, 4
        %s2706 = scalar_lea.vmem %s3, %s2705
      $region48: #{resblock_down.4} parent=43 // pred_fallthru
        _
      // Predicated region
      $region49: #{resblock_down.4} parent=43 // pred_check
        %p2707 = pneg %p152
      $region50: #{resblock_down.4} parent=43 // pred_check_branch
        %2709 = sbr.rel (%p2707) target = $region52
      $region51: #{resblock_down.4} parent=43 // pred_region
        %p2710 = scmp.lt.s32.totalorder %s22, 1
        %s2711 = scalar_select %p2710, %s22, 1
        %p2712 = scmp.lt.s32.totalorder %s23, 0
        %s2713 = scalar_select %p2712, %s23, 0
        %s2714 = sadd.s32 %s2713, %s2711
        %s2715 = smul.addr %s2714, 2
        %s2716 = scalar_lea.vmem %s4, %s2715
      $region52: #{resblock_down.4} parent=43 // pred_fallthru
        _
    $region44: #{resblock_down.4} parent=5 // pred_fallthru
      _
  $region6: #{resblock_down.4} parent=0 // loop_footer
    %s15 = sadd.s32 1, %s11
  $region7: #{resblock_down.4} parent=0 // loop_footer_branch
    %10 = sbr.rel target = $region3
  $region8: #{resblock_down.4} parent=0 // loop_exit
    _

// kernel: resblock_down.5
$region0: #{resblock_down.5}
  #allocation0 [shape = 'u32[]', space=smem, size = 0x4, offset = 0x4, fixed_abs, tag = 'smem constant byte address 0x4 - core index']
  #allocation1 [shape = 'u32[144,128]{1,0:T(1,128)}', space=vmem, size = 0x12000, scoped, tag = 'internal scratch']
  #allocation2 [shape = 'bf16[10,10,128]{2,1,0:T(8,128)(2,1)}', space=vmem, size = 0xa000, scoped, tag = 'scratch operand']
  %s0 = inlined_call_operand.vmem [shape: bf16[2,8,8,128], index: 0, kind: input, shape index: {}, may-alias: {0,1,2}]
  %s1 = inlined_call_operand.vmem [shape: bf16[2,8,8,128], index: 1, kind: input, shape index: {}, may-alias: {0,1,2}]
  %s2 = inlined_call_operand.vmem [shape: bf16[2,8,8,128], index: 2, kind: input, shape index: {}, may-alias: {0,1,2}]
  %s3 = inlined_call_operand.vmem [shape: f32[2,128], index: 3, kind: input, shape index: {}]
  %s4 = inlined_call_operand.vmem [shape: bf16[9,128,128], index: 4, kind: input, shape index: {}]
  %s5 = inlined_call_operand.vmem [shape: bf16[2,4,9,9,128], index: 5, kind: input, shape index: {}]
  %s6 = inlined_call_operand.vmem [shape: bf16[128,128], index: 6, kind: input, shape index: {}]
  %s7 = inlined_call_operand.hbm [shape: f32[2,8,8,128], index: 7, kind: output, shape index: {}]
  %s8 = sld [smem:[#allocation0]]
  $region61: #{resblock_down.5} parent=0
    _
  %s10 = ssub.s32 1, %s8
  %s11 = scalar_select 0, %s10, %s8
  $region1: #{resblock_down.5} parent=0
    #allocation3 [shape = 'u8[65536]{0}', space=vmem, size = 0x10000, scoped, tag = 'output window, operand 0']
    #allocation4 [shape = 's32[2]{0}', space=sflag, size = 0x8, scoped, tag = 'scoped memory for resblock_down.5']
    %12 = vsyncpa [#allocation4], 0
    %s13 = scalar_lea.sflag [#allocation4], 1
    %14 = vsyncpa %s13, 0
    loop: start=0, step=1, limit=4
    $region2: #{resblock_down.5} parent=1 // loop_pre_header
      _
    $region3: #{resblock_down.5} parent=1 // loop_header
      %s16 = sphi 0, %s20
      %p17 = scmp.ge.s32.totalorder %s16, 4
      %s23 = sphi 0, %s35
      %s24 = sphi 0, %s31
      %s25 = sphi 0, %s23
      %s26 = sphi 0, %s24
      %s27 = sphi 0, %s25
      %s28 = sphi 0, %s26
      %s40 = sphi 0, %s42
      %s43 = sphi 0, %s40
      %s44 = sphi 0, %s43
      %s60 = sphi 0, %s44
      %s76 = sphi 0, %s78
      %s79 = sphi 0, %s76
      %s80 = sphi 0, %s79
      %s96 = sphi 0, %s80
      %s112 = sphi 0, %s114
      %s115 = sphi 0, %s112
      %s116 = sphi 0, %s115
      %s132 = sphi 0, %s116
      %s136 = sphi 0, %s136
      %s138 = sphi 0, %s136
      %s139 = sphi 0, %s138
      %s153 = sphi 0, %s139
      %s157 = sphi 0, %s157
      %s159 = sphi 0, %s157
      %s160 = sphi 0, %s159
      %s174 = sphi 0, %s160
      %s182 = sphi 0, %s184
      %s185 = sphi 0, %s182
      %s186 = sphi 0, %s185
      %s202 = sphi 0, %s186
      %s206 = sphi 0, %s206
      %s208 = sphi 0, %s206
      %s209 = sphi 0, %s208
      %s223 = sphi 0, %s209
      %s231 = sphi 0, %s233
      %s234 = sphi 0, %s231
      %s235 = sphi 0, %s234
      %s251 = sphi 0, %s235
    $region4: #{resblock_down.5} parent=1 // loop_header_branch
      %19 = sbr.rel (%p17) target = $region8
    $region5: #{resblock_down.5} parent=1 // loop_body
      %s21 = ssub.s32 %s16, 1
      %s22 = ssub.s32 %s16, 2
      %s29 = sadd.s32 1, %s24
      %p30 = scmp.ge.s32.totalorder %s29, 1
      %s31 = scalar_select %p30, 0, %s29
      %s32 = sadd.s32 1, %s23
      %s33 = scalar_select %p30, %s32, %s23
      %p34 = scmp.ge.s32.totalorder %s33, 2
      %s35 = scalar_select %p34, 0, %s33
      %s36 = ssub.s32 %s23, %s35
      %s37 = ssub.s32 %s24, %s31
      %s38 = sor.u32 %s36, %s37
      %p39 = scmp.eq.s32.totalorder %s38, 0
      %s41 = sadd.s32 %s40, 1
      %s42 = scalar_select %p39, %s40, %s41
      %p45 = pneg %p39
      %p46 = scmp.eq.s32.totalorder %s16, 1
      %p47 = por %p45, %p46
      %p48 = scmp.ne.s32.totalorder %s40, %s43
      %p49 = scmp.eq.s32.totalorder %s16, 0
      %p50 = por %p48, %p49
      %p51 = scmp.ne.s32.totalorder %s40, %s43
      %p52 = scmp.eq.s32.totalorder %s21, 1
      %p53 = por %p51, %p52
      %p54 = scmp.ne.s32.totalorder %s43, %s44
      %p55 = scmp.eq.s32.totalorder %s21, 0
      %p56 = por %p54, %p55
      %p57 = scmp.ne.s32.totalorder %s43, %s44
      %p58 = scmp.eq.s32.totalorder %s22, 1
      %p59 = por %p57, %p58
      %p61 = scmp.ne.s32.totalorder %s44, %s60
      %p62 = scmp.eq.s32.totalorder %s22, 0
      %p63 = por %p61, %p62
      %s64 = smul.u32 %s24, 8
      %s65 = ssub.s32 %s64, 1
      %p66 = scmp.gt.s32.totalorder %s65, 0
      %s67 = scalar_select %p66, %s65, 0
      %s68 = smul.u32 %s31, 8
      %s69 = ssub.s32 %s68, 1
      %p70 = scmp.gt.s32.totalorder %s69, 0
      %s71 = scalar_select %p70, %s69, 0
      %s72 = ssub.s32 %s23, %s35
      %s73 = ssub.s32 %s67, %s71
      %s74 = sor.u32 %s72, %s73
      %p75 = scmp.eq.s32.totalorder %s74, 0
      %s77 = sadd.s32 %s76, 1
      %s78 = scalar_select %p75, %s76, %s77
      %p81 = pneg %p75
      %p82 = scmp.eq.s32.totalorder %s16, 1
      %p83 = por %p81, %p82
      %p84 = scmp.ne.s32.totalorder %s76, %s79
      %p85 = scmp.eq.s32.totalorder %s16, 0
      %p86 = por %p84, %p85
      %p87 = scmp.ne.s32.totalorder %s76, %s79
      %p88 = scmp.eq.s32.totalorder %s21, 1
      %p89 = por %p87, %p88
      %p90 = scmp.ne.s32.totalorder %s79, %s80
      %p91 = scmp.eq.s32.totalorder %s21, 0
      %p92 = por %p90, %p91
      %p93 = scmp.ne.s32.totalorder %s79, %s80
      %p94 = scmp.eq.s32.totalorder %s22, 1
      %p95 = por %p93, %p94
      %p97 = scmp.ne.s32.totalorder %s80, %s96
      %p98 = scmp.eq.s32.totalorder %s22, 0
      %p99 = por %p97, %p98
      %s100 = smul.u32 %s24, 8
      %s101 = sadd.s32 %s100, 8
      %p102 = scmp.lt.s32.totalorder %s101, 7
      %s103 = scalar_select %p102, %s101, 7
      %s104 = smul.u32 %s31, 8
      %s105 = sadd.s32 %s104, 8
      %p106 = scmp.lt.s32.totalorder %s105, 7
      %s107 = scalar_select %p106, %s105, 7
      %s108 = ssub.s32 %s23, %s35
      %s109 = ssub.s32 %s103, %s107
      %s110 = sor.u32 %s108, %s109
      %p111 = scmp.eq.s32.totalorder %s110, 0
      %s113 = sadd.s32 %s112, 1
      %s114 = scalar_select %p111, %s112, %s113
      %p117 = pneg %p111
      %p118 = scmp.eq.s32.totalorder %s16, 1
      %p119 = por %p117, %p118
      %p120 = scmp.ne.s32.totalorder %s112, %s115
      %p121 = scmp.eq.s32.totalorder %s16, 0
      %p122 = por %p120, %p121
      %p123 = scmp.ne.s32.totalorder %s112, %s115
      %p124 = scmp.eq.s32.totalorder %s21, 1
      %p125 = por %p123, %p124
      %p126 = scmp.ne.s32.totalorder %s115, %s116
      %p127 = scmp.eq.s32.totalorder %s21, 0
      %p128 = por %p126, %p127
      %p129 = scmp.ne.s32.totalorder %s115, %s116
      %p130 = scmp.eq.s32.totalorder %s22, 1
      %p131 = por %p129, %p130
      %p133 = scmp.ne.s32.totalorder %s116, %s132
      %p134 = scmp.eq.s32.totalorder %s22, 0
      %p135 = por %p133, %p134
      %s137 = sadd.s32 %s136, 1
      %p140 = scmp.eq.s32.totalorder %s16, 1
      %p141 = scmp.ne.s32.totalorder %s136, %s138
      %p142 = scmp.eq.s32.totalorder %s16, 0
      %p143 = por %p141, %p142
      %p144 = scmp.ne.s32.totalorder %s136, %s138
      %p145 = scmp.eq.s32.totalorder %s21, 1
      %p146 = por %p144, %p145
      %p147 = scmp.ne.s32.totalorder %s138, %s139
      %p148 = scmp.eq.s32.totalorder %s21, 0
      %p149 = por %p147, %p148
      %p150 = scmp.ne.s32.totalorder %s138, %s139
      %p151 = scmp.eq.s32.totalorder %s22, 1
      %p152 = por %p150, %p151
      %p154 = scmp.ne.s32.totalorder %s139, %s153
      %p155 = scmp.eq.s32.totalorder %s22, 0
      %p156 = por %p154, %p155
      %s158 = sadd.s32 %s157, 1
      %p161 = scmp.eq.s32.totalorder %s16, 1
      %p162 = scmp.ne.s32.totalorder %s157, %s159
      %p163 = scmp.eq.s32.totalorder %s16, 0
      %p164 = por %p162, %p163
      %p165 = scmp.ne.s32.totalorder %s157, %s159
      %p166 = scmp.eq.s32.totalorder %s21, 1
      %p167 = por %p165, %p166
      %p168 = scmp.ne.s32.totalorder %s159, %s160
      %p169 = scmp.eq.s32.totalorder %s21, 0
      %p170 = por %p168, %p169
      %p171 = scmp.ne.s32.totalorder %s159, %s160
      %p172 = scmp.eq.s32.totalorder %s22, 1
      %p173 = por %p171, %p172
      %p175 = scmp.ne.s32.totalorder %s160, %s174
      %p176 = scmp.eq.s32.totalorder %s22, 0
      %p177 = por %p175, %p176
      %s178 = sadd.s32 %s23, %s24
      %s179 = sadd.s32 %s35, %s31
      %s180 = ssub.s32 %s178, %s179
      %p181 = scmp.eq.s32.totalorder %s180, 0
      %s183 = sadd.s32 %s182, 1
      %s184 = scalar_select %p181, %s182, %s183
      %p187 = pneg %p181
      %p188 = scmp.eq.s32.totalorder %s16, 1
      %p189 = por %p187, %p188
      %p190 = scmp.ne.s32.totalorder %s182, %s185
      %p191 = scmp.eq.s32.totalorder %s16, 0
      %p192 = por %p190, %p191
      %p193 = scmp.ne.s32.totalorder %s182, %s185
      %p194 = scmp.eq.s32.totalorder %s21, 1
      %p195 = por %p193, %p194
      %p196 = scmp.ne.s32.totalorder %s185, %s186
      %p197 = scmp.eq.s32.totalorder %s21, 0
      %p198 = por %p196, %p197
      %p199 = scmp.ne.s32.totalorder %s185, %s186
      %p200 = scmp.eq.s32.totalorder %s22, 1
      %p201 = por %p199, %p200
      %p203 = scmp.ne.s32.totalorder %s186, %s202
      %p204 = scmp.eq.s32.totalorder %s22, 0
      %p205 = por %p203, %p204
      %s207 = sadd.s32 %s206, 1
      %p210 = scmp.eq.s32.totalorder %s16, 1
      %p211 = scmp.ne.s32.totalorder %s206, %s208
      %p212 = scmp.eq.s32.totalorder %s16, 0
      %p213 = por %p211, %p212
      %p214 = scmp.ne.s32.totalorder %s206, %s208
      %p215 = scmp.eq.s32.totalorder %s21, 1
      %p216 = por %p214, %p215
      %p217 = scmp.ne.s32.totalorder %s208, %s209
      %p218 = scmp.eq.s32.totalorder %s21, 0
      %p219 = por %p217, %p218
      %p220 = scmp.ne.s32.totalorder %s208, %s209
      %p221 = scmp.eq.s32.totalorder %s22, 1
      %p222 = por %p220, %p221
      %p224 = scmp.ne.s32.totalorder %s209, %s223
      %p225 = scmp.eq.s32.totalorder %s22, 0
      %p226 = por %p224, %p225
      %s227 = ssub.s32 %s23, %s35
      %s228 = ssub.s32 %s24, %s31
      %s229 = sor.u32 %s227, %s228
      %p230 = scmp.eq.s32.totalorder %s229, 0
      %s232 = sadd.s32 %s231, 1
      %s233 = scalar_select %p230, %s231, %s232
      %p236 = pneg %p230
      %p237 = scmp.eq.s32.totalorder %s16, 1
      %p238 = por %p236, %p237
      %p239 = scmp.ne.s32.totalorder %s231, %s234
      %p240 = scmp.eq.s32.totalorder %s16, 0
      %p241 = por %p239, %p240
      %p242 = scmp.ne.s32.totalorder %s231, %s234
      %p243 = scmp.eq.s32.totalorder %s21, 1
      %p244 = por %p242, %p243
      %p245 = scmp.ne.s32.totalorder %s234, %s235
      %p246 = scmp.eq.s32.totalorder %s21, 0
      %p247 = por %p245, %p246
      %p248 = scmp.ne.s32.totalorder %s234, %s235
      %p249 = scmp.eq.s32.totalorder %s22, 1
      %p250 = por %p248, %p249
      %p252 = scmp.ne.s32.totalorder %s235, %s251
      %p253 = scmp.eq.s32.totalorder %s22, 0
      %p254 = por %p252, %p253
      %p255 = scmp.le.s32.totalorder 1, %s16
      %p256 = scmp.lt.s32.totalorder %s16, 3
      %p257 = pnand %p255, %p256
      %p258 = pneg %p257
      // Predicated region
      $region9: #{resblock_down.5} parent=5 // pred_check
        _
      $region10: #{resblock_down.5} parent=5 // pred_check_branch
        %260 = sbr.rel (%p257) target = $region12
      $region11: #{resblock_down.5} parent=5 // pred_region
        %s261 = ssub.s32 %s16, 1
        // Predicated region
        $region13: #{resblock_down.5} parent=11 // pred_check
          %p262 = pneg %p149
        $region14: #{resblock_down.5} parent=11 // pred_check_branch
          %264 = sbr.rel (%p262) target = $region16
        $region15: #{resblock_down.5} parent=11 // pred_region
          _
        $region16: #{resblock_down.5} parent=11 // pred_fallthru
          _
        // Predicated region
        $region17: #{resblock_down.5} parent=11 // pred_check
          %p265 = pneg %p170
        $region18: #{resblock_down.5} parent=11 // pred_check_branch
          %267 = sbr.rel (%p265) target = $region20
        $region19: #{resblock_down.5} parent=11 // pred_region
          _
        $region20: #{resblock_down.5} parent=11 // pred_fallthru
          _
        // Predicated region
        $region21: #{resblock_down.5} parent=11 // pred_check
          %p268 = pneg %p219
        $region22: #{resblock_down.5} parent=11 // pred_check_branch
          %270 = sbr.rel (%p268) target = $region24
        $region23: #{resblock_down.5} parent=11 // pred_region
          _
        $region24: #{resblock_down.5} parent=11 // pred_fallthru
          _
      $region12: #{resblock_down.5} parent=5 // pred_fallthru
        _
      %p271 = scmp.lt.s32.totalorder %s16, 2
      // Predicated region
      $region25: #{resblock_down.5} parent=5 // pred_check
        %p272 = pneg %p271
      $region26: #{resblock_down.5} parent=5 // pred_check_branch
        %274 = sbr.rel (%p272) target = $region28
      $region27: #{resblock_down.5} parent=5 // pred_region
        // Predicated region
        $region29: #{resblock_down.5} parent=27 // pred_check
          %p275 = pneg %p50
        $region30: #{resblock_down.5} parent=27 // pred_check_branch
          %277 = sbr.rel (%p275) target = $region32
        $region31: #{resblock_down.5} parent=27 // pred_region
          %s278 = smul.u32 8, %s24
          %p279 = scmp.lt.s32.totalorder %s23, 1
          %s280 = scalar_select %p279, %s23, 1
          %p281 = scmp.lt.s32.totalorder %s278, 7
          %s282 = scalar_select %p281, %s278, 7
          %s283 = smul.addr %s280, 8
          %s284 = sadd.s32 %s282, %s283
          %s285 = smul.addr %s284, 4
          %s286 = scalar_lea.vmem %s0, %s285
          %s287 = smul.u32 8, %s24
        $region32: #{resblock_down.5} parent=27 // pred_fallthru
          _
        // Predicated region
        $region33: #{resblock_down.5} parent=27 // pred_check
          %p288 = pneg %p86
        $region34: #{resblock_down.5} parent=27 // pred_check_branch
          %290 = sbr.rel (%p288) target = $region36
        $region35: #{resblock_down.5} parent=27 // pred_region
          %s291 = smul.u32 %s24, 8
          %s292 = ssub.s32 %s291, 1
          %p293 = scmp.gt.s32.totalorder %s292, 0
          %s294 = scalar_select %p293, %s292, 0
          %p295 = scmp.lt.s32.totalorder %s23, 1
          %s296 = scalar_select %p295, %s23, 1
          %p297 = scmp.lt.s32.totalorder %s294, 7
          %s298 = scalar_select %p297, %s294, 7
          %s299 = smul.addr %s296, 8
          %s300 = sadd.s32 %s298, %s299
          %s301 = smul.addr %s300, 4
          %s302 = scalar_lea.vmem %s1, %s301
          %s303 = smul.u32 %s24, 8
          %s304 = ssub.s32 %s303, 1
          %p305 = scmp.gt.s32.totalorder %s304, 0
          %s306 = scalar_select %p305, %s304, 0
        $region36: #{resblock_down.5} parent=27 // pred_fallthru
          _
        // Predicated region
        $region37: #{resblock_down.5} parent=27 // pred_check
          %p307 = pneg %p122
        $region38: #{resblock_down.5} parent=27 // pred_check_branch
          %309 = sbr.rel (%p307) target = $region40
        $region39: #{resblock_down.5} parent=27 // pred_region
          %s310 = smul.u32 %s24, 8
          %s311 = sadd.s32 %s310, 8
          %p312 = scmp.lt.s32.totalorder %s311, 7
          %s313 = scalar_select %p312, %s311, 7
          %p314 = scmp.lt.s32.totalorder %s23, 1
          %s315 = scalar_select %p314, %s23, 1
          %p316 = scmp.lt.s32.totalorder %s313, 7
          %s317 = scalar_select %p316, %s313, 7
          %s318 = smul.addr %s315, 8
          %s319 = sadd.s32 %s317, %s318
          %s320 = smul.addr %s319, 4
          %s321 = scalar_lea.vmem %s2, %s320
          %s322 = smul.u32 %s24, 8
          %s323 = sadd.s32 %s322, 8
          %p324 = scmp.lt.s32.totalorder %s323, 7
          %s325 = scalar_select %p324, %s323, 7
        $region40: #{resblock_down.5} parent=27 // pred_fallthru
          _
        // Predicated region
        $region41: #{resblock_down.5} parent=27 // pred_check
          %p326 = pneg %p192
        $region42: #{resblock_down.5} parent=27 // pred_check_branch
          %328 = sbr.rel (%p326) target = $region44
        $region43: #{resblock_down.5} parent=27 // pred_region
          %s329 = sadd.s32 %s23, %s24
          %p330 = scmp.lt.s32.totalorder %s329, 1
          %s331 = scalar_select %p330, %s329, 1
          %s332 = smul.addr %s331, 72
          %s333 = sadd.s32 54, %s332
          %s334 = smul.addr %s333, 4
          %s335 = scalar_lea.vmem %s5, %s334
          %s336 = sadd.s32 %s23, %s24
        $region44: #{resblock_down.5} parent=27 // pred_fallthru
          _
      $region28: #{resblock_down.5} parent=5 // pred_fallthru
        _
      %p337 = scmp.le.s32.totalorder 1, %s16
      %p338 = scmp.lt.s32.totalorder %s16, 3
      %p339 = pnand %p337, %p338
      %p340 = pneg %p339
      // Predicated region
      $region45: #{resblock_down.5} parent=5 // pred_check
        _
      $region46: #{resblock_down.5} parent=5 // pred_check_branch
        %342 = sbr.rel (%p339) target = $region48
      $region47: #{resblock_down.5} parent=5 // pred_region
        %s343 = ssub.s32 %s16, 1
        %s344 = smul.u32 8, %s26
        %p345 = scmp.lt.s32.totalorder %s25, 1
        %s346 = scalar_select %p345, %s25, 1
        %p347 = scmp.lt.s32.totalorder %s344, 7
        %s348 = scalar_select %p347, %s344, 7
        %s349 = smul.addr %s346, 8
        %s350 = sadd.s32 %s348, %s349
        %s351 = smul.addr %s350, 4
        %s352 = scalar_lea.vmem %s0, %s351
        %p353 = pneg %p56
        %p354 = pneg %p53
        %s355 = smul.u32 %s26, 8
        %s356 = ssub.s32 %s355, 1
        %p357 = scmp.gt.s32.totalorder %s356, 0
        %s358 = scalar_select %p357, %s356, 0
        %p359 = scmp.lt.s32.totalorder %s25, 1
        %s360 = scalar_select %p359, %s25, 1
        %p361 = scmp.lt.s32.totalorder %s358, 7
        %s362 = scalar_select %p361, %s358, 7
        %s363 = smul.addr %s360, 8
        %s364 = sadd.s32 %s362, %s363
        %s365 = smul.addr %s364, 4
        %s366 = scalar_lea.vmem %s1, %s365
        %p367 = pneg %p92
        %p368 = pneg %p89
        %s369 = smul.u32 %s26, 8
        %s370 = sadd.s32 %s369, 8
        %p371 = scmp.lt.s32.totalorder %s370, 7
        %s372 = scalar_select %p371, %s370, 7
        %p373 = scmp.lt.s32.totalorder %s25, 1
        %s374 = scalar_select %p373, %s25, 1
        %p375 = scmp.lt.s32.totalorder %s372, 7
        %s376 = scalar_select %p375, %s372, 7
        %s377 = smul.addr %s374, 8
        %s378 = sadd.s32 %s376, %s377
        %s379 = smul.addr %s378, 4
        %s380 = scalar_lea.vmem %s2, %s379
        %p381 = pneg %p128
        %p382 = pneg %p125
        %p383 = pneg %p149
        %p384 = pneg %p146
        %p385 = pneg %p170
        %p386 = pneg %p167
        %s387 = sadd.s32 %s25, %s26
        %p388 = scmp.lt.s32.totalorder %s387, 1
        %s389 = scalar_select %p388, %s387, 1
        %s390 = smul.addr %s389, 72
        %s391 = sadd.s32 54, %s390
        %s392 = smul.addr %s391, 4
        %s393 = scalar_lea.vmem %s5, %s392
        %p394 = pneg %p198
        %p395 = pneg %p195
        %p396 = pneg %p219
        %p397 = pneg %p216
        %p398 = pneg %p247
        %p399 = pneg %p244
        %s400 = sand.u32 %s234, 1
        %s401 = scalar_lea.sflag [#allocation4], %s400
        %s402 = sand.u32 %s234, 1
        %s403 = smul.addr %s402, 64
        %s404 = scalar_lea.vmem [#allocation3], %s403
        %s405 = smul.u32 8, %s26
        %p406 = scmp.lt.s32.totalorder %s25, 1
        %s407 = scalar_select %p406, %s25, 1
        %p408 = scmp.lt.s32.totalorder %s405, 7
        %s409 = scalar_select %p408, %s405, 7
        %s410 = smul.addr %s407, 8
        %s411 = sadd.s32 %s409, %s410
        %s412 = smul.addr %s411, 4
        %s413 = scalar_lea.vmem %s0, %s412
        %s414 = smul.u32 8, %s26
        %s415 = smul.u32 %s26, 8
        %s416 = ssub.s32 %s415, 1
        %p417 = scmp.gt.s32.totalorder %s416, 0
        %s418 = scalar_select %p417, %s416, 0
        %p419 = scmp.lt.s32.totalorder %s25, 1
        %s420 = scalar_select %p419, %s25, 1
        %p421 = scmp.lt.s32.totalorder %s418, 7
        %s422 = scalar_select %p421, %s418, 7
        %s423 = smul.addr %s420, 8
        %s424 = sadd.s32 %s422, %s423
        %s425 = smul.addr %s424, 4
        %s426 = scalar_lea.vmem %s1, %s425
        %s427 = smul.u32 %s26, 8
        %s428 = ssub.s32 %s427, 1
        %p429 = scmp.gt.s32.totalorder %s428, 0
        %s430 = scalar_select %p429, %s428, 0
        %s431 = smul.u32 %s26, 8
        %s432 = sadd.s32 %s431, 8
        %p433 = scmp.lt.s32.totalorder %s432, 7
        %s434 = scalar_select %p433, %s432, 7
        %p435 = scmp.lt.s32.totalorder %s25, 1
        %s436 = scalar_select %p435, %s25, 1
        %p437 = scmp.lt.s32.totalorder %s434, 7
        %s438 = scalar_select %p437, %s434, 7
        %s439 = smul.addr %s436, 8
        %s440 = sadd.s32 %s438, %s439
        %s441 = smul.addr %s440, 4
        %s442 = scalar_lea.vmem %s2, %s441
        %s443 = smul.u32 %s26, 8
        %s444 = sadd.s32 %s443, 8
        %p445 = scmp.lt.s32.totalorder %s444, 7
        %s446 = scalar_select %p445, %s444, 7
        %s447 = sadd.s32 %s25, %s26
        %p448 = scmp.lt.s32.totalorder %s447, 1
        %s449 = scalar_select %p448, %s447, 1
        %s450 = smul.addr %s449, 72
        %s451 = sadd.s32 54, %s450
        %s452 = smul.addr %s451, 4
        %s453 = scalar_lea.vmem %s5, %s452
        %s454 = sadd.s32 %s25, %s26
        %s455 = smul.u32 8, %s26
        %v457 = vld [vmem:[%s3] sm:$0x3]
        %v458 = vld [vmem:[%s413] sm:$0xf]
        %v459 = vld [vmem:[%s413 + $0x4] sm:$0xf]
        %v460 = vld [vmem:[%s413 + $0x8] sm:$0xf]
        %v461 = vld [vmem:[%s413 + $0xc] sm:$0xf]
        %v462 = vld [vmem:[%s413 + $0x10] sm:$0xf]
        %v463 = vld [vmem:[%s413 + $0x14] sm:$0xf]
        %v464 = vld [vmem:[%s413 + $0x18] sm:$0xf]
        %v465 = vld [vmem:[%s413 + $0x1c] sm:$0xf]
        %v466 = vunpack.c.l.bf16 %v458
        %v467 = vunpack.c.l.bf16 %v459
        %v468 = vunpack.c.l.bf16 %v460
        %v469 = vunpack.c.l.bf16 %v461
        %v470 = vunpack.c.l.bf16 %v462
        %v471 = vunpack.c.l.bf16 %v463
        %v472 = vunpack.c.l.bf16 %v464
        %v473 = vunpack.c.l.bf16 %v465
        %v474 = vlaneseq
        %v475 = vshrl.u32 %v474, 7
        %v476 = vsub.s32 0, %v475
        %v477 = vrot.slane %v457, %v476
        %v478 = vmul.f32 %v466, %v477
        %v479 = vmul.f32 %v467, %v477
        %v480 = vmul.f32 %v468, %v477
        %v481 = vmul.f32 %v469, %v477
        %v482 = vmul.f32 %v470, %v477
        %v483 = vmul.f32 %v471, %v477
        %v484 = vmul.f32 %v472, %v477
        %v485 = vmul.f32 %v473, %v477
        %v486 = vlaneseq
        %v487 = vshrl.u32 %v486, 7
        %v488 = vsub.s32 1, %v487
        %v489 = vrot.slane %v457, %v488
        %v490 = vadd.f32 %v478, %v489
        %v491 = vadd.f32 %v479, %v489
        %v492 = vadd.f32 %v480, %v489
        %v493 = vadd.f32 %v481, %v489
        %v494 = vadd.f32 %v482, %v489
        %v495 = vadd.f32 %v483, %v489
        %v496 = vadd.f32 %v484, %v489
        %v497 = vadd.f32 %v485, %v489
        %v498 = vmax.f32 %v490, 0.0
        %v499 = vmax.f32 %v491, 0.0
        %v500 = vmax.f32 %v492, 0.0
        %v501 = vmax.f32 %v493, 0.0
        %v502 = vmax.f32 %v494, 0.0
        %v503 = vmax.f32 %v495, 0.0
        %v504 = vmax.f32 %v496, 0.0
        %v505 = vmax.f32 %v497, 0.0
        %v506 = vpack.c.bf16 %v498, %v498
        %v507 = vpack.c.bf16 %v499, %v499
        %v508 = vpack.c.bf16 %v500, %v500
        %v509 = vpack.c.bf16 %v501, %v501
        %v510 = vpack.c.bf16 %v502, %v502
        %v511 = vpack.c.bf16 %v503, %v503
        %v512 = vpack.c.bf16 %v504, %v504
        %v513 = vpack.c.bf16 %v505, %v505
        %v514 = vld [vmem:[%s426] sm:$0xf]
        %v515 = vunpack.c.l.bf16 %v514
        %v516 = vmul.f32 %v515, %v477
        %v517 = vadd.f32 %v516, %v489
        %v518 = vmax.f32 %v517, 0.0
        %p519 = scmp.gt.s32.totalorder %s26, 0
        %s520 = scalar_select %p519, 1, 0
        %s521 = scvt.s32.f32 %s520
        %v522 = vstv %s521
        %v523 = vmul.f32 %v518, %v522
        %v524 = vpack.c.bf16 %v523, %v523
        %v525 = vld [vmem:[%s442] sm:$0xf]
        %v526 = vunpack.c.l.bf16 %v525
        %v527 = vmul.f32 %v526, %v477
        %v528 = vadd.f32 %v527, %v489
        %v529 = vmax.f32 %v528, 0.0
        %p530 = scmp.lt.s32.totalorder %s26, 0
        %s531 = scalar_select %p530, 1, 0
        %s532 = scvt.s32.f32 %s531
        %v533 = vstv %s532
        %v534 = vmul.f32 %v529, %v533
        %v535 = vpack.c.bf16 %v534, %v534
        %536 = vst [vmem:[#allocation2] sm:$0xf] 0
        %537 = vst [vmem:[#allocation2 + $0x4] sm:$0x1] 0
        %538 = vst [vmem:[#allocation2 + $0x8] sm:$0xf] 0
        %539 = vst [vmem:[#allocation2 + $0xc] sm:$0x1] 0
        %540 = vst [vmem:[#allocation2 + $0x10] sm:$0xf] 0
        %541 = vst [vmem:[#allocation2 + $0x14] sm:$0x1] 0
        %542 = vst [vmem:[#allocation2 + $0x18] sm:$0xf] 0
        %543 = vst [vmem:[#allocation2 + $0x1c] sm:$0x1] 0
        %544 = vst [vmem:[#allocation2 + $0x20] sm:$0xf] 0
        %545 = vst [vmem:[#allocation2 + $0x24] sm:$0x1] 0
        %546 = vst [vmem:[#allocation2 + $0x28] sm:$0xf] 0
        %547 = vst [vmem:[#allocation2 + $0x2c] sm:$0x1] 0
        %548 = vst [vmem:[#allocation2 + $0x30] sm:$0xf] 0
        %549 = vst [vmem:[#allocation2 + $0x34] sm:$0x1] 0
        %550 = vst [vmem:[#allocation2 + $0x38] sm:$0xf] 0
        %551 = vst [vmem:[#allocation2 + $0x3c] sm:$0x1] 0
        %552 = vst [vmem:[#allocation2 + $0x40] sm:$0xf] 0
        %553 = vst [vmem:[#allocation2 + $0x44] sm:$0x1] 0
        %554 = vst [vmem:[#allocation2 + $0x48] sm:$0xf] 0
        %555 = vst [vmem:[#allocation2 + $0x4c] sm:$0x1] 0
        %v557 = vunpack.c.l.b16 %v524
        %v558 = vpack.c.b16 %v557, %v557
        %v560 = vshrl.u32 %v558, 16
        %v562 = vrot.slane %v560, 7
        %v563 = vshll.u32 %v558, 16
        %v565 = vor.u32 %v562, %v563
        %v566 = vrot.slane %v562, 4
        %vm569 = vcmask 1043456
        %vm570 = vsmask.f32 7938
        %vm571 = vmand %vm569, %vm570
        %v572 = vld [vmem:[#allocation2] sm:$0xf]
        %v573 = vsel %vm571, %v565, %v572
        %574 = vst [vmem:[#allocation2] sm:$0xf] %v573
        %vm575 = vcmask 1040384
        %vm576 = vsmask.f32 256
        %vm577 = vmand %vm575, %vm576
        %v578 = vld [vmem:[#allocation2 + $0x4] sm:$0x1]
        %v579 = vsel %vm577, %v566, %v578
        %580 = vst [vmem:[#allocation2 + $0x4] sm:$0x1] %v579
        %v589 = vunpack.c.l.b16 %v506
        %v590 = vunpack.c.l.b16 %v507
        %v591 = vunpack.c.l.b16 %v508
        %v592 = vunpack.c.l.b16 %v509
        %v593 = vunpack.c.l.b16 %v510
        %v594 = vunpack.c.l.b16 %v511
        %v595 = vunpack.c.l.b16 %v512
        %v596 = vunpack.c.l.b16 %v513
        %v597 = vpack.c.b16 %v589, %v589
        %v598 = vpack.c.b16 %v590, %v590
        %v599 = vpack.c.b16 %v591, %v591
        %v600 = vpack.c.b16 %v592, %v592
        %v601 = vpack.c.b16 %v593, %v593
        %v602 = vpack.c.b16 %v594, %v594
        %v603 = vpack.c.b16 %v595, %v595
        %v604 = vpack.c.b16 %v596, %v596
        %v606 = vshrl.u32 %v597, 16
        %v608 = vrot.slane %v606, 7
        %v609 = vshll.u32 %v597, 16
        %v611 = vor.u32 %v608, %v609
        %v612 = vrot.slane %v608, 4
        %v614 = vshrl.u32 %v598, 16
        %v616 = vrot.slane %v614, 7
        %v617 = vshll.u32 %v598, 16
        %v619 = vor.u32 %v616, %v617
        %v620 = vrot.slane %v616, 4
        %v622 = vshrl.u32 %v599, 16
        %v624 = vrot.slane %v622, 7
        %v625 = vshll.u32 %v599, 16
        %v627 = vor.u32 %v624, %v625
        %v628 = vrot.slane %v624, 4
        %v630 = vshrl.u32 %v600, 16
        %v632 = vrot.slane %v630, 7
        %v633 = vshll.u32 %v600, 16
        %v635 = vor.u32 %v632, %v633
        %v636 = vrot.slane %v632, 4
        %v638 = vshrl.u32 %v601, 16
        %v640 = vrot.slane %v638, 7
        %v641 = vshll.u32 %v601, 16
        %v643 = vor.u32 %v640, %v641
        %v644 = vrot.slane %v640, 4
        %v646 = vshrl.u32 %v602, 16
        %v648 = vrot.slane %v646, 7
        %v649 = vshll.u32 %v602, 16
        %v651 = vor.u32 %v648, %v649
        %v652 = vrot.slane %v648, 4
        %v654 = vshrl.u32 %v603, 16
        %v656 = vrot.slane %v654, 7
        %v657 = vshll.u32 %v603, 16
        %v659 = vor.u32 %v656, %v657
        %v660 = vrot.slane %v656, 4
        %v662 = vshrl.u32 %v604, 16
        %v664 = vrot.slane %v662, 7
        %v665 = vshll.u32 %v604, 16
        %v667 = vor.u32 %v664, %v665
        %v668 = vrot.slane %v664, 4
        %s685 = scalar_lea.vmem [#allocation2], 8
        %v686 = vld [vmem:[%s685] sm:$0xf]
        %v687 = vsel %vm571, %v611, %v686
        %688 = vst [vmem:[%s685] sm:$0xf] %v687
        %v689 = vld [vmem:[%s685 + $0x4] sm:$0x1]
        %v690 = vsel %vm577, %v612, %v689
        %691 = vst [vmem:[%s685 + $0x4] sm:$0x1] %v690
        %v692 = vld [vmem:[%s685 + $0x8] sm:$0xf]
        %v693 = vsel %vm571, %v619, %v692
        %694 = vst [vmem:[%s685 + $0x8] sm:$0xf] %v693
        %v695 = vld [vmem:[%s685 + $0xc] sm:$0x1]
        %v696 = vsel %vm577, %v620, %v695
        %697 = vst [vmem:[%s685 + $0xc] sm:$0x1] %v696
        %v698 = vld [vmem:[%s685 + $0x10] sm:$0xf]
        %v699 = vsel %vm571, %v627, %v698
        %700 = vst [vmem:[%s685 + $0x10] sm:$0xf] %v699
        %v701 = vld [vmem:[%s685 + $0x14] sm:$0x1]
        %v702 = vsel %vm577, %v628, %v701
        %703 = vst [vmem:[%s685 + $0x14] sm:$0x1] %v702
        %v704 = vld [vmem:[%s685 + $0x18] sm:$0xf]
        %v705 = vsel %vm571, %v635, %v704
        %706 = vst [vmem:[%s685 + $0x18] sm:$0xf] %v705
        %v707 = vld [vmem:[%s685 + $0x1c] sm:$0x1]
        %v708 = vsel %vm577, %v636, %v707
        %709 = vst [vmem:[%s685 + $0x1c] sm:$0x1] %v708
        %v710 = vld [vmem:[%s685 + $0x20] sm:$0xf]
        %v711 = vsel %vm571, %v643, %v710
        %712 = vst [vmem:[%s685 + $0x20] sm:$0xf] %v711
        %v713 = vld [vmem:[%s685 + $0x24] sm:$0x1]
        %v714 = vsel %vm577, %v644, %v713
        %715 = vst [vmem:[%s685 + $0x24] sm:$0x1] %v714
        %v716 = vld [vmem:[%s685 + $0x28] sm:$0xf]
        %v717 = vsel %vm571, %v651, %v716
        %718 = vst [vmem:[%s685 + $0x28] sm:$0xf] %v717
        %v719 = vld [vmem:[%s685 + $0x2c] sm:$0x1]
        %v720 = vsel %vm577, %v652, %v719
        %721 = vst [vmem:[%s685 + $0x2c] sm:$0x1] %v720
        %v722 = vld [vmem:[%s685 + $0x30] sm:$0xf]
        %v723 = vsel %vm571, %v659, %v722
        %724 = vst [vmem:[%s685 + $0x30] sm:$0xf] %v723
        %v725 = vld [vmem:[%s685 + $0x34] sm:$0x1]
        %v726 = vsel %vm577, %v660, %v725
        %727 = vst [vmem:[%s685 + $0x34] sm:$0x1] %v726
        %v728 = vld [vmem:[%s685 + $0x38] sm:$0xf]
        %v729 = vsel %vm571, %v667, %v728
        %730 = vst [vmem:[%s685 + $0x38] sm:$0xf] %v729
        %v731 = vld [vmem:[%s685 + $0x3c] sm:$0x1]
        %v732 = vsel %vm577, %v668, %v731
        %733 = vst [vmem:[%s685 + $0x3c] sm:$0x1] %v732
        %v735 = vunpack.c.l.b16 %v535
        %v736 = vpack.c.b16 %v735, %v735
        %v738 = vshrl.u32 %v736, 16
        %v740 = vrot.slane %v738, 7
        %v741 = vshll.u32 %v736, 16
        %v743 = vor.u32 %v740, %v741
        %v744 = vrot.slane %v740, 4
        %s747 = scalar_lea.vmem [#allocation2], 72
        %v748 = vld [vmem:[%s747] sm:$0xf]
        %v749 = vsel %vm571, %v743, %v748
        %750 = vst [vmem:[%s747] sm:$0xf] %v749
        %v751 = vld [vmem:[%s747 + $0x4] sm:$0x1]
        %v752 = vsel %vm577, %v744, %v751
        %753 = vst [vmem:[%s747 + $0x4] sm:$0x1] %v752
        %v754 = vld [vmem:[%s453] sm:$0xf]
        %v755 = vld [vmem:[%s453 + $0x8] sm:$0xf]
        %v756 = vld [vmem:[%s453 + $0x10] sm:$0xf]
        %v757 = vld [vmem:[%s453 + $0x18] sm:$0xf]
        %v758 = vld [vmem:[%s453 + $0x20] sm:$0xf]
        %v759 = vld [vmem:[%s453 + $0x28] sm:$0xf]
        %v760 = vld [vmem:[%s453 + $0x30] sm:$0xf]
        %v761 = vld [vmem:[%s453 + $0x38] sm:$0xf]
        %v762 = vld [vmem:[%s6] sm:$0xf]
        %v763 = vld [vmem:[%s6 + $0x4] sm:$0xf]
        %v764 = vld [vmem:[%s6 + $0x8] sm:$0xf]
        %v765 = vld [vmem:[%s6 + $0xc] sm:$0xf]
        %v766 = vld [vmem:[%s6 + $0x10] sm:$0xf]
        %v767 = vld [vmem:[%s6 + $0x14] sm:$0xf]
        %v768 = vld [vmem:[%s6 + $0x18] sm:$0xf]
        %v769 = vld [vmem:[%s6 + $0x1c] sm:$0xf]
        %v770 = vld [vmem:[%s6 + $0x20] sm:$0xf]
        %v771 = vld [vmem:[%s6 + $0x24] sm:$0xf]
        %v772 = vld [vmem:[%s6 + $0x28] sm:$0xf]
        %v773 = vld [vmem:[%s6 + $0x2c] sm:$0xf]
        %v774 = vld [vmem:[%s6 + $0x30] sm:$0xf]
        %v775 = vld [vmem:[%s6 + $0x34] sm:$0xf]
        %v776 = vld [vmem:[%s6 + $0x38] sm:$0xf]
        %v777 = vld [vmem:[%s6 + $0x3c] sm:$0xf]
        %v778 = vld [vmem:[#allocation2] sm:$0xf]
        %v779 = vld [vmem:[#allocation2 + $0x8] sm:$0xf]
        %v780 = vld [vmem:[#allocation2 + $0x10] sm:$0xf]
        %v781 = vld [vmem:[#allocation2 + $0x18] sm:$0xf]
        %v782 = vld [vmem:[#allocation2 + $0x20] sm:$0xf]
        %v783 = vld [vmem:[#allocation2 + $0x28] sm:$0xf]
        %v784 = vld [vmem:[#allocation2 + $0x30] sm:$0xf]
        %v785 = vld [vmem:[#allocation2 + $0x38] sm:$0xf]
        %v786 = vld [vmem:[%s4] sm:$0xf]
        %v787 = vld [vmem:[%s4 + $0x4] sm:$0xf]
        %v788 = vld [vmem:[%s4 + $0x8] sm:$0xf]
        %v789 = vld [vmem:[%s4 + $0xc] sm:$0xf]
        %v790 = vld [vmem:[%s4 + $0x10] sm:$0xf]
        %v791 = vld [vmem:[%s4 + $0x14] sm:$0xf]
        %v792 = vld [vmem:[%s4 + $0x18] sm:$0xf]
        %v793 = vld [vmem:[%s4 + $0x1c] sm:$0xf]
        %v794 = vld [vmem:[%s4 + $0x20] sm:$0xf]
        %v795 = vld [vmem:[%s4 + $0x24] sm:$0xf]
        %v796 = vld [vmem:[%s4 + $0x28] sm:$0xf]
        %v797 = vld [vmem:[%s4 + $0x2c] sm:$0xf]
        %v798 = vld [vmem:[%s4 + $0x30] sm:$0xf]
        %v799 = vld [vmem:[%s4 + $0x34] sm:$0xf]
        %v800 = vld [vmem:[%s4 + $0x38] sm:$0xf]
        %v801 = vld [vmem:[%s4 + $0x3c] sm:$0xf]
        %v810 = vunpack.c.l.b16 %v778
        %v811 = vunpack.c.l.b16 %v779
        %v812 = vunpack.c.l.b16 %v780
        %v813 = vunpack.c.l.b16 %v781
        %v814 = vunpack.c.l.b16 %v782
        %v815 = vunpack.c.l.b16 %v783
        %v816 = vunpack.c.l.b16 %v784
        %v817 = vunpack.c.l.b16 %v785
        %v818 = vpack.c.b16 %v811, %v810
        %v819 = vpack.c.b16 %v813, %v812
        %v820 = vpack.c.b16 %v815, %v814
        %v821 = vpack.c.b16 %v817, %v816
        %v842 = vunpack.c.l.b16 %v786
        %v843 = vunpack.c.l.b16 %v787
        %v844 = vunpack.c.l.b16 %v788
        %v845 = vunpack.c.l.b16 %v789
        %v846 = vunpack.c.l.b16 %v790
        %v847 = vunpack.c.l.b16 %v791
        %v848 = vunpack.c.l.b16 %v792
        %v849 = vunpack.c.l.b16 %v793
        %v850 = vunpack.c.l.b16 %v794
        %v851 = vunpack.c.l.b16 %v795
        %v852 = vunpack.c.l.b16 %v796
        %v853 = vunpack.c.l.b16 %v797
        %v854 = vunpack.c.l.b16 %v798
        %v855 = vunpack.c.l.b16 %v799
        %v856 = vunpack.c.l.b16 %v800
        %v857 = vunpack.c.l.b16 %v801
        %v858 = vpack.c.b16 %v843, %v842
        %v859 = vpack.c.b16 %v845, %v844
        %v860 = vpack.c.b16 %v847, %v846
        %v861 = vpack.c.b16 %v849, %v848
        %v862 = vpack.c.b16 %v851, %v850
        %v863 = vpack.c.b16 %v853, %v852
        %v864 = vpack.c.b16 %v855, %v854
        %v865 = vpack.c.b16 %v857, %v856
        %874 = vmatprep.subr.bf16.mxu0 0
        %875 = vmatpush1.bf16.msra.mxu0 %v858
        %876 = vmatprep.subr.bf16.mxu0 0
        %877 = vmatpush1.bf16.msra.mxu0 %v859
        %878 = vmatprep.subr.bf16.mxu0 0
        %879 = vmatpush1.bf16.msra.mxu0 %v860
        %880 = vmatprep.subr.bf16.mxu0 0
        %881 = vmatpush1.bf16.msra.mxu0 %v861
        %882 = vmatprep.subr.bf16.mxu0 0
        %883 = vmatpush1.bf16.msra.mxu0 %v862
        %884 = vmatprep.subr.bf16.mxu0 0
        %885 = vmatpush1.bf16.msra.mxu0 %v863
        %886 = vmatprep.subr.bf16.mxu0 0
        %887 = vmatpush1.bf16.msra.mxu0 %v864
        %888 = vmatprep.subr.bf16.mxu0 0
        %889 = vmatpush1.bf16.msra.mxu0 %v865
        %890 = vmatprep.subr.bf16.mxu0 0
        %891 = vmatpush1.bf16.msra.mxu0 0
        %892 = vmatprep.subr.bf16.mxu0 0
        %893 = vmatpush1.bf16.msra.mxu0 0
        %894 = vmatprep.subr.bf16.mxu0 0
        %895 = vmatpush1.bf16.msra.mxu0 0
        %896 = vmatprep.subr.bf16.mxu0 0
        %897 = vmatpush1.bf16.msra.mxu0 0
        %898 = vmatprep.subr.bf16.mxu0 0
        %899 = vmatpush1.bf16.msra.mxu0 0
        %900 = vmatprep.subr.bf16.mxu0 0
        %901 = vmatpush1.bf16.msra.mxu0 0
        %902 = vmatprep.subr.bf16.mxu0 0
        %903 = vmatpush1.bf16.msra.mxu0 0
        %904 = vmatprep.subr.bf16.mxu0 0
        %905 = vmatpush1.bf16.msra.mxu0 0
        %906 = vmatprep.mubr.bf16.mxu0 0
        %907 = vmatmul.mubr.bf16.gmra.mrb[0].mxu0 %v818
        %v908 = vpop.f32.mrb[0].mxu0
        %v909 = vadd.f32 0.0, %v908
        %v910 = vpop.f32.mrb[0].mxu0
        %v911 = vpop.f32.mrb[0].mxu0
        %v912 = vadd.f32 0.0, %v911
        %v913 = vpop.f32.mrb[0].mxu0
        %914 = vmatprep.mubr.bf16.mxu0 0
        %915 = vmatmul.mubr.bf16.gmra.mrb[0].mxu0 %v819
        %v916 = vpop.f32.mrb[0].mxu0
        %v917 = vadd.f32 0.0, %v916
        %v918 = vpop.f32.mrb[0].mxu0
        %v919 = vpop.f32.mrb[0].mxu0
        %v920 = vadd.f32 0.0, %v919
        %v921 = vpop.f32.mrb[0].mxu0
        %922 = vmatprep.mubr.bf16.mxu0 0
        %923 = vmatmul.mubr.bf16.gmra.mrb[0].mxu0 %v820
        %v924 = vpop.f32.mrb[0].mxu0
        %v925 = vadd.f32 0.0, %v924
        %v926 = vpop.f32.mrb[0].mxu0
        %v927 = vpop.f32.mrb[0].mxu0
        %v928 = vadd.f32 0.0, %v927
        %v929 = vpop.f32.mrb[0].mxu0
        %930 = vmatprep.mubr.bf16.mxu0 0
        %931 = vmatmul.mubr.bf16.gmra.mrb[0].mxu0 %v821
        %v932 = vpop.f32.mrb[0].mxu0
        %v933 = vadd.f32 0.0, %v932
        %v934 = vpop.f32.mrb[0].mxu0
        %v935 = vpop.f32.mrb[0].mxu0
        %v936 = vadd.f32 0.0, %v935
        %v937 = vpop.f32.mrb[0].mxu0
        %938 = vdwg.mxu0
        %v947 = vunpack.c.l.b16 %v754
        %v948 = vunpack.c.l.b16 %v755
        %v949 = vunpack.c.l.b16 %v756
        %v950 = vunpack.c.l.b16 %v757
        %v951 = vunpack.c.l.b16 %v758
        %v952 = vunpack.c.l.b16 %v759
        %v953 = vunpack.c.l.b16 %v760
        %v954 = vunpack.c.l.b16 %v761
        %v955 = vpack.c.b16 %v948, %v947
        %v956 = vpack.c.b16 %v950, %v949
        %v957 = vpack.c.b16 %v952, %v951
        %v958 = vpack.c.b16 %v954, %v953
        %v979 = vunpack.c.l.b16 %v762
        %v980 = vunpack.c.l.b16 %v763
        %v981 = vunpack.c.l.b16 %v764
        %v982 = vunpack.c.l.b16 %v765
        %v983 = vunpack.c.l.b16 %v766
        %v984 = vunpack.c.l.b16 %v767
        %v985 = vunpack.c.l.b16 %v768
        %v986 = vunpack.c.l.b16 %v769
        %v987 = vunpack.c.l.b16 %v770
        %v988 = vunpack.c.l.b16 %v771
        %v989 = vunpack.c.l.b16 %v772
        %v990 = vunpack.c.l.b16 %v773
        %v991 = vunpack.c.l.b16 %v774
        %v992 = vunpack.c.l.b16 %v775
        %v993 = vunpack.c.l.b16 %v776
        %v994 = vunpack.c.l.b16 %v777
        %v995 = vpack.c.b16 %v980, %v979
        %v996 = vpack.c.b16 %v982, %v981
        %v997 = vpack.c.b16 %v984, %v983
        %v998 = vpack.c.b16 %v986, %v985
        %v999 = vpack.c.b16 %v988, %v987
        %v1000 = vpack.c.b16 %v990, %v989
        %v1001 = vpack.c.b16 %v992, %v991
        %v1002 = vpack.c.b16 %v994, %v993
        %1011 = vmatprep.subr.bf16.mxu0 0
        %1012 = vmatpush1.bf16.msra.mxu0 %v995
        %1013 = vmatprep.subr.bf16.mxu0 0
        %1014 = vmatpush1.bf16.msra.mxu0 %v996
        %1015 = vmatprep.subr.bf16.mxu0 0
        %1016 = vmatpush1.bf16.msra.mxu0 %v997
        %1017 = vmatprep.subr.bf16.mxu0 0
        %1018 = vmatpush1.bf16.msra.mxu0 %v998
        %1019 = vmatprep.subr.bf16.mxu0 0
        %1020 = vmatpush1.bf16.msra.mxu0 %v999
        %1021 = vmatprep.subr.bf16.mxu0 0
        %1022 = vmatpush1.bf16.msra.mxu0 %v1000
        %1023 = vmatprep.subr.bf16.mxu0 0
        %1024 = vmatpush1.bf16.msra.mxu0 %v1001
        %1025 = vmatprep.subr.bf16.mxu0 0
        %1026 = vmatpush1.bf16.msra.mxu0 %v1002
        %1027 = vmatprep.subr.bf16.mxu0 0
        %1028 = vmatpush1.bf16.msra.mxu0 0
        %1029 = vmatprep.subr.bf16.mxu0 0
        %1030 = vmatpush1.bf16.msra.mxu0 0
        %1031 = vmatprep.subr.bf16.mxu0 0
        %1032 = vmatpush1.bf16.msra.mxu0 0
        %1033 = vmatprep.subr.bf16.mxu0 0
        %1034 = vmatpush1.bf16.msra.mxu0 0
        %1035 = vmatprep.subr.bf16.mxu0 0
        %1036 = vmatpush1.bf16.msra.mxu0 0
        %1037 = vmatprep.subr.bf16.mxu0 0
        %1038 = vmatpush1.bf16.msra.mxu0 0
        %1039 = vmatprep.subr.bf16.mxu0 0
        %1040 = vmatpush1.bf16.msra.mxu0 0
        %1041 = vmatprep.subr.bf16.mxu0 0
        %1042 = vmatpush1.bf16.msra.mxu0 0
        %1043 = vmatprep.mubr.bf16.mxu0 0
        %1044 = vmatmul.mubr.bf16.gmra.mrb[0].mxu0 %v955
        %v1045 = vpop.f32.mrb[0].mxu0
        %v1046 = vadd.f32 %v909, %v1045
        %v1047 = vpop.f32.mrb[0].mxu0
        %v1048 = vpop.f32.mrb[0].mxu0
        %v1049 = vadd.f32 %v912, %v1048
        %v1050 = vpop.f32.mrb[0].mxu0
        %1051 = vmatprep.mubr.bf16.mxu0 0
        %1052 = vmatmul.mubr.bf16.gmra.mrb[0].mxu0 %v956
        %v1053 = vpop.f32.mrb[0].mxu0
        %v1054 = vadd.f32 %v917, %v1053
        %v1055 = vpop.f32.mrb[0].mxu0
        %v1056 = vpop.f32.mrb[0].mxu0
        %v1057 = vadd.f32 %v920, %v1056
        %v1058 = vpop.f32.mrb[0].mxu0
        %1059 = vmatprep.mubr.bf16.mxu0 0
        %1060 = vmatmul.mubr.bf16.gmra.mrb[0].mxu0 %v957
        %v1061 = vpop.f32.mrb[0].mxu0
        %v1062 = vadd.f32 %v925, %v1061
        %v1063 = vpop.f32.mrb[0].mxu0
        %v1064 = vpop.f32.mrb[0].mxu0
        %v1065 = vadd.f32 %v928, %v1064
        %v1066 = vpop.f32.mrb[0].mxu0
        %1067 = vmatprep.mubr.bf16.mxu0 0
        %1068 = vmatmul.mubr.bf16.gmra.mrb[0].mxu0 %v958
        %v1069 = vpop.f32.mrb[0].mxu0
        %v1070 = vadd.f32 %v933, %v1069
        %v1071 = vpop.f32.mrb[0].mxu0
        %v1072 = vpop.f32.mrb[0].mxu0
        %v1073 = vadd.f32 %v936, %v1072
        %v1074 = vpop.f32.mrb[0].mxu0
        %1075 = vdwg.mxu0
        %v1076 = vld [vmem:[#allocation2] sm:$0xf]
        %v1077 = vld [vmem:[#allocation2 + $0x4] sm:$0x1]
        %v1078 = vld [vmem:[#allocation2 + $0x8] sm:$0xf]
        %v1079 = vld [vmem:[#allocation2 + $0xc] sm:$0x1]
        %v1080 = vld [vmem:[#allocation2 + $0x10] sm:$0xf]
        %v1081 = vld [vmem:[#allocation2 + $0x14] sm:$0x1]
        %v1082 = vld [vmem:[#allocation2 + $0x18] sm:$0xf]
        %v1083 = vld [vmem:[#allocation2 + $0x1c] sm:$0x1]
        %v1084 = vld [vmem:[#allocation2 + $0x20] sm:$0xf]
        %v1085 = vld [vmem:[#allocation2 + $0x24] sm:$0x1]
        %v1086 = vld [vmem:[#allocation2 + $0x28] sm:$0xf]
        %v1087 = vld [vmem:[#allocation2 + $0x2c] sm:$0x1]
        %v1088 = vld [vmem:[#allocation2 + $0x30] sm:$0xf]
        %v1089 = vld [vmem:[#allocation2 + $0x34] sm:$0x1]
        %v1090 = vld [vmem:[#allocation2 + $0x38] sm:$0xf]
        %v1091 = vld [vmem:[#allocation2 + $0x3c] sm:$0x1]
        %vm1092 = vsmask.f32 3328
        %vm1093 = vsmask.f32 7440
        %vm1094 = vmor %vm1092, %vm1093
        %v1096 = vshrl.u32 %v1076, 16
        %v1098 = vrot.slane %v1096, 4
        %v1099 = vshll.u32 %v1076, 16
        %v1101 = vrot.slane %v1099, 5
        %v1102 = vor.u32 %v1098, %v1101
        %v1103 = vrot.slane %v1102, 4
        %v1105 = vshll.u32 %v1077, 16
        %v1107 = vrot.slane %v1105, 5
        %v1108 = vsel %vm1094, %v1103, %v1107
        %v1110 = vshrl.u32 %v1078, 16
        %v1112 = vrot.slane %v1110, 4
        %v1113 = vshll.u32 %v1078, 16
        %v1115 = vrot.slane %v1113, 5
        %v1116 = vor.u32 %v1112, %v1115
        %v1117 = vrot.slane %v1116, 4
        %v1119 = vshll.u32 %v1079, 16
        %v1121 = vrot.slane %v1119, 5
        %v1122 = vsel %vm1094, %v1117, %v1121
        %v1124 = vshrl.u32 %v1080, 16
        %v1126 = vrot.slane %v1124, 4
        %v1127 = vshll.u32 %v1080, 16
        %v1129 = vrot.slane %v1127, 5
        %v1130 = vor.u32 %v1126, %v1129
        %v1131 = vrot.slane %v1130, 4
        %v1133 = vshll.u32 %v1081, 16
        %v1135 = vrot.slane %v1133, 5
        %v1136 = vsel %vm1094, %v1131, %v1135
        %v1138 = vshrl.u32 %v1082, 16
        %v1140 = vrot.slane %v1138, 4
        %v1141 = vshll.u32 %v1082, 16
        %v1143 = vrot.slane %v1141, 5
        %v1144 = vor.u32 %v1140, %v1143
        %v1145 = vrot.slane %v1144, 4
        %v1147 = vshll.u32 %v1083, 16
        %v1149 = vrot.slane %v1147, 5
        %v1150 = vsel %vm1094, %v1145, %v1149
        %v1152 = vshrl.u32 %v1084, 16
        %v1154 = vrot.slane %v1152, 4
        %v1155 = vshll.u32 %v1084, 16
        %v1157 = vrot.slane %v1155, 5
        %v1158 = vor.u32 %v1154, %v1157
        %v1159 = vrot.slane %v1158, 4
        %v1161 = vshll.u32 %v1085, 16
        %v1163 = vrot.slane %v1161, 5
        %v1164 = vsel %vm1094, %v1159, %v1163
        %v1166 = vshrl.u32 %v1086, 16
        %v1168 = vrot.slane %v1166, 4
        %v1169 = vshll.u32 %v1086, 16
        %v1171 = vrot.slane %v1169, 5
        %v1172 = vor.u32 %v1168, %v1171
        %v1173 = vrot.slane %v1172, 4
        %v1175 = vshll.u32 %v1087, 16
        %v1177 = vrot.slane %v1175, 5
        %v1178 = vsel %vm1094, %v1173, %v1177
        %v1180 = vshrl.u32 %v1088, 16
        %v1182 = vrot.slane %v1180, 4
        %v1183 = vshll.u32 %v1088, 16
        %v1185 = vrot.slane %v1183, 5
        %v1186 = vor.u32 %v1182, %v1185
        %v1187 = vrot.slane %v1186, 4
        %v1189 = vshll.u32 %v1089, 16
        %v1191 = vrot.slane %v1189, 5
        %v1192 = vsel %vm1094, %v1187, %v1191
        %v1194 = vshrl.u32 %v1090, 16
        %v1196 = vrot.slane %v1194, 4
        %v1197 = vshll.u32 %v1090, 16
        %v1199 = vrot.slane %v1197, 5
        %v1200 = vor.u32 %v1196, %v1199
        %v1201 = vrot.slane %v1200, 4
        %v1203 = vshll.u32 %v1091, 16
        %v1205 = vrot.slane %v1203, 5
        %v1206 = vsel %vm1094, %v1201, %v1205
        %s1207 = scalar_lea.vmem %s4, 64
        %v1208 = vld [vmem:[%s1207] sm:$0xf]
        %v1209 = vld [vmem:[%s1207 + $0x4] sm:$0xf]
        %v1210 = vld [vmem:[%s1207 + $0x8] sm:$0xf]
        %v1211 = vld [vmem:[%s1207 + $0xc] sm:$0xf]
        %v1212 = vld [vmem:[%s1207 + $0x10] sm:$0xf]
        %v1213 = vld [vmem:[%s1207 + $0x14] sm:$0xf]
        %v1214 = vld [vmem:[%s1207 + $0x18] sm:$0xf]
        %v1215 = vld [vmem:[%s1207 + $0x1c] sm:$0xf]
        %v1216 = vld [vmem:[%s1207 + $0x20] sm:$0xf]
        %v1217 = vld [vmem:[%s1207 + $0x24] sm:$0xf]
        %v1218 = vld [vmem:[%s1207 + $0x28] sm:$0xf]
        %v1219 = vld [vmem:[%s1207 + $0x2c] sm:$0xf]
        %v1220 = vld [vmem:[%s1207 + $0x30] sm:$0xf]
        %v1221 = vld [vmem:[%s1207 + $0x34] sm:$0xf]
        %v1222 = vld [vmem:[%s1207 + $0x38] sm:$0xf]
        %v1223 = vld [vmem:[%s1207 + $0x3c] sm:$0xf]
        %v1224 = vunpack.c.l.b16 %v1108
        %v1225 = vunpack.c.l.b16 %v1122
        %v1226 = vunpack.c.l.b16 %v1136
        %v1227 = vunpack.c.l.b16 %v1150
        %v1228 = vunpack.c.l.b16 %v1164
        %v1229 = vunpack.c.l.b16 %v1178
        %v1230 = vunpack.c.l.b16 %v1192
        %v1231 = vunpack.c.l.b16 %v1206
        %v1232 = vpack.c.b16 %v1225, %v1224
        %v1233 = vpack.c.b16 %v1227, %v1226
        %v1234 = vpack.c.b16 %v1229, %v1228
        %v1235 = vpack.c.b16 %v1231, %v1230
        %v1256 = vunpack.c.l.b16 %v1208
        %v1257 = vunpack.c.l.b16 %v1209
        %v1258 = vunpack.c.l.b16 %v1210
        %v1259 = vunpack.c.l.b16 %v1211
        %v1260 = vunpack.c.l.b16 %v1212
        %v1261 = vunpack.c.l.b16 %v1213
        %v1262 = vunpack.c.l.b16 %v1214
        %v1263 = vunpack.c.l.b16 %v1215
        %v1264 = vunpack.c.l.b16 %v1216
        %v1265 = vunpack.c.l.b16 %v1217
        %v1266 = vunpack.c.l.b16 %v1218
        %v1267 = vunpack.c.l.b16 %v1219
        %v1268 = vunpack.c.l.b16 %v1220
        %v1269 = vunpack.c.l.b16 %v1221
        %v1270 = vunpack.c.l.b16 %v1222
        %v1271 = vunpack.c.l.b16 %v1223
        %v1272 = vpack.c.b16 %v1257, %v1256
        %v1273 = vpack.c.b16 %v1259, %v1258
        %v1274 = vpack.c.b16 %v1261, %v1260
        %v1275 = vpack.c.b16 %v1263, %v1262
        %v1276 = vpack.c.b16 %v1265, %v1264
        %v1277 = vpack.c.b16 %v1267, %v1266
        %v1278 = vpack.c.b16 %v1269, %v1268
        %v1279 = vpack.c.b16 %v1271, %v1270
        %1288 = vmatprep.subr.bf16.mxu0 0
        %1289 = vmatpush1.bf16.msra.mxu0 %v1272
        %1290 = vmatprep.subr.bf16.mxu0 0
        %1291 = vmatpush1.bf16.msra.mxu0 %v1273
        %1292 = vmatprep.subr.bf16.mxu0 0
        %1293 = vmatpush1.bf16.msra.mxu0 %v1274
        %1294 = vmatprep.subr.bf16.mxu0 0
        %1295 = vmatpush1.bf16.msra.mxu0 %v1275
        %1296 = vmatprep.subr.bf16.mxu0 0
        %1297 = vmatpush1.bf16.msra.mxu0 %v1276
        %1298 = vmatprep.subr.bf16.mxu0 0
        %1299 = vmatpush1.bf16.msra.mxu0 %v1277
        %1300 = vmatprep.subr.bf16.mxu0 0
        %1301 = vmatpush1.bf16.msra.mxu0 %v1278
        %1302 = vmatprep.subr.bf16.mxu0 0
        %1303 = vmatpush1.bf16.msra.mxu0 %v1279
        %1304 = vmatprep.subr.bf16.mxu0 0
        %1305 = vmatpush1.bf16.msra.mxu0 0
        %1306 = vmatprep.subr.bf16.mxu0 0
        %1307 = vmatpush1.bf16.msra.mxu0 0
        %1308 = vmatprep.subr.bf16.mxu0 0
        %1309 = vmatpush1.bf16.msra.mxu0 0
        %1310 = vmatprep.subr.bf16.mxu0 0
        %1311 = vmatpush1.bf16.msra.mxu0 0
        %1312 = vmatprep.subr.bf16.mxu0 0
        %1313 = vmatpush1.bf16.msra.mxu0 0
        %1314 = vmatprep.subr.bf16.mxu0 0
        %1315 = vmatpush1.bf16.msra.mxu0 0
        %1316 = vmatprep.subr.bf16.mxu0 0
        %1317 = vmatpush1.bf16.msra.mxu0 0
        %1318 = vmatprep.subr.bf16.mxu0 0
        %1319 = vmatpush1.bf16.msra.mxu0 0
        %1320 = vmatprep.mubr.bf16.mxu0 0
        %1321 = vmatmul.mubr.bf16.gmra.mrb[0].mxu0 %v1232
        %v1322 = vpop.f32.mrb[0].mxu0
        %v1323 = vadd.f32 0.0, %v1322
        %v1324 = vpop.f32.mrb[0].mxu0
        %v1325 = vpop.f32.mrb[0].mxu0
        %v1326 = vadd.f32 0.0, %v1325
        %v1327 = vpop.f32.mrb[0].mxu0
        %1328 = vmatprep.mubr.bf16.mxu0 0
        %1329 = vmatmul.mubr.bf16.gmra.mrb[0].mxu0 %v1233
        %v1330 = vpop.f32.mrb[0].mxu0
        %v1331 = vadd.f32 0.0, %v1330
        %v1332 = vpop.f32.mrb[0].mxu0
        %v1333 = vpop.f32.mrb[0].mxu0
        %v1334 = vadd.f32 0.0, %v1333
        %v1335 = vpop.f32.mrb[0].mxu0
        %1336 = vmatprep.mubr.bf16.mxu0 0
        %1337 = vmatmul.mubr.bf16.gmra.mrb[0].mxu0 %v1234
        %v1338 = vpop.f32.mrb[0].mxu0
        %v1339 = vadd.f32 0.0, %v1338
        %v1340 = vpop.f32.mrb[0].mxu0
        %v1341 = vpop.f32.mrb[0].mxu0
        %v1342 = vadd.f32 0.0, %v1341
        %v1343 = vpop.f32.mrb[0].mxu0
        %1344 = vmatprep.mubr.bf16.mxu0 0
        %1345 = vmatmul.mubr.bf16.gmra.mrb[0].mxu0 %v1235
        %v1346 = vpop.f32.mrb[0].mxu0
        %v1347 = vadd.f32 0.0, %v1346
        %v1348 = vpop.f32.mrb[0].mxu0
        %v1349 = vpop.f32.mrb[0].mxu0
        %v1350 = vadd.f32 0.0, %v1349
        %v1351 = vpop.f32.mrb[0].mxu0
        %1352 = vdwg.mxu0
        %v1353 = vadd.f32 %v1046, %v1323
        %v1354 = vadd.f32 %v1049, %v1326
        %v1355 = vadd.f32 %v1054, %v1331
        %v1356 = vadd.f32 %v1057, %v1334
        %v1357 = vadd.f32 %v1062, %v1339
        %v1358 = vadd.f32 %v1065, %v1342
        %v1359 = vadd.f32 %v1070, %v1347
        %v1360 = vadd.f32 %v1073, %v1350
        %v1361 = vld [vmem:[#allocation2] sm:$0xe]
        %v1362 = vld [vmem:[#allocation2 + $0x8] sm:$0xe]
        %v1363 = vld [vmem:[#allocation2 + $0x10] sm:$0xe]
        %v1364 = vld [vmem:[#allocation2 + $0x18] sm:$0xe]
        %v1365 = vld [vmem:[#allocation2 + $0x20] sm:$0xe]
        %v1366 = vld [vmem:[#allocation2 + $0x28] sm:$0xe]
        %v1367 = vld [vmem:[#allocation2 + $0x30] sm:$0xe]
        %v1368 = vld [vmem:[#allocation2 + $0x38] sm:$0xe]
        %vm1385 = vcmask 1042432
        %vm1386 = vcmask 1046532
        %vm1387 = vmor %vm1385, %vm1386
        %v1388 = vrot.slane %v1361, 5
        %v1389 = vrot.slane %v1388, 4
        %v1390 = vrot.slane %v1077, 5
        %v1391 = vsel %vm1387, %v1389, %v1390
        %v1392 = vrot.slane %v1362, 5
        %v1393 = vrot.slane %v1392, 4
        %v1394 = vrot.slane %v1079, 5
        %v1395 = vsel %vm1387, %v1393, %v1394
        %v1396 = vrot.slane %v1363, 5
        %v1397 = vrot.slane %v1396, 4
        %v1398 = vrot.slane %v1081, 5
        %v1399 = vsel %vm1387, %v1397, %v1398
        %v1400 = vrot.slane %v1364, 5
        %v1401 = vrot.slane %v1400, 4
        %v1402 = vrot.slane %v1083, 5
        %v1403 = vsel %vm1387, %v1401, %v1402
        %v1404 = vrot.slane %v1365, 5
        %v1405 = vrot.slane %v1404, 4
        %v1406 = vrot.slane %v1085, 5
        %v1407 = vsel %vm1387, %v1405, %v1406
        %v1408 = vrot.slane %v1366, 5
        %v1409 = vrot.slane %v1408, 4
        %v1410 = vrot.slane %v1087, 5
        %v1411 = vsel %vm1387, %v1409, %v1410
        %v1412 = vrot.slane %v1367, 5
        %v1413 = vrot.slane %v1412, 4
        %v1414 = vrot.slane %v1089, 5
        %v1415 = vsel %vm1387, %v1413, %v1414
        %v1416 = vrot.slane %v1368, 5
        %v1417 = vrot.slane %v1416, 4
        %v1418 = vrot.slane %v1091, 5
        %v1419 = vsel %vm1387, %v1417, %v1418
        %s1420 = scalar_lea.vmem %s4, 128
        %v1421 = vld [vmem:[%s1420] sm:$0xf]
        %v1422 = vld [vmem:[%s1420 + $0x4] sm:$0xf]
        %v1423 = vld [vmem:[%s1420 + $0x8] sm:$0xf]
        %v1424 = vld [vmem:[%s1420 + $0xc] sm:$0xf]
        %v1425 = vld [vmem:[%s1420 + $0x10] sm:$0xf]
        %v1426 = vld [vmem:[%s1420 + $0x14] sm:$0xf]
        %v1427 = vld [vmem:[%s1420 + $0x18] sm:$0xf]
        %v1428 = vld [vmem:[%s1420 + $0x1c] sm:$0xf]
        %v1429 = vld [vmem:[%s1420 + $0x20] sm:$0xf]
        %v1430 = vld [vmem:[%s1420 + $0x24] sm:$0xf]
        %v1431 = vld [vmem:[%s1420 + $0x28] sm:$0xf]
        %v1432 = vld [vmem:[%s1420 + $0x2c] sm:$0xf]
        %v1433 = vld [vmem:[%s1420 + $0x30] sm:$0xf]
        %v1434 = vld [vmem:[%s1420 + $0x34] sm:$0xf]
        %v1435 = vld [vmem:[%s1420 + $0x38] sm:$0xf]
        %v1436 = vld [vmem:[%s1420 + $0x3c] sm:$0xf]
        %v1437 = vunpack.c.l.b16 %v1391
        %v1438 = vunpack.c.l.b16 %v1395
        %v1439 = vunpack.c.l.b16 %v1399
        %v1440 = vunpack.c.l.b16 %v1403
        %v1441 = vunpack.c.l.b16 %v1407
        %v1442 = vunpack.c.l.b16 %v1411
        %v1443 = vunpack.c.l.b16 %v1415
        %v1444 = vunpack.c.l.b16 %v1419
        %v1445 = vpack.c.b16 %v1438, %v1437
        %v1446 = vpack.c.b16 %v1440, %v1439
        %v1447 = vpack.c.b16 %v1442, %v1441
        %v1448 = vpack.c.b16 %v1444, %v1443
        %v1469 = vunpack.c.l.b16 %v1421
        %v1470 = vunpack.c.l.b16 %v1422
        %v1471 = vunpack.c.l.b16 %v1423
        %v1472 = vunpack.c.l.b16 %v1424
        %v1473 = vunpack.c.l.b16 %v1425
        %v1474 = vunpack.c.l.b16 %v1426
        %v1475 = vunpack.c.l.b16 %v1427
        %v1476 = vunpack.c.l.b16 %v1428
        %v1477 = vunpack.c.l.b16 %v1429
        %v1478 = vunpack.c.l.b16 %v1430
        %v1479 = vunpack.c.l.b16 %v1431
        %v1480 = vunpack.c.l.b16 %v1432
        %v1481 = vunpack.c.l.b16 %v1433
        %v1482 = vunpack.c.l.b16 %v1434
        %v1483 = vunpack.c.l.b16 %v1435
        %v1484 = vunpack.c.l.b16 %v1436
        %v1485 = vpack.c.b16 %v1470, %v1469
        %v1486 = vpack.c.b16 %v1472, %v1471
        %v1487 = vpack.c.b16 %v1474, %v1473
        %v1488 = vpack.c.b16 %v1476, %v1475
        %v1489 = vpack.c.b16 %v1478, %v1477
        %v1490 = vpack.c.b16 %v1480, %v1479
        %v1491 = vpack.c.b16 %v1482, %v1481
        %v1492 = vpack.c.b16 %v1484, %v1483
        %1501 = vmatprep.subr.bf16.mxu0 0
        %1502 = vmatpush1.bf16.msra.mxu0 %v1485
        %1503 = vmatprep.subr.bf16.mxu0 0
        %1504 = vmatpush1.bf16.msra.mxu0 %v1486
        %1505 = vmatprep.subr.bf16.mxu0 0
        %1506 = vmatpush1.bf16.msra.mxu0 %v1487
        %1507 = vmatprep.subr.bf16.mxu0 0
        %1508 = vmatpush1.bf16.msra.mxu0 %v1488
        %1509 = vmatprep.subr.bf16.mxu0 0
        %1510 = vmatpush1.bf16.msra.mxu0 %v1489
        %1511 = vmatprep.subr.bf16.mxu0 0
        %1512 = vmatpush1.bf16.msra.mxu0 %v1490
        %1513 = vmatprep.subr.bf16.mxu0 0
        %1514 = vmatpush1.bf16.msra.mxu0 %v1491
        %1515 = vmatprep.subr.bf16.mxu0 0
        %1516 = vmatpush1.bf16.msra.mxu0 %v1492
        %1517 = vmatprep.subr.bf16.mxu0 0
        %1518 = vmatpush1.bf16.msra.mxu0 0
        %1519 = vmatprep.subr.bf16.mxu0 0
        %1520 = vmatpush1.bf16.msra.mxu0 0
        %1521 = vmatprep.subr.bf16.mxu0 0
        %1522 = vmatpush1.bf16.msra.mxu0 0
        %1523 = vmatprep.subr.bf16.mxu0 0
        %1524 = vmatpush1.bf16.msra.mxu0 0
        %1525 = vmatprep.subr.bf16.mxu0 0
        %1526 = vmatpush1.bf16.msra.mxu0 0
        %1527 = vmatprep.subr.bf16.mxu0 0
        %1528 = vmatpush1.bf16.msra.mxu0 0
        %1529 = vmatprep.subr.bf16.mxu0 0
        %1530 = vmatpush1.bf16.msra.mxu0 0
        %1531 = vmatprep.subr.bf16.mxu0 0
        %1532 = vmatpush1.bf16.msra.mxu0 0
        %1533 = vmatprep.mubr.bf16.mxu0 0
        %1534 = vmatmul.mubr.bf16.gmra.mrb[0].mxu0 %v1445
        %v1535 = vpop.f32.mrb[0].mxu0
        %v1536 = vadd.f32 0.0, %v1535
        %v1537 = vpop.f32.mrb[0].mxu0
        %v1538 = vpop.f32.mrb[0].mxu0
        %v1539 = vadd.f32 0.0, %v1538
        %v1540 = vpop.f32.mrb[0].mxu0
        %1541 = vmatprep.mubr.bf16.mxu0 0
        %1542 = vmatmul.mubr.bf16.gmra.mrb[0].mxu0 %v1446
        %v1543 = vpop.f32.mrb[0].mxu0
        %v1544 = vadd.f32 0.0, %v1543
        %v1545 = vpop.f32.mrb[0].mxu0
        %v1546 = vpop.f32.mrb[0].mxu0
        %v1547 = vadd.f32 0.0, %v1546
        %v1548 = vpop.f32.mrb[0].mxu0
        %1549 = vmatprep.mubr.bf16.mxu0 0
        %1550 = vmatmul.mubr.bf16.gmra.mrb[0].mxu0 %v1447
        %v1551 = vpop.f32.mrb[0].mxu0
        %v1552 = vadd.f32 0.0, %v1551
        %v1553 = vpop.f32.mrb[0].mxu0
        %v1554 = vpop.f32.mrb[0].mxu0
        %v1555 = vadd.f32 0.0, %v1554
        %v1556 = vpop.f32.mrb[0].mxu0
        %1557 = vmatprep.mubr.bf16.mxu0 0
        %1558 = vmatmul.mubr.bf16.gmra.mrb[0].mxu0 %v1448
        %v1559 = vpop.f32.mrb[0].mxu0
        %v1560 = vadd.f32 0.0, %v1559
        %v1561 = vpop.f32.mrb[0].mxu0
        %v1562 = vpop.f32.mrb[0].mxu0
        %v1563 = vadd.f32 0.0, %v1562
        %v1564 = vpop.f32.mrb[0].mxu0
        %1565 = vdwg.mxu0
        %v1566 = vadd.f32 %v1353, %v1536
        %v1567 = vadd.f32 %v1354, %v1539
        %v1568 = vadd.f32 %v1355, %v1544
        %v1569 = vadd.f32 %v1356, %v1547
        %v1570 = vadd.f32 %v1357, %v1552
        %v1571 = vadd.f32 %v1358, %v1555
        %v1572 = vadd.f32 %v1359, %v1560
        %v1573 = vadd.f32 %v1360, %v1563
        %v1574 = vld [vmem:[%s685] sm:$0xf]
        %v1575 = vld [vmem:[%s685 + $0x8] sm:$0xf]
        %v1576 = vld [vmem:[%s685 + $0x10] sm:$0xf]
        %v1577 = vld [vmem:[%s685 + $0x18] sm:$0xf]
        %v1578 = vld [vmem:[%s685 + $0x20] sm:$0xf]
        %v1579 = vld [vmem:[%s685 + $0x28] sm:$0xf]
        %v1580 = vld [vmem:[%s685 + $0x30] sm:$0xf]
        %v1581 = vld [vmem:[%s685 + $0x38] sm:$0xf]
        %s1582 = scalar_lea.vmem %s4, 192
        %v1583 = vld [vmem:[%s1582] sm:$0xf]
        %v1584 = vld [vmem:[%s1582 + $0x4] sm:$0xf]
        %v1585 = vld [vmem:[%s1582 + $0x8] sm:$0xf]
        %v1586 = vld [vmem:[%s1582 + $0xc] sm:$0xf]
        %v1587 = vld [vmem:[%s1582 + $0x10] sm:$0xf]
        %v1588 = vld [vmem:[%s1582 + $0x14] sm:$0xf]
        %v1589 = vld [vmem:[%s1582 + $0x18] sm:$0xf]
        %v1590 = vld [vmem:[%s1582 + $0x1c] sm:$0xf]
        %v1591 = vld [vmem:[%s1582 + $0x20] sm:$0xf]
        %v1592 = vld [vmem:[%s1582 + $0x24] sm:$0xf]
        %v1593 = vld [vmem:[%s1582 + $0x28] sm:$0xf]
        %v1594 = vld [vmem:[%s1582 + $0x2c] sm:$0xf]
        %v1595 = vld [vmem:[%s1582 + $0x30] sm:$0xf]
        %v1596 = vld [vmem:[%s1582 + $0x34] sm:$0xf]
        %v1597 = vld [vmem:[%s1582 + $0x38] sm:$0xf]
        %v1598 = vld [vmem:[%s1582 + $0x3c] sm:$0xf]
        %v1607 = vunpack.c.l.b16 %v1574
        %v1608 = vunpack.c.l.b16 %v1575
        %v1609 = vunpack.c.l.b16 %v1576
        %v1610 = vunpack.c.l.b16 %v1577
        %v1611 = vunpack.c.l.b16 %v1578
        %v1612 = vunpack.c.l.b16 %v1579
        %v1613 = vunpack.c.l.b16 %v1580
        %v1614 = vunpack.c.l.b16 %v1581
        %v1615 = vpack.c.b16 %v1608, %v1607
        %v1616 = vpack.c.b16 %v1610, %v1609
        %v1617 = vpack.c.b16 %v1612, %v1611
        %v1618 = vpack.c.b16 %v1614, %v1613
        %v1639 = vunpack.c.l.b16 %v1583
        %v1640 = vunpack.c.l.b16 %v1584
        %v1641 = vunpack.c.l.b16 %v1585
        %v1642 = vunpack.c.l.b16 %v1586
        %v1643 = vunpack.c.l.b16 %v1587
        %v1644 = vunpack.c.l.b16 %v1588
        %v1645 = vunpack.c.l.b16 %v1589
        %v1646 = vunpack.c.l.b16 %v1590
        %v1647 = vunpack.c.l.b16 %v1591
        %v1648 = vunpack.c.l.b16 %v1592
        %v1649 = vunpack.c.l.b16 %v1593
        %v1650 = vunpack.c.l.b16 %v1594
        %v1651 = vunpack.c.l.b16 %v1595
        %v1652 = vunpack.c.l.b16 %v1596
        %v1653 = vunpack.c.l.b16 %v1597
        %v1654 = vunpack.c.l.b16 %v1598
        %v1655 = vpack.c.b16 %v1640, %v1639
        %v1656 = vpack.c.b16 %v1642, %v1641
        %v1657 = vpack.c.b16 %v1644, %v1643
        %v1658 = vpack.c.b16 %v1646, %v1645
        %v1659 = vpack.c.b16 %v1648, %v1647
        %v1660 = vpack.c.b16 %v1650, %v1649
        %v1661 = vpack.c.b16 %v1652, %v1651
        %v1662 = vpack.c.b16 %v1654, %v1653
        %1671 = vmatprep.subr.bf16.mxu0 0
        %1672 = vmatpush1.bf16.msra.mxu0 %v1655
        %1673 = vmatprep.subr.bf16.mxu0 0
        %1674 = vmatpush1.bf16.msra.mxu0 %v1656
        %1675 = vmatprep.subr.bf16.mxu0 0
        %1676 = vmatpush1.bf16.msra.mxu0 %v1657
        %1677 = vmatprep.subr.bf16.mxu0 0
        %1678 = vmatpush1.bf16.msra.mxu0 %v1658
        %1679 = vmatprep.subr.bf16.mxu0 0
        %1680 = vmatpush1.bf16.msra.mxu0 %v1659
        %1681 = vmatprep.subr.bf16.mxu0 0
        %1682 = vmatpush1.bf16.msra.mxu0 %v1660
        %1683 = vmatprep.subr.bf16.mxu0 0
        %1684 = vmatpush1.bf16.msra.mxu0 %v1661
        %1685 = vmatprep.subr.bf16.mxu0 0
        %1686 = vmatpush1.bf16.msra.mxu0 %v1662
        %1687 = vmatprep.subr.bf16.mxu0 0
        %1688 = vmatpush1.bf16.msra.mxu0 0
        %1689 = vmatprep.subr.bf16.mxu0 0
        %1690 = vmatpush1.bf16.msra.mxu0 0
        %1691 = vmatprep.subr.bf16.mxu0 0
        %1692 = vmatpush1.bf16.msra.mxu0 0
        %1693 = vmatprep.subr.bf16.mxu0 0
        %1694 = vmatpush1.bf16.msra.mxu0 0
        %1695 = vmatprep.subr.bf16.mxu0 0
        %1696 = vmatpush1.bf16.msra.mxu0 0
        %1697 = vmatprep.subr.bf16.mxu0 0
        %1698 = vmatpush1.bf16.msra.mxu0 0
        %1699 = vmatprep.subr.bf16.mxu0 0
        %1700 = vmatpush1.bf16.msra.mxu0 0
        %1701 = vmatprep.subr.bf16.mxu0 0
        %1702 = vmatpush1.bf16.msra.mxu0 0
        %1703 = vmatprep.mubr.bf16.mxu0 0
        %1704 = vmatmul.mubr.bf16.gmra.mrb[0].mxu0 %v1615
        %v1705 = vpop.f32.mrb[0].mxu0
        %v1706 = vadd.f32 0.0, %v1705
        %v1707 = vpop.f32.mrb[0].mxu0
        %v1708 = vpop.f32.mrb[0].mxu0
        %v1709 = vadd.f32 0.0, %v1708
        %v1710 = vpop.f32.mrb[0].mxu0
        %1711 = vmatprep.mubr.bf16.mxu0 0
        %1712 = vmatmul.mubr.bf16.gmra.mrb[0].mxu0 %v1616
        %v1713 = vpop.f32.mrb[0].mxu0
        %v1714 = vadd.f32 0.0, %v1713
        %v1715 = vpop.f32.mrb[0].mxu0
        %v1716 = vpop.f32.mrb[0].mxu0
        %v1717 = vadd.f32 0.0, %v1716
        %v1718 = vpop.f32.mrb[0].mxu0
        %1719 = vmatprep.mubr.bf16.mxu0 0
        %1720 = vmatmul.mubr.bf16.gmra.mrb[0].mxu0 %v1617
        %v1721 = vpop.f32.mrb[0].mxu0
        %v1722 = vadd.f32 0.0, %v1721
        %v1723 = vpop.f32.mrb[0].mxu0
        %v1724 = vpop.f32.mrb[0].mxu0
        %v1725 = vadd.f32 0.0, %v1724
        %v1726 = vpop.f32.mrb[0].mxu0
        %1727 = vmatprep.mubr.bf16.mxu0 0
        %1728 = vmatmul.mubr.bf16.gmra.mrb[0].mxu0 %v1618
        %v1729 = vpop.f32.mrb[0].mxu0
        %v1730 = vadd.f32 0.0, %v1729
        %v1731 = vpop.f32.mrb[0].mxu0
        %v1732 = vpop.f32.mrb[0].mxu0
        %v1733 = vadd.f32 0.0, %v1732
        %v1734 = vpop.f32.mrb[0].mxu0
        %1735 = vdwg.mxu0
        %v1736 = vadd.f32 %v1566, %v1706
        %v1737 = vadd.f32 %v1567, %v1709
        %v1738 = vadd.f32 %v1568, %v1714
        %v1739 = vadd.f32 %v1569, %v1717
        %v1740 = vadd.f32 %v1570, %v1722
        %v1741 = vadd.f32 %v1571, %v1725
        %v1742 = vadd.f32 %v1572, %v1730
        %v1743 = vadd.f32 %v1573, %v1733
        %v1744 = vld [vmem:[%s685] sm:$0xf]
        %v1745 = vld [vmem:[%s685 + $0x4] sm:$0x1]
        %v1746 = vld [vmem:[%s685 + $0x8] sm:$0xf]
        %v1747 = vld [vmem:[%s685 + $0xc] sm:$0x1]
        %v1748 = vld [vmem:[%s685 + $0x10] sm:$0xf]
        %v1749 = vld [vmem:[%s685 + $0x14] sm:$0x1]
        %v1750 = vld [vmem:[%s685 + $0x18] sm:$0xf]
        %v1751 = vld [vmem:[%s685 + $0x1c] sm:$0x1]
        %v1752 = vld [vmem:[%s685 + $0x20] sm:$0xf]
        %v1753 = vld [vmem:[%s685 + $0x24] sm:$0x1]
        %v1754 = vld [vmem:[%s685 + $0x28] sm:$0xf]
        %v1755 = vld [vmem:[%s685 + $0x2c] sm:$0x1]
        %v1756 = vld [vmem:[%s685 + $0x30] sm:$0xf]
        %v1757 = vld [vmem:[%s685 + $0x34] sm:$0x1]
        %v1758 = vld [vmem:[%s685 + $0x38] sm:$0xf]
        %v1759 = vld [vmem:[%s685 + $0x3c] sm:$0x1]
        %v1761 = vshrl.u32 %v1744, 16
        %v1763 = vrot.slane %v1761, 4
        %v1764 = vshll.u32 %v1744, 16
        %v1766 = vrot.slane %v1764, 5
        %v1767 = vor.u32 %v1763, %v1766
        %v1768 = vrot.slane %v1767, 4
        %v1770 = vshll.u32 %v1745, 16
        %v1772 = vrot.slane %v1770, 5
        %v1773 = vsel %vm1094, %v1768, %v1772
        %v1775 = vshrl.u32 %v1746, 16
        %v1777 = vrot.slane %v1775, 4
        %v1778 = vshll.u32 %v1746, 16
        %v1780 = vrot.slane %v1778, 5
        %v1781 = vor.u32 %v1777, %v1780
        %v1782 = vrot.slane %v1781, 4
        %v1784 = vshll.u32 %v1747, 16
        %v1786 = vrot.slane %v1784, 5
        %v1787 = vsel %vm1094, %v1782, %v1786
        %v1789 = vshrl.u32 %v1748, 16
        %v1791 = vrot.slane %v1789, 4
        %v1792 = vshll.u32 %v1748, 16
        %v1794 = vrot.slane %v1792, 5
        %v1795 = vor.u32 %v1791, %v1794
        %v1796 = vrot.slane %v1795, 4
        %v1798 = vshll.u32 %v1749, 16
        %v1800 = vrot.slane %v1798, 5
        %v1801 = vsel %vm1094, %v1796, %v1800
        %v1803 = vshrl.u32 %v1750, 16
        %v1805 = vrot.slane %v1803, 4
        %v1806 = vshll.u32 %v1750, 16
        %v1808 = vrot.slane %v1806, 5
        %v1809 = vor.u32 %v1805, %v1808
        %v1810 = vrot.slane %v1809, 4
        %v1812 = vshll.u32 %v1751, 16
        %v1814 = vrot.slane %v1812, 5
        %v1815 = vsel %vm1094, %v1810, %v1814
        %v1817 = vshrl.u32 %v1752, 16
        %v1819 = vrot.slane %v1817, 4
        %v1820 = vshll.u32 %v1752, 16
        %v1822 = vrot.slane %v1820, 5
        %v1823 = vor.u32 %v1819, %v1822
        %v1824 = vrot.slane %v1823, 4
        %v1826 = vshll.u32 %v1753, 16
        %v1828 = vrot.slane %v1826, 5
        %v1829 = vsel %vm1094, %v1824, %v1828
        %v1831 = vshrl.u32 %v1754, 16
        %v1833 = vrot.slane %v1831, 4
        %v1834 = vshll.u32 %v1754, 16
        %v1836 = vrot.slane %v1834, 5
        %v1837 = vor.u32 %v1833, %v1836
        %v1838 = vrot.slane %v1837, 4
        %v1840 = vshll.u32 %v1755, 16
        %v1842 = vrot.slane %v1840, 5
        %v1843 = vsel %vm1094, %v1838, %v1842
        %v1845 = vshrl.u32 %v1756, 16
        %v1847 = vrot.slane %v1845, 4
        %v1848 = vshll.u32 %v1756, 16
        %v1850 = vrot.slane %v1848, 5
        %v1851 = vor.u32 %v1847, %v1850
        %v1852 = vrot.slane %v1851, 4
        %v1854 = vshll.u32 %v1757, 16
        %v1856 = vrot.slane %v1854, 5
        %v1857 = vsel %vm1094, %v1852, %v1856
        %v1859 = vshrl.u32 %v1758, 16
        %v1861 = vrot.slane %v1859, 4
        %v1862 = vshll.u32 %v1758, 16
        %v1864 = vrot.slane %v1862, 5
        %v1865 = vor.u32 %v1861, %v1864
        %v1866 = vrot.slane %v1865, 4
        %v1868 = vshll.u32 %v1759, 16
        %v1870 = vrot.slane %v1868, 5
        %v1871 = vsel %vm1094, %v1866, %v1870
        %s1872 = scalar_lea.vmem %s4, 256
        %v1873 = vld [vmem:[%s1872] sm:$0xf]
        %v1874 = vld [vmem:[%s1872 + $0x4] sm:$0xf]
        %v1875 = vld [vmem:[%s1872 + $0x8] sm:$0xf]
        %v1876 = vld [vmem:[%s1872 + $0xc] sm:$0xf]
        %v1877 = vld [vmem:[%s1872 + $0x10] sm:$0xf]
        %v1878 = vld [vmem:[%s1872 + $0x14] sm:$0xf]
        %v1879 = vld [vmem:[%s1872 + $0x18] sm:$0xf]
        %v1880 = vld [vmem:[%s1872 + $0x1c] sm:$0xf]
        %v1881 = vld [vmem:[%s1872 + $0x20] sm:$0xf]
        %v1882 = vld [vmem:[%s1872 + $0x24] sm:$0xf]
        %v1883 = vld [vmem:[%s1872 + $0x28] sm:$0xf]
        %v1884 = vld [vmem:[%s1872 + $0x2c] sm:$0xf]
        %v1885 = vld [vmem:[%s1872 + $0x30] sm:$0xf]
        %v1886 = vld [vmem:[%s1872 + $0x34] sm:$0xf]
        %v1887 = vld [vmem:[%s1872 + $0x38] sm:$0xf]
        %v1888 = vld [vmem:[%s1872 + $0x3c] sm:$0xf]
        %v1889 = vunpack.c.l.b16 %v1773
        %v1890 = vunpack.c.l.b16 %v1787
        %v1891 = vunpack.c.l.b16 %v1801
        %v1892 = vunpack.c.l.b16 %v1815
        %v1893 = vunpack.c.l.b16 %v1829
        %v1894 = vunpack.c.l.b16 %v1843
        %v1895 = vunpack.c.l.b16 %v1857
        %v1896 = vunpack.c.l.b16 %v1871
        %v1897 = vpack.c.b16 %v1890, %v1889
        %v1898 = vpack.c.b16 %v1892, %v1891
        %v1899 = vpack.c.b16 %v1894, %v1893
        %v1900 = vpack.c.b16 %v1896, %v1895
        %v1921 = vunpack.c.l.b16 %v1873
        %v1922 = vunpack.c.l.b16 %v1874
        %v1923 = vunpack.c.l.b16 %v1875
        %v1924 = vunpack.c.l.b16 %v1876
        %v1925 = vunpack.c.l.b16 %v1877
        %v1926 = vunpack.c.l.b16 %v1878
        %v1927 = vunpack.c.l.b16 %v1879
        %v1928 = vunpack.c.l.b16 %v1880
        %v1929 = vunpack.c.l.b16 %v1881
        %v1930 = vunpack.c.l.b16 %v1882
        %v1931 = vunpack.c.l.b16 %v1883
        %v1932 = vunpack.c.l.b16 %v1884
        %v1933 = vunpack.c.l.b16 %v1885
        %v1934 = vunpack.c.l.b16 %v1886
        %v1935 = vunpack.c.l.b16 %v1887
        %v1936 = vunpack.c.l.b16 %v1888
        %v1937 = vpack.c.b16 %v1922, %v1921
        %v1938 = vpack.c.b16 %v1924, %v1923
        %v1939 = vpack.c.b16 %v1926, %v1925
        %v1940 = vpack.c.b16 %v1928, %v1927
        %v1941 = vpack.c.b16 %v1930, %v1929
        %v1942 = vpack.c.b16 %v1932, %v1931
        %v1943 = vpack.c.b16 %v1934, %v1933
        %v1944 = vpack.c.b16 %v1936, %v1935
        %1953 = vmatprep.subr.bf16.mxu0 0
        %1954 = vmatpush1.bf16.msra.mxu0 %v1937
        %1955 = vmatprep.subr.bf16.mxu0 0
        %1956 = vmatpush1.bf16.msra.mxu0 %v1938
        %1957 = vmatprep.subr.bf16.mxu0 0
        %1958 = vmatpush1.bf16.msra.mxu0 %v1939
        %1959 = vmatprep.subr.bf16.mxu0 0
        %1960 = vmatpush1.bf16.msra.mxu0 %v1940
        %1961 = vmatprep.subr.bf16.mxu0 0
        %1962 = vmatpush1.bf16.msra.mxu0 %v1941
        %1963 = vmatprep.subr.bf16.mxu0 0
        %1964 = vmatpush1.bf16.msra.mxu0 %v1942
        %1965 = vmatprep.subr.bf16.mxu0 0
        %1966 = vmatpush1.bf16.msra.mxu0 %v1943
        %1967 = vmatprep.subr.bf16.mxu0 0
        %1968 = vmatpush1.bf16.msra.mxu0 %v1944
        %1969 = vmatprep.subr.bf16.mxu0 0
        %1970 = vmatpush1.bf16.msra.mxu0 0
        %1971 = vmatprep.subr.bf16.mxu0 0
        %1972 = vmatpush1.bf16.msra.mxu0 0
        %1973 = vmatprep.subr.bf16.mxu0 0
        %1974 = vmatpush1.bf16.msra.mxu0 0
        %1975 = vmatprep.subr.bf16.mxu0 0
        %1976 = vmatpush1.bf16.msra.mxu0 0
        %1977 = vmatprep.subr.bf16.mxu0 0
        %1978 = vmatpush1.bf16.msra.mxu0 0
        %1979 = vmatprep.subr.bf16.mxu0 0
        %1980 = vmatpush1.bf16.msra.mxu0 0
        %1981 = vmatprep.subr.bf16.mxu0 0
        %1982 = vmatpush1.bf16.msra.mxu0 0
        %1983 = vmatprep.subr.bf16.mxu0 0
        %1984 = vmatpush1.bf16.msra.mxu0 0
        %1985 = vmatprep.mubr.bf16.mxu0 0
        %1986 = vmatmul.mubr.bf16.gmra.mrb[0].mxu0 %v1897
        %v1987 = vpop.f32.mrb[0].mxu0
        %v1988 = vadd.f32 0.0, %v1987
        %v1989 = vpop.f32.mrb[0].mxu0
        %v1990 = vpop.f32.mrb[0].mxu0
        %v1991 = vadd.f32 0.0, %v1990
        %v1992 = vpop.f32.mrb[0].mxu0
        %1993 = vmatprep.mubr.bf16.mxu0 0
        %1994 = vmatmul.mubr.bf16.gmra.mrb[0].mxu0 %v1898
        %v1995 = vpop.f32.mrb[0].mxu0
        %v1996 = vadd.f32 0.0, %v1995
        %v1997 = vpop.f32.mrb[0].mxu0
        %v1998 = vpop.f32.mrb[0].mxu0
        %v1999 = vadd.f32 0.0, %v1998
        %v2000 = vpop.f32.mrb[0].mxu0
        %2001 = vmatprep.mubr.bf16.mxu0 0
        %2002 = vmatmul.mubr.bf16.gmra.mrb[0].mxu0 %v1899
        %v2003 = vpop.f32.mrb[0].mxu0
        %v2004 = vadd.f32 0.0, %v2003
        %v2005 = vpop.f32.mrb[0].mxu0
        %v2006 = vpop.f32.mrb[0].mxu0
        %v2007 = vadd.f32 0.0, %v2006
        %v2008 = vpop.f32.mrb[0].mxu0
        %2009 = vmatprep.mubr.bf16.mxu0 0
        %2010 = vmatmul.mubr.bf16.gmra.mrb[0].mxu0 %v1900
        %v2011 = vpop.f32.mrb[0].mxu0
        %v2012 = vadd.f32 0.0, %v2011
        %v2013 = vpop.f32.mrb[0].mxu0
        %v2014 = vpop.f32.mrb[0].mxu0
        %v2015 = vadd.f32 0.0, %v2014
        %v2016 = vpop.f32.mrb[0].mxu0
        %2017 = vdwg.mxu0
        %v2018 = vadd.f32 %v1736, %v1988
        %v2019 = vadd.f32 %v1737, %v1991
        %v2020 = vadd.f32 %v1738, %v1996
        %v2021 = vadd.f32 %v1739, %v1999
        %v2022 = vadd.f32 %v1740, %v2004
        %v2023 = vadd.f32 %v1741, %v2007
        %v2024 = vadd.f32 %v1742, %v2012
        %v2025 = vadd.f32 %v1743, %v2015
        %v2026 = vld [vmem:[%s685] sm:$0xe]
        %v2027 = vld [vmem:[%s685 + $0x8] sm:$0xe]
        %v2028 = vld [vmem:[%s685 + $0x10] sm:$0xe]
        %v2029 = vld [vmem:[%s685 + $0x18] sm:$0xe]
        %v2030 = vld [vmem:[%s685 + $0x20] sm:$0xe]
        %v2031 = vld [vmem:[%s685 + $0x28] sm:$0xe]
        %v2032 = vld [vmem:[%s685 + $0x30] sm:$0xe]
        %v2033 = vld [vmem:[%s685 + $0x38] sm:$0xe]
        %v2050 = vrot.slane %v2026, 5
        %v2051 = vrot.slane %v2050, 4
        %v2052 = vrot.slane %v1745, 5
        %v2053 = vsel %vm1387, %v2051, %v2052
        %v2054 = vrot.slane %v2027, 5
        %v2055 = vrot.slane %v2054, 4
        %v2056 = vrot.slane %v1747, 5
        %v2057 = vsel %vm1387, %v2055, %v2056
        %v2058 = vrot.slane %v2028, 5
        %v2059 = vrot.slane %v2058, 4
        %v2060 = vrot.slane %v1749, 5
        %v2061 = vsel %vm1387, %v2059, %v2060
        %v2062 = vrot.slane %v2029, 5
        %v2063 = vrot.slane %v2062, 4
        %v2064 = vrot.slane %v1751, 5
        %v2065 = vsel %vm1387, %v2063, %v2064
        %v2066 = vrot.slane %v2030, 5
        %v2067 = vrot.slane %v2066, 4
        %v2068 = vrot.slane %v1753, 5
        %v2069 = vsel %vm1387, %v2067, %v2068
        %v2070 = vrot.slane %v2031, 5
        %v2071 = vrot.slane %v2070, 4
        %v2072 = vrot.slane %v1755, 5
        %v2073 = vsel %vm1387, %v2071, %v2072
        %v2074 = vrot.slane %v2032, 5
        %v2075 = vrot.slane %v2074, 4
        %v2076 = vrot.slane %v1757, 5
        %v2077 = vsel %vm1387, %v2075, %v2076
        %v2078 = vrot.slane %v2033, 5
        %v2079 = vrot.slane %v2078, 4
        %v2080 = vrot.slane %v1759, 5
        %v2081 = vsel %vm1387, %v2079, %v2080
        %s2082 = scalar_lea.vmem %s4, 320
        %v2083 = vld [vmem:[%s2082] sm:$0xf]
        %v2084 = vld [vmem:[%s2082 + $0x4] sm:$0xf]
        %v2085 = vld [vmem:[%s2082 + $0x8] sm:$0xf]
        %v2086 = vld [vmem:[%s2082 + $0xc] sm:$0xf]
        %v2087 = vld [vmem:[%s2082 + $0x10] sm:$0xf]
        %v2088 = vld [vmem:[%s2082 + $0x14] sm:$0xf]
        %v2089 = vld [vmem:[%s2082 + $0x18] sm:$0xf]
        %v2090 = vld [vmem:[%s2082 + $0x1c] sm:$0xf]
        %v2091 = vld [vmem:[%s2082 + $0x20] sm:$0xf]
        %v2092 = vld [vmem:[%s2082 + $0x24] sm:$0xf]
        %v2093 = vld [vmem:[%s2082 + $0x28] sm:$0xf]
        %v2094 = vld [vmem:[%s2082 + $0x2c] sm:$0xf]
        %v2095 = vld [vmem:[%s2082 + $0x30] sm:$0xf]
        %v2096 = vld [vmem:[%s2082 + $0x34] sm:$0xf]
        %v2097 = vld [vmem:[%s2082 + $0x38] sm:$0xf]
        %v2098 = vld [vmem:[%s2082 + $0x3c] sm:$0xf]
        %v2099 = vunpack.c.l.b16 %v2053
        %v2100 = vunpack.c.l.b16 %v2057
        %v2101 = vunpack.c.l.b16 %v2061
        %v2102 = vunpack.c.l.b16 %v2065
        %v2103 = vunpack.c.l.b16 %v2069
        %v2104 = vunpack.c.l.b16 %v2073
        %v2105 = vunpack.c.l.b16 %v2077
        %v2106 = vunpack.c.l.b16 %v2081
        %v2107 = vpack.c.b16 %v2100, %v2099
        %v2108 = vpack.c.b16 %v2102, %v2101
        %v2109 = vpack.c.b16 %v2104, %v2103
        %v2110 = vpack.c.b16 %v2106, %v2105
        %v2131 = vunpack.c.l.b16 %v2083
        %v2132 = vunpack.c.l.b16 %v2084
        %v2133 = vunpack.c.l.b16 %v2085
        %v2134 = vunpack.c.l.b16 %v2086
        %v2135 = vunpack.c.l.b16 %v2087
        %v2136 = vunpack.c.l.b16 %v2088
        %v2137 = vunpack.c.l.b16 %v2089
        %v2138 = vunpack.c.l.b16 %v2090
        %v2139 = vunpack.c.l.b16 %v2091
        %v2140 = vunpack.c.l.b16 %v2092
        %v2141 = vunpack.c.l.b16 %v2093
        %v2142 = vunpack.c.l.b16 %v2094
        %v2143 = vunpack.c.l.b16 %v2095
        %v2144 = vunpack.c.l.b16 %v2096
        %v2145 = vunpack.c.l.b16 %v2097
        %v2146 = vunpack.c.l.b16 %v2098
        %v2147 = vpack.c.b16 %v2132, %v2131
        %v2148 = vpack.c.b16 %v2134, %v2133
        %v2149 = vpack.c.b16 %v2136, %v2135
        %v2150 = vpack.c.b16 %v2138, %v2137
        %v2151 = vpack.c.b16 %v2140, %v2139
        %v2152 = vpack.c.b16 %v2142, %v2141
        %v2153 = vpack.c.b16 %v2144, %v2143
        %v2154 = vpack.c.b16 %v2146, %v2145
        %2163 = vmatprep.subr.bf16.mxu0 0
        %2164 = vmatpush1.bf16.msra.mxu0 %v2147
        %2165 = vmatprep.subr.bf16.mxu0 0
        %2166 = vmatpush1.bf16.msra.mxu0 %v2148
        %2167 = vmatprep.subr.bf16.mxu0 0
        %2168 = vmatpush1.bf16.msra.mxu0 %v2149
        %2169 = vmatprep.subr.bf16.mxu0 0
        %2170 = vmatpush1.bf16.msra.mxu0 %v2150
        %2171 = vmatprep.subr.bf16.mxu0 0
        %2172 = vmatpush1.bf16.msra.mxu0 %v2151
        %2173 = vmatprep.subr.bf16.mxu0 0
        %2174 = vmatpush1.bf16.msra.mxu0 %v2152
        %2175 = vmatprep.subr.bf16.mxu0 0
        %2176 = vmatpush1.bf16.msra.mxu0 %v2153
        %2177 = vmatprep.subr.bf16.mxu0 0
        %2178 = vmatpush1.bf16.msra.mxu0 %v2154
        %2179 = vmatprep.subr.bf16.mxu0 0
        %2180 = vmatpush1.bf16.msra.mxu0 0
        %2181 = vmatprep.subr.bf16.mxu0 0
        %2182 = vmatpush1.bf16.msra.mxu0 0
        %2183 = vmatprep.subr.bf16.mxu0 0
        %2184 = vmatpush1.bf16.msra.mxu0 0
        %2185 = vmatprep.subr.bf16.mxu0 0
        %2186 = vmatpush1.bf16.msra.mxu0 0
        %2187 = vmatprep.subr.bf16.mxu0 0
        %2188 = vmatpush1.bf16.msra.mxu0 0
        %2189 = vmatprep.subr.bf16.mxu0 0
        %2190 = vmatpush1.bf16.msra.mxu0 0
        %2191 = vmatprep.subr.bf16.mxu0 0
        %2192 = vmatpush1.bf16.msra.mxu0 0
        %2193 = vmatprep.subr.bf16.mxu0 0
        %2194 = vmatpush1.bf16.msra.mxu0 0
        %2195 = vmatprep.mubr.bf16.mxu0 0
        %2196 = vmatmul.mubr.bf16.gmra.mrb[0].mxu0 %v2107
        %v2197 = vpop.f32.mrb[0].mxu0
        %v2198 = vadd.f32 0.0, %v2197
        %v2199 = vpop.f32.mrb[0].mxu0
        %v2200 = vpop.f32.mrb[0].mxu0
        %v2201 = vadd.f32 0.0, %v2200
        %v2202 = vpop.f32.mrb[0].mxu0
        %2203 = vmatprep.mubr.bf16.mxu0 0
        %2204 = vmatmul.mubr.bf16.gmra.mrb[0].mxu0 %v2108
        %v2205 = vpop.f32.mrb[0].mxu0
        %v2206 = vadd.f32 0.0, %v2205
        %v2207 = vpop.f32.mrb[0].mxu0
        %v2208 = vpop.f32.mrb[0].mxu0
        %v2209 = vadd.f32 0.0, %v2208
        %v2210 = vpop.f32.mrb[0].mxu0
        %2211 = vmatprep.mubr.bf16.mxu0 0
        %2212 = vmatmul.mubr.bf16.gmra.mrb[0].mxu0 %v2109
        %v2213 = vpop.f32.mrb[0].mxu0
        %v2214 = vadd.f32 0.0, %v2213
        %v2215 = vpop.f32.mrb[0].mxu0
        %v2216 = vpop.f32.mrb[0].mxu0
        %v2217 = vadd.f32 0.0, %v2216
        %v2218 = vpop.f32.mrb[0].mxu0
        %2219 = vmatprep.mubr.bf16.mxu0 0
        %2220 = vmatmul.mubr.bf16.gmra.mrb[0].mxu0 %v2110
        %v2221 = vpop.f32.mrb[0].mxu0
        %v2222 = vadd.f32 0.0, %v2221
        %v2223 = vpop.f32.mrb[0].mxu0
        %v2224 = vpop.f32.mrb[0].mxu0
        %v2225 = vadd.f32 0.0, %v2224
        %v2226 = vpop.f32.mrb[0].mxu0
        %2227 = vdwg.mxu0
        %v2228 = vadd.f32 %v2018, %v2198
        %v2229 = vadd.f32 %v2019, %v2201
        %v2230 = vadd.f32 %v2020, %v2206
        %v2231 = vadd.f32 %v2021, %v2209
        %v2232 = vadd.f32 %v2022, %v2214
        %v2233 = vadd.f32 %v2023, %v2217
        %v2234 = vadd.f32 %v2024, %v2222
        %v2235 = vadd.f32 %v2025, %v2225
        %s2236 = scalar_lea.vmem [#allocation2], 16
        %v2237 = vld [vmem:[%s2236] sm:$0xf]
        %v2238 = vld [vmem:[%s2236 + $0x8] sm:$0xf]
        %v2239 = vld [vmem:[%s2236 + $0x10] sm:$0xf]
        %v2240 = vld [vmem:[%s2236 + $0x18] sm:$0xf]
        %v2241 = vld [vmem:[%s2236 + $0x20] sm:$0xf]
        %v2242 = vld [vmem:[%s2236 + $0x28] sm:$0xf]
        %v2243 = vld [vmem:[%s2236 + $0x30] sm:$0xf]
        %v2244 = vld [vmem:[%s2236 + $0x38] sm:$0xf]
        %s2245 = scalar_lea.vmem %s4, 384
        %v2246 = vld [vmem:[%s2245] sm:$0xf]
        %v2247 = vld [vmem:[%s2245 + $0x4] sm:$0xf]
        %v2248 = vld [vmem:[%s2245 + $0x8] sm:$0xf]
        %v2249 = vld [vmem:[%s2245 + $0xc] sm:$0xf]
        %v2250 = vld [vmem:[%s2245 + $0x10] sm:$0xf]
        %v2251 = vld [vmem:[%s2245 + $0x14] sm:$0xf]
        %v2252 = vld [vmem:[%s2245 + $0x18] sm:$0xf]
        %v2253 = vld [vmem:[%s2245 + $0x1c] sm:$0xf]
        %v2254 = vld [vmem:[%s2245 + $0x20] sm:$0xf]
        %v2255 = vld [vmem:[%s2245 + $0x24] sm:$0xf]
        %v2256 = vld [vmem:[%s2245 + $0x28] sm:$0xf]
        %v2257 = vld [vmem:[%s2245 + $0x2c] sm:$0xf]
        %v2258 = vld [vmem:[%s2245 + $0x30] sm:$0xf]
        %v2259 = vld [vmem:[%s2245 + $0x34] sm:$0xf]
        %v2260 = vld [vmem:[%s2245 + $0x38] sm:$0xf]
        %v2261 = vld [vmem:[%s2245 + $0x3c] sm:$0xf]
        %v2270 = vunpack.c.l.b16 %v2237
        %v2271 = vunpack.c.l.b16 %v2238
        %v2272 = vunpack.c.l.b16 %v2239
        %v2273 = vunpack.c.l.b16 %v2240
        %v2274 = vunpack.c.l.b16 %v2241
        %v2275 = vunpack.c.l.b16 %v2242
        %v2276 = vunpack.c.l.b16 %v2243
        %v2277 = vunpack.c.l.b16 %v2244
        %v2278 = vpack.c.b16 %v2271, %v2270
        %v2279 = vpack.c.b16 %v2273, %v2272
        %v2280 = vpack.c.b16 %v2275, %v2274
        %v2281 = vpack.c.b16 %v2277, %v2276
        %v2302 = vunpack.c.l.b16 %v2246
        %v2303 = vunpack.c.l.b16 %v2247
        %v2304 = vunpack.c.l.b16 %v2248
        %v2305 = vunpack.c.l.b16 %v2249
        %v2306 = vunpack.c.l.b16 %v2250
        %v2307 = vunpack.c.l.b16 %v2251
        %v2308 = vunpack.c.l.b16 %v2252
        %v2309 = vunpack.c.l.b16 %v2253
        %v2310 = vunpack.c.l.b16 %v2254
        %v2311 = vunpack.c.l.b16 %v2255
        %v2312 = vunpack.c.l.b16 %v2256
        %v2313 = vunpack.c.l.b16 %v2257
        %v2314 = vunpack.c.l.b16 %v2258
        %v2315 = vunpack.c.l.b16 %v2259
        %v2316 = vunpack.c.l.b16 %v2260
        %v2317 = vunpack.c.l.b16 %v2261
        %v2318 = vpack.c.b16 %v2303, %v2302
        %v2319 = vpack.c.b16 %v2305, %v2304
        %v2320 = vpack.c.b16 %v2307, %v2306
        %v2321 = vpack.c.b16 %v2309, %v2308
        %v2322 = vpack.c.b16 %v2311, %v2310
        %v2323 = vpack.c.b16 %v2313, %v2312
        %v2324 = vpack.c.b16 %v2315, %v2314
        %v2325 = vpack.c.b16 %v2317, %v2316
        %2334 = vmatprep.subr.bf16.mxu0 0
        %2335 = vmatpush1.bf16.msra.mxu0 %v2318
        %2336 = vmatprep.subr.bf16.mxu0 0
        %2337 = vmatpush1.bf16.msra.mxu0 %v2319
        %2338 = vmatprep.subr.bf16.mxu0 0
        %2339 = vmatpush1.bf16.msra.mxu0 %v2320
        %2340 = vmatprep.subr.bf16.mxu0 0
        %2341 = vmatpush1.bf16.msra.mxu0 %v2321
        %2342 = vmatprep.subr.bf16.mxu0 0
        %2343 = vmatpush1.bf16.msra.mxu0 %v2322
        %2344 = vmatprep.subr.bf16.mxu0 0
        %2345 = vmatpush1.bf16.msra.mxu0 %v2323
        %2346 = vmatprep.subr.bf16.mxu0 0
        %2347 = vmatpush1.bf16.msra.mxu0 %v2324
        %2348 = vmatprep.subr.bf16.mxu0 0
        %2349 = vmatpush1.bf16.msra.mxu0 %v2325
        %2350 = vmatprep.subr.bf16.mxu0 0
        %2351 = vmatpush1.bf16.msra.mxu0 0
        %2352 = vmatprep.subr.bf16.mxu0 0
        %2353 = vmatpush1.bf16.msra.mxu0 0
        %2354 = vmatprep.subr.bf16.mxu0 0
        %2355 = vmatpush1.bf16.msra.mxu0 0
        %2356 = vmatprep.subr.bf16.mxu0 0
        %2357 = vmatpush1.bf16.msra.mxu0 0
        %2358 = vmatprep.subr.bf16.mxu0 0
        %2359 = vmatpush1.bf16.msra.mxu0 0
        %2360 = vmatprep.subr.bf16.mxu0 0
        %2361 = vmatpush1.bf16.msra.mxu0 0
        %2362 = vmatprep.subr.bf16.mxu0 0
        %2363 = vmatpush1.bf16.msra.mxu0 0
        %2364 = vmatprep.subr.bf16.mxu0 0
        %2365 = vmatpush1.bf16.msra.mxu0 0
        %2366 = vmatprep.mubr.bf16.mxu0 0
        %2367 = vmatmul.mubr.bf16.gmra.mrb[0].mxu0 %v2278
        %v2368 = vpop.f32.mrb[0].mxu0
        %v2369 = vadd.f32 0.0, %v2368
        %v2370 = vpop.f32.mrb[0].mxu0
        %v2371 = vpop.f32.mrb[0].mxu0
        %v2372 = vadd.f32 0.0, %v2371
        %v2373 = vpop.f32.mrb[0].mxu0
        %2374 = vmatprep.mubr.bf16.mxu0 0
        %2375 = vmatmul.mubr.bf16.gmra.mrb[0].mxu0 %v2279
        %v2376 = vpop.f32.mrb[0].mxu0
        %v2377 = vadd.f32 0.0, %v2376
        %v2378 = vpop.f32.mrb[0].mxu0
        %v2379 = vpop.f32.mrb[0].mxu0
        %v2380 = vadd.f32 0.0, %v2379
        %v2381 = vpop.f32.mrb[0].mxu0
        %2382 = vmatprep.mubr.bf16.mxu0 0
        %2383 = vmatmul.mubr.bf16.gmra.mrb[0].mxu0 %v2280
        %v2384 = vpop.f32.mrb[0].mxu0
        %v2385 = vadd.f32 0.0, %v2384
        %v2386 = vpop.f32.mrb[0].mxu0
        %v2387 = vpop.f32.mrb[0].mxu0
        %v2388 = vadd.f32 0.0, %v2387
        %v2389 = vpop.f32.mrb[0].mxu0
        %2390 = vmatprep.mubr.bf16.mxu0 0
        %2391 = vmatmul.mubr.bf16.gmra.mrb[0].mxu0 %v2281
        %v2392 = vpop.f32.mrb[0].mxu0
        %v2393 = vadd.f32 0.0, %v2392
        %v2394 = vpop.f32.mrb[0].mxu0
        %v2395 = vpop.f32.mrb[0].mxu0
        %v2396 = vadd.f32 0.0, %v2395
        %v2397 = vpop.f32.mrb[0].mxu0
        %2398 = vdwg.mxu0
        %v2399 = vadd.f32 %v2228, %v2369
        %v2400 = vadd.f32 %v2229, %v2372
        %v2401 = vadd.f32 %v2230, %v2377
        %v2402 = vadd.f32 %v2231, %v2380
        %v2403 = vadd.f32 %v2232, %v2385
        %v2404 = vadd.f32 %v2233, %v2388
        %v2405 = vadd.f32 %v2234, %v2393
        %v2406 = vadd.f32 %v2235, %v2396
        %v2407 = vld [vmem:[%s2236] sm:$0xf]
        %v2408 = vld [vmem:[%s2236 + $0x4] sm:$0x1]
        %v2409 = vld [vmem:[%s2236 + $0x8] sm:$0xf]
        %v2410 = vld [vmem:[%s2236 + $0xc] sm:$0x1]
        %v2411 = vld [vmem:[%s2236 + $0x10] sm:$0xf]
        %v2412 = vld [vmem:[%s2236 + $0x14] sm:$0x1]
        %v2413 = vld [vmem:[%s2236 + $0x18] sm:$0xf]
        %v2414 = vld [vmem:[%s2236 + $0x1c] sm:$0x1]
        %v2415 = vld [vmem:[%s2236 + $0x20] sm:$0xf]
        %v2416 = vld [vmem:[%s2236 + $0x24] sm:$0x1]
        %v2417 = vld [vmem:[%s2236 + $0x28] sm:$0xf]
        %v2418 = vld [vmem:[%s2236 + $0x2c] sm:$0x1]
        %v2419 = vld [vmem:[%s2236 + $0x30] sm:$0xf]
        %v2420 = vld [vmem:[%s2236 + $0x34] sm:$0x1]
        %v2421 = vld [vmem:[%s2236 + $0x38] sm:$0xf]
        %v2422 = vld [vmem:[%s2236 + $0x3c] sm:$0x1]
        %v2424 = vshrl.u32 %v2407, 16
        %v2426 = vrot.slane %v2424, 4
        %v2427 = vshll.u32 %v2407, 16
        %v2429 = vrot.slane %v2427, 5
        %v2430 = vor.u32 %v2426, %v2429
        %v2431 = vrot.slane %v2430, 4
        %v2433 = vshll.u32 %v2408, 16
        %v2435 = vrot.slane %v2433, 5
        %v2436 = vsel %vm1094, %v2431, %v2435
        %v2438 = vshrl.u32 %v2409, 16
        %v2440 = vrot.slane %v2438, 4
        %v2441 = vshll.u32 %v2409, 16
        %v2443 = vrot.slane %v2441, 5
        %v2444 = vor.u32 %v2440, %v2443
        %v2445 = vrot.slane %v2444, 4
        %v2447 = vshll.u32 %v2410, 16
        %v2449 = vrot.slane %v2447, 5
        %v2450 = vsel %vm1094, %v2445, %v2449
        %v2452 = vshrl.u32 %v2411, 16
        %v2454 = vrot.slane %v2452, 4
        %v2455 = vshll.u32 %v2411, 16
        %v2457 = vrot.slane %v2455, 5
        %v2458 = vor.u32 %v2454, %v2457
        %v2459 = vrot.slane %v2458, 4
        %v2461 = vshll.u32 %v2412, 16
        %v2463 = vrot.slane %v2461, 5
        %v2464 = vsel %vm1094, %v2459, %v2463
        %v2466 = vshrl.u32 %v2413, 16
        %v2468 = vrot.slane %v2466, 4
        %v2469 = vshll.u32 %v2413, 16
        %v2471 = vrot.slane %v2469, 5
        %v2472 = vor.u32 %v2468, %v2471
        %v2473 = vrot.slane %v2472, 4
        %v2475 = vshll.u32 %v2414, 16
        %v2477 = vrot.slane %v2475, 5
        %v2478 = vsel %vm1094, %v2473, %v2477
        %v2480 = vshrl.u32 %v2415, 16
        %v2482 = vrot.slane %v2480, 4
        %v2483 = vshll.u32 %v2415, 16
        %v2485 = vrot.slane %v2483, 5
        %v2486 = vor.u32 %v2482, %v2485
        %v2487 = vrot.slane %v2486, 4
        %v2489 = vshll.u32 %v2416, 16
        %v2491 = vrot.slane %v2489, 5
        %v2492 = vsel %vm1094, %v2487, %v2491
        %v2494 = vshrl.u32 %v2417, 16
        %v2496 = vrot.slane %v2494, 4
        %v2497 = vshll.u32 %v2417, 16
        %v2499 = vrot.slane %v2497, 5
        %v2500 = vor.u32 %v2496, %v2499
        %v2501 = vrot.slane %v2500, 4
        %v2503 = vshll.u32 %v2418, 16
        %v2505 = vrot.slane %v2503, 5
        %v2506 = vsel %vm1094, %v2501, %v2505
        %v2508 = vshrl.u32 %v2419, 16
        %v2510 = vrot.slane %v2508, 4
        %v2511 = vshll.u32 %v2419, 16
        %v2513 = vrot.slane %v2511, 5
        %v2514 = vor.u32 %v2510, %v2513
        %v2515 = vrot.slane %v2514, 4
        %v2517 = vshll.u32 %v2420, 16
        %v2519 = vrot.slane %v2517, 5
        %v2520 = vsel %vm1094, %v2515, %v2519
        %v2522 = vshrl.u32 %v2421, 16
        %v2524 = vrot.slane %v2522, 4
        %v2525 = vshll.u32 %v2421, 16
        %v2527 = vrot.slane %v2525, 5
        %v2528 = vor.u32 %v2524, %v2527
        %v2529 = vrot.slane %v2528, 4
        %v2531 = vshll.u32 %v2422, 16
        %v2533 = vrot.slane %v2531, 5
        %v2534 = vsel %vm1094, %v2529, %v2533
        %s2535 = scalar_lea.vmem %s4, 448
        %v2536 = vld [vmem:[%s2535] sm:$0xf]
        %v2537 = vld [vmem:[%s2535 + $0x4] sm:$0xf]
        %v2538 = vld [vmem:[%s2535 + $0x8] sm:$0xf]
        %v2539 = vld [vmem:[%s2535 + $0xc] sm:$0xf]
        %v2540 = vld [vmem:[%s2535 + $0x10] sm:$0xf]
        %v2541 = vld [vmem:[%s2535 + $0x14] sm:$0xf]
        %v2542 = vld [vmem:[%s2535 + $0x18] sm:$0xf]
        %v2543 = vld [vmem:[%s2535 + $0x1c] sm:$0xf]
        %v2544 = vld [vmem:[%s2535 + $0x20] sm:$0xf]
        %v2545 = vld [vmem:[%s2535 + $0x24] sm:$0xf]
        %v2546 = vld [vmem:[%s2535 + $0x28] sm:$0xf]
        %v2547 = vld [vmem:[%s2535 + $0x2c] sm:$0xf]
        %v2548 = vld [vmem:[%s2535 + $0x30] sm:$0xf]
        %v2549 = vld [vmem:[%s2535 + $0x34] sm:$0xf]
        %v2550 = vld [vmem:[%s2535 + $0x38] sm:$0xf]
        %v2551 = vld [vmem:[%s2535 + $0x3c] sm:$0xf]
        %v2552 = vunpack.c.l.b16 %v2436
        %v2553 = vunpack.c.l.b16 %v2450
        %v2554 = vunpack.c.l.b16 %v2464
        %v2555 = vunpack.c.l.b16 %v2478
        %v2556 = vunpack.c.l.b16 %v2492
        %v2557 = vunpack.c.l.b16 %v2506
        %v2558 = vunpack.c.l.b16 %v2520
        %v2559 = vunpack.c.l.b16 %v2534
        %v2560 = vpack.c.b16 %v2553, %v2552
        %v2561 = vpack.c.b16 %v2555, %v2554
        %v2562 = vpack.c.b16 %v2557, %v2556
        %v2563 = vpack.c.b16 %v2559, %v2558
        %v2584 = vunpack.c.l.b16 %v2536
        %v2585 = vunpack.c.l.b16 %v2537
        %v2586 = vunpack.c.l.b16 %v2538
        %v2587 = vunpack.c.l.b16 %v2539
        %v2588 = vunpack.c.l.b16 %v2540
        %v2589 = vunpack.c.l.b16 %v2541
        %v2590 = vunpack.c.l.b16 %v2542
        %v2591 = vunpack.c.l.b16 %v2543
        %v2592 = vunpack.c.l.b16 %v2544
        %v2593 = vunpack.c.l.b16 %v2545
        %v2594 = vunpack.c.l.b16 %v2546
        %v2595 = vunpack.c.l.b16 %v2547
        %v2596 = vunpack.c.l.b16 %v2548
        %v2597 = vunpack.c.l.b16 %v2549
        %v2598 = vunpack.c.l.b16 %v2550
        %v2599 = vunpack.c.l.b16 %v2551
        %v2600 = vpack.c.b16 %v2585, %v2584
        %v2601 = vpack.c.b16 %v2587, %v2586
        %v2602 = vpack.c.b16 %v2589, %v2588
        %v2603 = vpack.c.b16 %v2591, %v2590
        %v2604 = vpack.c.b16 %v2593, %v2592
        %v2605 = vpack.c.b16 %v2595, %v2594
        %v2606 = vpack.c.b16 %v2597, %v2596
        %v2607 = vpack.c.b16 %v2599, %v2598
        %2616 = vmatprep.subr.bf16.mxu0 0
        %2617 = vmatpush1.bf16.msra.mxu0 %v2600
        %2618 = vmatprep.subr.bf16.mxu0 0
        %2619 = vmatpush1.bf16.msra.mxu0 %v2601
        %2620 = vmatprep.subr.bf16.mxu0 0
        %2621 = vmatpush1.bf16.msra.mxu0 %v2602
        %2622 = vmatprep.subr.bf16.mxu0 0
        %2623 = vmatpush1.bf16.msra.mxu0 %v2603
        %2624 = vmatprep.subr.bf16.mxu0 0
        %2625 = vmatpush1.bf16.msra.mxu0 %v2604
        %2626 = vmatprep.subr.bf16.mxu0 0
        %2627 = vmatpush1.bf16.msra.mxu0 %v2605
        %2628 = vmatprep.subr.bf16.mxu0 0
        %2629 = vmatpush1.bf16.msra.mxu0 %v2606
        %2630 = vmatprep.subr.bf16.mxu0 0
        %2631 = vmatpush1.bf16.msra.mxu0 %v2607
        %2632 = vmatprep.subr.bf16.mxu0 0
        %2633 = vmatpush1.bf16.msra.mxu0 0
        %2634 = vmatprep.subr.bf16.mxu0 0
        %2635 = vmatpush1.bf16.msra.mxu0 0
        %2636 = vmatprep.subr.bf16.mxu0 0
        %2637 = vmatpush1.bf16.msra.mxu0 0
        %2638 = vmatprep.subr.bf16.mxu0 0
        %2639 = vmatpush1.bf16.msra.mxu0 0
        %2640 = vmatprep.subr.bf16.mxu0 0
        %2641 = vmatpush1.bf16.msra.mxu0 0
        %2642 = vmatprep.subr.bf16.mxu0 0
        %2643 = vmatpush1.bf16.msra.mxu0 0
        %2644 = vmatprep.subr.bf16.mxu0 0
        %2645 = vmatpush1.bf16.msra.mxu0 0
        %2646 = vmatprep.subr.bf16.mxu0 0
        %2647 = vmatpush1.bf16.msra.mxu0 0
        %2648 = vmatprep.mubr.bf16.mxu0 0
        %2649 = vmatmul.mubr.bf16.gmra.mrb[0].mxu0 %v2560
        %v2650 = vpop.f32.mrb[0].mxu0
        %v2651 = vadd.f32 0.0, %v2650
        %v2652 = vpop.f32.mrb[0].mxu0
        %v2653 = vpop.f32.mrb[0].mxu0
        %v2654 = vadd.f32 0.0, %v2653
        %v2655 = vpop.f32.mrb[0].mxu0
        %2656 = vmatprep.mubr.bf16.mxu0 0
        %2657 = vmatmul.mubr.bf16.gmra.mrb[0].mxu0 %v2561
        %v2658 = vpop.f32.mrb[0].mxu0
        %v2659 = vadd.f32 0.0, %v2658
        %v2660 = vpop.f32.mrb[0].mxu0
        %v2661 = vpop.f32.mrb[0].mxu0
        %v2662 = vadd.f32 0.0, %v2661
        %v2663 = vpop.f32.mrb[0].mxu0
        %2664 = vmatprep.mubr.bf16.mxu0 0
        %2665 = vmatmul.mubr.bf16.gmra.mrb[0].mxu0 %v2562
        %v2666 = vpop.f32.mrb[0].mxu0
        %v2667 = vadd.f32 0.0, %v2666
        %v2668 = vpop.f32.mrb[0].mxu0
        %v2669 = vpop.f32.mrb[0].mxu0
        %v2670 = vadd.f32 0.0, %v2669
        %v2671 = vpop.f32.mrb[0].mxu0
        %2672 = vmatprep.mubr.bf16.mxu0 0
        %2673 = vmatmul.mubr.bf16.gmra.mrb[0].mxu0 %v2563
        %v2674 = vpop.f32.mrb[0].mxu0
        %v2675 = vadd.f32 0.0, %v2674
        %v2676 = vpop.f32.mrb[0].mxu0
        %v2677 = vpop.f32.mrb[0].mxu0
        %v2678 = vadd.f32 0.0, %v2677
        %v2679 = vpop.f32.mrb[0].mxu0
        %2680 = vdwg.mxu0
        %v2681 = vadd.f32 %v2399, %v2651
        %v2682 = vadd.f32 %v2400, %v2654
        %v2683 = vadd.f32 %v2401, %v2659
        %v2684 = vadd.f32 %v2402, %v2662
        %v2685 = vadd.f32 %v2403, %v2667
        %v2686 = vadd.f32 %v2404, %v2670
        %v2687 = vadd.f32 %v2405, %v2675
        %v2688 = vadd.f32 %v2406, %v2678
        %v2689 = vld [vmem:[%s2236] sm:$0xe]
        %v2690 = vld [vmem:[%s2236 + $0x8] sm:$0xe]
        %v2691 = vld [vmem:[%s2236 + $0x10] sm:$0xe]
        %v2692 = vld [vmem:[%s2236 + $0x18] sm:$0xe]
        %v2693 = vld [vmem:[%s2236 + $0x20] sm:$0xe]
        %v2694 = vld [vmem:[%s2236 + $0x28] sm:$0xe]
        %v2695 = vld [vmem:[%s2236 + $0x30] sm:$0xe]
        %v2696 = vld [vmem:[%s2236 + $0x38] sm:$0xe]
        %v2713 = vrot.slane %v2689, 5
        %v2714 = vrot.slane %v2713, 4
        %v2715 = vrot.slane %v2408, 5
        %v2716 = vsel %vm1387, %v2714, %v2715
        %v2717 = vrot.slane %v2690, 5
        %v2718 = vrot.slane %v2717, 4
        %v2719 = vrot.slane %v2410, 5
        %v2720 = vsel %vm1387, %v2718, %v2719
        %v2721 = vrot.slane %v2691, 5
        %v2722 = vrot.slane %v2721, 4
        %v2723 = vrot.slane %v2412, 5
        %v2724 = vsel %vm1387, %v2722, %v2723
        %v2725 = vrot.slane %v2692, 5
        %v2726 = vrot.slane %v2725, 4
        %v2727 = vrot.slane %v2414, 5
        %v2728 = vsel %vm1387, %v2726, %v2727
        %v2729 = vrot.slane %v2693, 5
        %v2730 = vrot.slane %v2729, 4
        %v2731 = vrot.slane %v2416, 5
        %v2732 = vsel %vm1387, %v2730, %v2731
        %v2733 = vrot.slane %v2694, 5
        %v2734 = vrot.slane %v2733, 4
        %v2735 = vrot.slane %v2418, 5
        %v2736 = vsel %vm1387, %v2734, %v2735
        %v2737 = vrot.slane %v2695, 5
        %v2738 = vrot.slane %v2737, 4
        %v2739 = vrot.slane %v2420, 5
        %v2740 = vsel %vm1387, %v2738, %v2739
        %v2741 = vrot.slane %v2696, 5
        %v2742 = vrot.slane %v2741, 4
        %v2743 = vrot.slane %v2422, 5
        %v2744 = vsel %vm1387, %v2742, %v2743
        %s2745 = scalar_lea.vmem %s4, 512
        %v2746 = vld [vmem:[%s2745] sm:$0xf]
        %v2747 = vld [vmem:[%s2745 + $0x4] sm:$0xf]
        %v2748 = vld [vmem:[%s2745 + $0x8] sm:$0xf]
        %v2749 = vld [vmem:[%s2745 + $0xc] sm:$0xf]
        %v2750 = vld [vmem:[%s2745 + $0x10] sm:$0xf]
        %v2751 = vld [vmem:[%s2745 + $0x14] sm:$0xf]
        %v2752 = vld [vmem:[%s2745 + $0x18] sm:$0xf]
        %v2753 = vld [vmem:[%s2745 + $0x1c] sm:$0xf]
        %v2754 = vld [vmem:[%s2745 + $0x20] sm:$0xf]
        %v2755 = vld [vmem:[%s2745 + $0x24] sm:$0xf]
        %v2756 = vld [vmem:[%s2745 + $0x28] sm:$0xf]
        %v2757 = vld [vmem:[%s2745 + $0x2c] sm:$0xf]
        %v2758 = vld [vmem:[%s2745 + $0x30] sm:$0xf]
        %v2759 = vld [vmem:[%s2745 + $0x34] sm:$0xf]
        %v2760 = vld [vmem:[%s2745 + $0x38] sm:$0xf]
        %v2761 = vld [vmem:[%s2745 + $0x3c] sm:$0xf]
        %v2762 = vunpack.c.l.b16 %v2716
        %v2763 = vunpack.c.l.b16 %v2720
        %v2764 = vunpack.c.l.b16 %v2724
        %v2765 = vunpack.c.l.b16 %v2728
        %v2766 = vunpack.c.l.b16 %v2732
        %v2767 = vunpack.c.l.b16 %v2736
        %v2768 = vunpack.c.l.b16 %v2740
        %v2769 = vunpack.c.l.b16 %v2744
        %v2770 = vpack.c.b16 %v2763, %v2762
        %v2771 = vpack.c.b16 %v2765, %v2764
        %v2772 = vpack.c.b16 %v2767, %v2766
        %v2773 = vpack.c.b16 %v2769, %v2768
        %v2794 = vunpack.c.l.b16 %v2746
        %v2795 = vunpack.c.l.b16 %v2747
        %v2796 = vunpack.c.l.b16 %v2748
        %v2797 = vunpack.c.l.b16 %v2749
        %v2798 = vunpack.c.l.b16 %v2750
        %v2799 = vunpack.c.l.b16 %v2751
        %v2800 = vunpack.c.l.b16 %v2752
        %v2801 = vunpack.c.l.b16 %v2753
        %v2802 = vunpack.c.l.b16 %v2754
        %v2803 = vunpack.c.l.b16 %v2755
        %v2804 = vunpack.c.l.b16 %v2756
        %v2805 = vunpack.c.l.b16 %v2757
        %v2806 = vunpack.c.l.b16 %v2758
        %v2807 = vunpack.c.l.b16 %v2759
        %v2808 = vunpack.c.l.b16 %v2760
        %v2809 = vunpack.c.l.b16 %v2761
        %v2810 = vpack.c.b16 %v2795, %v2794
        %v2811 = vpack.c.b16 %v2797, %v2796
        %v2812 = vpack.c.b16 %v2799, %v2798
        %v2813 = vpack.c.b16 %v2801, %v2800
        %v2814 = vpack.c.b16 %v2803, %v2802
        %v2815 = vpack.c.b16 %v2805, %v2804
        %v2816 = vpack.c.b16 %v2807, %v2806
        %v2817 = vpack.c.b16 %v2809, %v2808
        %2826 = vmatprep.subr.bf16.mxu0 0
        %2827 = vmatpush1.bf16.msra.mxu0 %v2810
        %2828 = vmatprep.subr.bf16.mxu0 0
        %2829 = vmatpush1.bf16.msra.mxu0 %v2811
        %2830 = vmatprep.subr.bf16.mxu0 0
        %2831 = vmatpush1.bf16.msra.mxu0 %v2812
        %2832 = vmatprep.subr.bf16.mxu0 0
        %2833 = vmatpush1.bf16.msra.mxu0 %v2813
        %2834 = vmatprep.subr.bf16.mxu0 0
        %2835 = vmatpush1.bf16.msra.mxu0 %v2814
        %2836 = vmatprep.subr.bf16.mxu0 0
        %2837 = vmatpush1.bf16.msra.mxu0 %v2815
        %2838 = vmatprep.subr.bf16.mxu0 0
        %2839 = vmatpush1.bf16.msra.mxu0 %v2816
        %2840 = vmatprep.subr.bf16.mxu0 0
        %2841 = vmatpush1.bf16.msra.mxu0 %v2817
        %2842 = vmatprep.subr.bf16.mxu0 0
        %2843 = vmatpush1.bf16.msra.mxu0 0
        %2844 = vmatprep.subr.bf16.mxu0 0
        %2845 = vmatpush1.bf16.msra.mxu0 0
        %2846 = vmatprep.subr.bf16.mxu0 0
        %2847 = vmatpush1.bf16.msra.mxu0 0
        %2848 = vmatprep.subr.bf16.mxu0 0
        %2849 = vmatpush1.bf16.msra.mxu0 0
        %2850 = vmatprep.subr.bf16.mxu0 0
        %2851 = vmatpush1.bf16.msra.mxu0 0
        %2852 = vmatprep.subr.bf16.mxu0 0
        %2853 = vmatpush1.bf16.msra.mxu0 0
        %2854 = vmatprep.subr.bf16.mxu0 0
        %2855 = vmatpush1.bf16.msra.mxu0 0
        %2856 = vmatprep.subr.bf16.mxu0 0
        %2857 = vmatpush1.bf16.msra.mxu0 0
        %2858 = vmatprep.mubr.bf16.mxu0 0
        %2859 = vmatmul.mubr.bf16.gmra.mrb[0].mxu0 %v2770
        %v2860 = vpop.f32.mrb[0].mxu0
        %v2861 = vadd.f32 0.0, %v2860
        %v2862 = vpop.f32.mrb[0].mxu0
        %v2863 = vpop.f32.mrb[0].mxu0
        %v2864 = vadd.f32 0.0, %v2863
        %v2865 = vpop.f32.mrb[0].mxu0
        %2866 = vmatprep.mubr.bf16.mxu0 0
        %2867 = vmatmul.mubr.bf16.gmra.mrb[0].mxu0 %v2771
        %v2868 = vpop.f32.mrb[0].mxu0
        %v2869 = vadd.f32 0.0, %v2868
        %v2870 = vpop.f32.mrb[0].mxu0
        %v2871 = vpop.f32.mrb[0].mxu0
        %v2872 = vadd.f32 0.0, %v2871
        %v2873 = vpop.f32.mrb[0].mxu0
        %2874 = vmatprep.mubr.bf16.mxu0 0
        %2875 = vmatmul.mubr.bf16.gmra.mrb[0].mxu0 %v2772
        %v2876 = vpop.f32.mrb[0].mxu0
        %v2877 = vadd.f32 0.0, %v2876
        %v2878 = vpop.f32.mrb[0].mxu0
        %v2879 = vpop.f32.mrb[0].mxu0
        %v2880 = vadd.f32 0.0, %v2879
        %v2881 = vpop.f32.mrb[0].mxu0
        %2882 = vmatprep.mubr.bf16.mxu0 0
        %2883 = vmatmul.mubr.bf16.gmra.mrb[0].mxu0 %v2773
        %v2884 = vpop.f32.mrb[0].mxu0
        %v2885 = vadd.f32 0.0, %v2884
        %v2886 = vpop.f32.mrb[0].mxu0
        %v2887 = vpop.f32.mrb[0].mxu0
        %v2888 = vadd.f32 0.0, %v2887
        %v2889 = vpop.f32.mrb[0].mxu0
        %2890 = vdwg.mxu0
        %v2891 = vadd.f32 %v2681, %v2861
        %v2892 = vadd.f32 %v2682, %v2864
        %v2893 = vadd.f32 %v2683, %v2869
        %v2894 = vadd.f32 %v2684, %v2872
        %v2895 = vadd.f32 %v2685, %v2877
        %v2896 = vadd.f32 %v2686, %v2880
        %v2897 = vadd.f32 %v2687, %v2885
        %v2898 = vadd.f32 %v2688, %v2888
        %2899 = vst [vmem:[%s404] sm:$0xff] %v2891
        %2900 = vst [vmem:[%s404 + $0x8] sm:$0xff] %v2892
        %2901 = vst [vmem:[%s404 + $0x10] sm:$0xff] %v2893
        %2902 = vst [vmem:[%s404 + $0x18] sm:$0xff] %v2894
        %2903 = vst [vmem:[%s404 + $0x20] sm:$0xff] %v2895
        %2904 = vst [vmem:[%s404 + $0x28] sm:$0xff] %v2896
        %2905 = vst [vmem:[%s404 + $0x30] sm:$0xff] %v2897
        %2906 = vst [vmem:[%s404 + $0x38] sm:$0xff] %v2898
        %s2907 = sand.u32 %s234, 1
        %s2908 = scalar_lea.sflag [#allocation4], %s2907
        %s2909 = sand.u32 %s234, 1
        %s2910 = smul.addr %s2909, 64
        %s2911 = scalar_lea.vmem [#allocation3], %s2910
        // Predicated region
        $region49: #{resblock_down.5} parent=47 // pred_check
          %p2912 = pneg %p244
        $region50: #{resblock_down.5} parent=47 // pred_check_branch
          %2914 = sbr.rel (%p2912) target = $region52
        $region51: #{resblock_down.5} parent=47 // pred_region
          %s2915 = smul.u32 8, %s26
          %s2917 = ssub.s32 1024, 1024
          %2918 = vsyncadd %s2908, %s2917
          %s2919 = smul.addr %s25, 8
          %s2920 = sadd.s32 %s2915, %s2919
          %s2921 = smul.addr %s2920, 128
          %s2922 = scalar_lea.hbm %s7, %s2921
          %s2923 = sshll.u32 %s2911, 4
          %s2924 = int_to_ptr.vmem [resolvable:$true] %s2923
          %2929 = dma.vmem_to_hbm [thread:$0]  %s2924, 1024, %s2922, %s2908, 128, 128, 8
        $region52: #{resblock_down.5} parent=47 // pred_fallthru
          _
      $region48: #{resblock_down.5} parent=5 // pred_fallthru
        _
      %p2930 = scmp.le.s32.totalorder 2, %s16
      // Predicated region
      $region53: #{resblock_down.5} parent=5 // pred_check
        %p2931 = pneg %p2930
      $region54: #{resblock_down.5} parent=5 // pred_check_branch
        %2933 = sbr.rel (%p2931) target = $region56
      $region55: #{resblock_down.5} parent=5 // pred_region
        %s2934 = ssub.s32 %s16, 2
        // Predicated region
        $region57: #{resblock_down.5} parent=55 // pred_check
          %p2935 = pneg %p250
        $region58: #{resblock_down.5} parent=55 // pred_check_branch
          %2937 = sbr.rel (%p2935) target = $region60
        $region59: #{resblock_down.5} parent=55 // pred_region
          %s2938 = sand.u32 %s235, 1
          %s2939 = scalar_lea.sflag [#allocation4], %s2938
          %s2940 = sand.u32 %s235, 1
          %s2941 = smul.addr %s2940, 64
          %s2942 = scalar_lea.vmem [#allocation3], %s2941
          %2943 = dma.done %s2939, 1024
        $region60: #{resblock_down.5} parent=55 // pred_fallthru
          _
      $region56: #{resblock_down.5} parent=5 // pred_fallthru
        _
    $region6: #{resblock_down.5} parent=1 // loop_footer
      %s20 = sadd.s32 1, %s16
    $region7: #{resblock_down.5} parent=1 // loop_footer_branch
      %15 = sbr.rel target = $region3
    $region8: #{resblock_down.5} parent=1 // loop_exit
      _
    %2944 = vsyncpa [#allocation4], 1
    %s2945 = scalar_lea.sflag [#allocation4], 1
    %2946 = vsyncpa %s2945, 1

</llo_original>
